<compile_context>
chip_gen: v7x
topology: tpu7x:2x2x1
jax: 0.10.0
libtpu: 0.0.40
codegen_flags: <defaults>
</compile_context>

<pallas_src>
import functools

import jax
import jax.numpy as jnp
from jax import lax
from jax.experimental import pallas as pl
from jax.experimental.pallas import tpu as pltpu

NEG_SLOPE = 0.01          # nn.LeakyReLU default
BN_EPS = 1e-5
VMEM_LIMIT = 48 * 1024 * 1024   # explicit scoped-VMEM budget; leaves headroom on v7x (64 MiB)


def _leaky(y):
    return jnp.where(y > 0, y, NEG_SLOPE * y)


# ======================================================================================
# Kernel A: conv1 + BN1 + LeakyReLU  ->  3x3 conv (single large-K matmul via in-VMEM
# im2col) + BN0 + ReLU  ->  fused GAP + split-attention MLP (sigmoid gate, radix=1).
# One batch image per grid step.  Outputs: out2 (bf16) and the per-batch channel gate.
# ======================================================================================
def _splat_stage_kernel(x_ref, w1_ref, s1_ref, b1_ref, w2_ref, s0_ref, b0_ref,
                        fc1_ref, sfc_ref, bfc_ref, fc2_ref, fc2b_ref,
                        o_ref, att_ref, pad_sc, col_sc, *, H, W):
    cin = x_ref.shape[-1]
    gw = w1_ref.shape[1]
    hw = H * W

    # ---- conv1 (1x1) + BN1 + LeakyReLU (bf16 MXU operands, f32 epilogue) ------------
    xi = x_ref[0].reshape(hw, cin)                                    # bf16 (hw, cin)
    y1 = jnp.dot(xi, w1_ref[...], preferred_element_type=jnp.float32)
    y1 = _leaky(y1 * s1_ref[...] + b1_ref[...]).astype(jnp.bfloat16)

    # ---- 1-pixel halo-padded slab built directly in VMEM (no jnp.pad HBM pass) ------
    pad_sc[...] = jnp.zeros_like(pad_sc)          # re-zero each step (megacore-safe)
    pad_sc[1:H + 1, 1:W + 1, :] = y1.reshape(H, W, gw)

    # ---- in-VMEM im2col -> ONE large-K (K = 9*gw) MXU pass for the 3x3 conv ---------
    for dy in range(3):
        for dx in range(3):
            t = dy * 3 + dx
            col_sc[:, t * gw:(t + 1) * gw] = (
                pad_sc[dy:dy + H, dx:dx + W, :].reshape(hw, gw))
    y2 = jnp.dot(col_sc[...], w2_ref[...], preferred_element_type=jnp.float32)
    y2 = jnp.maximum(y2 * s0_ref[...] + b0_ref[...], 0.0)            # BN0 + ReLU (f32)
    o_ref[0] = y2.astype(o_ref.dtype)

    # ---- fused global-average-pool + attention MLP (fc1->BN->ReLU->fc2->sigmoid) ----
    gap = jnp.sum(y2, axis=0, keepdims=True) * (1.0 / hw)            # (1, gw) f32
    h = jnp.dot(gap, fc1_ref[...], preferred_element_type=jnp.float32)
    h = jnp.maximum(h * sfc_ref[...] + bfc_ref[...], 0.0)
    att = jax.nn.sigmoid(
        jnp.dot(h, fc2_ref[...], preferred_element_type=jnp.float32) + fc2b_ref[...])
    att_ref[0] = att


def splat_stage(x, w1, s1, b1, w2, s0, b0, fc1_w, sfc, bfc, fc2_w, fc2_b):
    N, H, W, cin = x.shape
    gw = w1.shape[1]
    inter = fc1_w.shape[1]
    hw = H * W
    # TODO(synk): at large feature maps add an H-row tile axis (halo'd index_map, GAP
    # accumulated in scratch with pl.when init/finalize) so the per-image slab + im2col
    # scratch also fit v5e (16 MiB scoped default) / v7x (64 MiB physical) VMEM.
    return pl.pallas_call(
        functools.partial(_splat_stage_kernel, H=H, W=W),
        out_shape=(jax.ShapeDtypeStruct((N, hw, gw), jnp.bfloat16),
                   jax.ShapeDtypeStruct((N, 1, gw), jnp.float32)),
        grid=(N,),
        in_specs=[
            pl.BlockSpec((1, H, W, cin), lambda n: (n, 0, 0, 0)),
            pl.BlockSpec((cin, gw), lambda n: (0, 0)),
            pl.BlockSpec((1, gw), lambda n: (0, 0)),
            pl.BlockSpec((1, gw), lambda n: (0, 0)),
            pl.BlockSpec((9 * gw, gw), lambda n: (0, 0)),
            pl.BlockSpec((1, gw), lambda n: (0, 0)),
            pl.BlockSpec((1, gw), lambda n: (0, 0)),
            pl.BlockSpec((gw, inter), lambda n: (0, 0)),
            pl.BlockSpec((1, inter), lambda n: (0, 0)),
            pl.BlockSpec((1, inter), lambda n: (0, 0)),
            pl.BlockSpec((inter, gw), lambda n: (0, 0)),
            pl.BlockSpec((1, gw), lambda n: (0, 0)),
        ],
        out_specs=(
            pl.BlockSpec((1, hw, gw), lambda n: (n, 0, 0)),
            pl.BlockSpec((1, 1, gw), lambda n: (n, 0, 0)),
        ),
        scratch_shapes=[
            pltpu.VMEM((H + 2, W + 2, gw), jnp.bfloat16),    # halo-padded conv1 output
            pltpu.VMEM((hw, 9 * gw), jnp.bfloat16),          # im2col (single big-K dot)
        ],
        compiler_params=pltpu.CompilerParams(
            dimension_semantics=("parallel",),
            vmem_limit_bytes=VMEM_LIMIT),
    )(x, w1, s1, b1, w2, s0, b0, fc1_w, sfc, bfc, fc2_w, fc2_b)


# ======================================================================================
# Kernel B: fused  (out2 * att) @ conv3_w * scale + bias + residual -> LeakyReLU.
# Channel gate applied in bf16; residual streamed in bf16, added in f32.
# ======================================================================================
def _gated_conv3_kernel(x_ref, a_ref, w_ref, s_ref, b_ref, r_ref, o_ref):
    xg = x_ref[0] * a_ref[0].astype(x_ref.dtype)          # bf16 per-(batch,chan) gate
    y = jnp.dot(xg, w_ref[...], preferred_element_type=jnp.float32)
    y = y * s_ref[...] + b_ref[...] + r_ref[0].astype(jnp.float32)
    o_ref[0] = _leaky(y).astype(o_ref.dtype)


def gated_conv3_bn_add_act(x3d, att, w, scale, bias, res3d, t_hw=512):
    N, HW, K = x3d.shape
    cout = w.shape[1]
    t_hw = min(t_hw, HW)
    return pl.pallas_call(
        _gated_conv3_kernel,
        out_shape=jax.ShapeDtypeStruct((N, HW, cout), jnp.float32),
        grid=(N, pl.cdiv(HW, t_hw)),
        in_specs=[
            pl.BlockSpec((1, t_hw, K), lambda n, i: (n, i, 0)),
            pl.BlockSpec((1, 1, K), lambda n, i: (n, 0, 0)),
            pl.BlockSpec((K, cout), lambda n, i: (0, 0)),
            pl.BlockSpec((1, cout), lambda n, i: (0, 0)),
            pl.BlockSpec((1, cout), lambda n, i: (0, 0)),
            pl.BlockSpec((1, t_hw, cout), lambda n, i: (n, i, 0)),
        ],
        out_specs=pl.BlockSpec((1, t_hw, cout), lambda n, i: (n, i, 0)),
        compiler_params=pltpu.CompilerParams(
            dimension_semantics=("parallel", "parallel"),
            vmem_limit_bytes=VMEM_LIMIT),
    )(x3d, att, w, scale, bias, res3d)


# ======================================================================================
# Parameter setup + forward glue
# ======================================================================================
def fold_bn(gamma, beta, mean, var, extra_bias=None):
    scale = gamma / jnp.sqrt(var + BN_EPS)
    b = beta - mean * scale
    if extra_bias is not None:            # absorb a conv bias that precedes the BN
        b = b + extra_bias * scale
    return scale.reshape(1, -1), b.reshape(1, -1)


def init_params(key, inplanes, planes, cardinality=1, bottleneck_width=64, radix=1):
    group_width = int(planes * (bottleneck_width / 64.0)) * cardinality     # 4
    out_ch = planes * 4                                                     # expansion = 4
    inter = max(group_width * radix // 4, 32)                               # SplAt inter_channels

    ks = jax.random.split(key, 16)
    nrm = lambda k, shp: 0.1 * jax.random.normal(k, shp, jnp.float32)
    bn = lambda k, c: (
        1.0 + 0.1 * jax.random.normal(jax.random.fold_in(k, 0), (c,), jnp.float32),  # gamma
        0.1 * jax.random.normal(jax.random.fold_in(k, 1), (c,), jnp.float32),        # beta
        0.1 * jax.random.normal(jax.random.fold_in(k, 2), (c,), jnp.float32),        # mean
        0.5 + jnp.abs(jax.random.normal(jax.random.fold_in(k, 3), (c,), jnp.float32)),  # var
    )

    p = {}
    # conv1: 1x1 inplanes -> group_width  (PyTorch (Cout,Cin,1,1) -> (Cin,Cout)), bf16 for MXU
    p["conv1_w"] = nrm(ks[0], (group_width, inplanes, 1, 1))[:, :, 0, 0].T.astype(jnp.bfloat16)
    p["bn1_s"], p["bn1_b"] = fold_bn(*bn(ks[1], group_width))

    # SplAtConv2d.conv: 3x3 group_width -> group_width*radix (radix=1, groups=1)
    w2 = nrm(ks[2], (group_width, group_width, 3, 3))                       # (Cout,Cin,kh,kw)
    p["conv2_w"] = (jnp.transpose(w2, (2, 3, 1, 0))                         # (kh,kw,Cin,Cout)
                    .reshape(9 * group_width, group_width).astype(jnp.bfloat16))
    p["bn0_s"], p["bn0_b"] = fold_bn(*bn(ks[3], group_width))

    # SplAtConv2d.fc1 / fc2 (1x1 convs with bias) + its BN — tiny MLP, kept f32
    p["fc1_w"] = nrm(ks[4], (inter, group_width, 1, 1))[:, :, 0, 0].T
    fc1_bias = nrm(ks[5], (inter,))
    p["bnfc_s"], p["bnfc_b"] = fold_bn(*bn(ks[6], inter), extra_bias=fc1_bias)
    p["fc2_w"] = nrm(ks[7], (group_width, inter, 1, 1))[:, :, 0, 0].T
    p["fc2_b"] = nrm(ks[8], (group_width,)).reshape(1, -1)

    # conv3: 1x1 group_width -> planes*4
    p["conv3_w"] = nrm(ks[9], (out_ch, group_width, 1, 1))[:, :, 0, 0].T.astype(jnp.bfloat16)
    p["bn3_s"], p["bn3_b"] = fold_bn(*bn(ks[10], out_ch))
    return p, group_width, out_ch


def bottleneck_forward(x_nhwc, params):
    # TODO(synk): dropblock / avd / downsample / stride>1 branches are disabled by the default
    # config (dropblock_prob=0.0, avd=False, downsample=None, stride=1) and are not implemented.
    N, H, W, cin = x_nhwc.shape
    out_ch = params["conv3_w"].shape[1]
    assert cin == out_ch, "identity residual requires inplanes == planes * expansion"

    x_bf16 = x_nhwc.astype(jnp.bfloat16)     # single boundary cast: halves both big HBM reads

    out2, att = splat_stage(
        x_bf16,
        params["conv1_w"], params["bn1_s"], params["bn1_b"],
        params["conv2_w"], params["bn0_s"], params["bn0_b"],
        params["fc1_w"], params["bnfc_s"], params["bnfc_b"],
        params["fc2_w"], params["fc2_b"])

    out3 = gated_conv3_bn_add_act(
        out2, att, params["conv3_w"], params["bn3_s"], params["bn3_b"],
        x_bf16.reshape(N, H * W, cin))
    return out3.reshape(N, H, W, out_ch)


# Plain-JAX f32 reference (same folded-BN parameterization) for a loose tolerance check.
def reference_forward(x, params):
    f32 = lambda a: a.astype(jnp.float32)
    N, H, W, cin = x.shape
    gw = params["conv1_w"].shape[1]
    out_ch = params["conv3_w"].shape[1]

    out1 = x.reshape(-1, cin) @ f32(params["conv1_w"]) * params["bn1_s"] + params["bn1_b"]
    out1 = _leaky(out1).reshape(N, H, W, gw)

    w2 = f32(params["conv2_w"]).reshape(3, 3, gw, gw)                  # HWIO
    y2 = lax.conv_general_dilated(out1, w2, (1, 1), ((1, 1), (1, 1)),
                                  dimension_numbers=("NHWC", "HWIO", "NHWC"))
    y2 = jnp.maximum(y2 * params["bn0_s"] + params["bn0_b"], 0.0)

    gap = y2.mean(axis=(1, 2))                                          # (N, gw)
    h = jnp.maximum(gap @ params["fc1_w"] * params["bnfc_s"] + params["bnfc_b"], 0.0)
    att = jax.nn.sigmoid(h @ params["fc2_w"] + params["fc2_b"])         # (N, gw)

    y3 = (y2 * att[:, None, None, :]).reshape(-1, gw) @ f32(params["conv3_w"])
    y3 = y3 * params["bn3_s"] + params["bn3_b"]
    return _leaky(y3.reshape(N, H, W, out_ch) + x)


if __name__ == "__main__":
    # Residual add (downsample=None) requires inplanes == planes * expansion.
    # NOTE: demo channels (4 / 16) are lane-sparse; realistic ResNeSt widths (>=128) make
    # every output lane-dense — tune tiles only at those shapes.
    N, H, W = 2, 16, 16
    planes = 4
    inplanes = planes * 4  # 16

    key = jax.random.PRNGKey(0)
    kx, kp = jax.random.split(key)
    x_nhwc = jax.random.normal(kx, (N, H, W, inplanes), jnp.float32)   # NCHW equiv: (2,16,16,16)

    params, group_width, out_ch = init_params(kp, inplanes, planes)

    fwd = jax.jit(bottleneck_forward)
    out = jax.block_until_ready(fwd(x_nhwc, params))
    assert out.shape == (N, H, W, out_ch) and out.dtype == jnp.float32

    ref = reference_forward(x_nhwc, params)
    max_err = float(jnp.max(jnp.abs(out - ref)))
    assert jnp.allclose(out, ref, rtol=1e-1, atol=1e-1), f"max abs err {max_err}"
    print("KERNEL_OK")
</pallas_src>

<mosaic_0001>
module attributes {stable_mosaic.version = 11 : i64} {
  func.func @_splat_stage_kernel(%arg0: i32, %arg1: memref<1x16x16x16xbf16, #tpu.memory_space<vmem>>, %arg2: memref<16x4xbf16, #tpu.memory_space<vmem>>, %arg3: memref<1x4xf32, #tpu.memory_space<vmem>>, %arg4: memref<1x4xf32, #tpu.memory_space<vmem>>, %arg5: memref<36x4xbf16, #tpu.memory_space<vmem>>, %arg6: memref<1x4xf32, #tpu.memory_space<vmem>>, %arg7: memref<1x4xf32, #tpu.memory_space<vmem>>, %arg8: memref<4x32xf32, #tpu.memory_space<vmem>>, %arg9: memref<1x32xf32, #tpu.memory_space<vmem>>, %arg10: memref<1x32xf32, #tpu.memory_space<vmem>>, %arg11: memref<32x4xf32, #tpu.memory_space<vmem>>, %arg12: memref<1x4xf32, #tpu.memory_space<vmem>>, %arg13: memref<1x256x4xbf16, #tpu.memory_space<vmem>>, %arg14: memref<1x1x4xf32, #tpu.memory_space<vmem>>, %arg15: memref<18x18x4xbf16, #tpu.memory_space<vmem>>, %arg16: memref<256x36xbf16, #tpu.memory_space<vmem>>) attributes {dimension_semantics = [#tpu.dimension_semantics<parallel>], iteration_bounds = array<i64: 2>, scalar_prefetch = 0 : i64, scratch_operands = 2 : i64, tpu.core_type = #tpu.core_type<tc>, window_params = [{transform_indices = @transform_0, window_bounds = array<i64: 1, 16, 16, 16>}, {pipeline_mode = #tpu.pipeline_mode<synchronous>, transform_indices = @transform_1, window_bounds = array<i64: 16, 4>}, {pipeline_mode = #tpu.pipeline_mode<synchronous>, transform_indices = @transform_2, window_bounds = array<i64: 1, 4>}, {pipeline_mode = #tpu.pipeline_mode<synchronous>, transform_indices = @transform_3, window_bounds = array<i64: 1, 4>}, {pipeline_mode = #tpu.pipeline_mode<synchronous>, transform_indices = @transform_4, window_bounds = array<i64: 36, 4>}, {pipeline_mode = #tpu.pipeline_mode<synchronous>, transform_indices = @transform_5, window_bounds = array<i64: 1, 4>}, {pipeline_mode = #tpu.pipeline_mode<synchronous>, transform_indices = @transform_6, window_bounds = array<i64: 1, 4>}, {pipeline_mode = #tpu.pipeline_mode<synchronous>, transform_indices = @transform_7, window_bounds = array<i64: 4, 32>}, {pipeline_mode = #tpu.pipeline_mode<synchronous>, transform_indices = @transform_8, window_bounds = array<i64: 1, 32>}, {pipeline_mode = #tpu.pipeline_mode<synchronous>, transform_indices = @transform_9, window_bounds = array<i64: 1, 32>}, {pipeline_mode = #tpu.pipeline_mode<synchronous>, transform_indices = @transform_10, window_bounds = array<i64: 32, 4>}, {pipeline_mode = #tpu.pipeline_mode<synchronous>, transform_indices = @transform_11, window_bounds = array<i64: 1, 4>}, {transform_indices = @transform_12, window_bounds = array<i64: 1, 256, 4>}, {transform_indices = @transform_13, window_bounds = array<i64: 1, 1, 4>}]} {
    %c0 = arith.constant 0 : index
    %c0_0 = arith.constant 0 : index
    %c0_1 = arith.constant 0 : index
    %c0_2 = arith.constant 0 : index
    %0 = vector.load %arg1[%c0, %c0_0, %c0_1, %c0_2] : memref<1x16x16x16xbf16, #tpu.memory_space<vmem>>, vector<1x16x16x16xbf16>
    %1 = vector.shape_cast %0 : vector<1x16x16x16xbf16> to vector<16x16x16xbf16>
    %2 = vector.shape_cast %1 : vector<16x16x16xbf16> to vector<256x16xbf16>
    %c0_3 = arith.constant 0 : index
    %c0_4 = arith.constant 0 : index
    %3 = vector.load %arg2[%c0_3, %c0_4] : memref<16x4xbf16, #tpu.memory_space<vmem>>, vector<16x4xbf16>
    %cst = arith.constant dense<0.000000e+00> : vector<256x4xf32>
    %4 = tpu.matmul %2, %3, %cst {dimension_numbers = #tpu.dot_dimension_numbers<[1], [0], [0], [1], [0, 0, 1, 1], [], []>} : vector<256x16xbf16>, vector<16x4xbf16>, vector<256x4xf32> -> vector<256x4xf32>
    %c0_5 = arith.constant 0 : index
    %c0_6 = arith.constant 0 : index
    %5 = vector.load %arg3[%c0_5, %c0_6] : memref<1x4xf32, #tpu.memory_space<vmem>>, vector<1x4xf32>
    %6 = vector.broadcast %5 : vector<1x4xf32> to vector<256x4xf32>
    %7 = arith.mulf %4, %6 : vector<256x4xf32>
    %c0_7 = arith.constant 0 : index
    %c0_8 = arith.constant 0 : index
    %8 = vector.load %arg4[%c0_7, %c0_8] : memref<1x4xf32, #tpu.memory_space<vmem>>, vector<1x4xf32>
    %9 = vector.broadcast %8 : vector<1x4xf32> to vector<256x4xf32>
    %10 = arith.addf %7, %9 : vector<256x4xf32>
    %cst_9 = arith.constant 0.000000e+00 : f32
    %11 = vector.broadcast %cst_9 : f32 to vector<256x4xf32>
    %12 = arith.cmpf ogt, %10, %11 : vector<256x4xf32>
    %cst_10 = arith.constant 0.00999999977 : f32
    %13 = vector.broadcast %cst_10 : f32 to vector<256x4xf32>
    %14 = arith.mulf %13, %10 : vector<256x4xf32>
    %15 = arith.select %12, %10, %14 : vector<256x4xi1>, vector<256x4xf32>
    %16 = arith.truncf %15 : vector<256x4xf32> to vector<256x4xbf16>
    %cst_11 = arith.constant 0.000000e+00 : bf16
    %17 = vector.broadcast %cst_11 : bf16 to vector<18x18x4xbf16>
    %c0_12 = arith.constant 0 : index
    %c0_13 = arith.constant 0 : index
    %c0_14 = arith.constant 0 : index
    %18 = vector.load %arg15[%c0_12, %c0_13, %c0_14] : memref<18x18x4xbf16, #tpu.memory_space<vmem>>, vector<18x18x4xbf16>
    tpu.vector_store %arg15[%c0_12, %c0_13, %c0_14], %17 {strides = array<i32>} : memref<18x18x4xbf16, #tpu.memory_space<vmem>>, vector<18x18x4xbf16>,
    %19 = vector.shape_cast %16 : vector<256x4xbf16> to vector<16x16x4xbf16>
    %c1 = arith.constant 1 : index
    %c1_15 = arith.constant 1 : index
    %c0_16 = arith.constant 0 : index
    %20 = vector.load %arg15[%c1, %c1_15, %c0_16] : memref<18x18x4xbf16, #tpu.memory_space<vmem>>, vector<16x16x4xbf16>
    tpu.vector_store %arg15[%c1, %c1_15, %c0_16], %19 {strides = array<i32>} : memref<18x18x4xbf16, #tpu.memory_space<vmem>>, vector<16x16x4xbf16>,
    %c0_17 = arith.constant 0 : index
    %c0_18 = arith.constant 0 : index
    %c0_19 = arith.constant 0 : index
    %21 = vector.load %arg15[%c0_17, %c0_18, %c0_19] : memref<18x18x4xbf16, #tpu.memory_space<vmem>>, vector<16x16x4xbf16>
    %22 = vector.shape_cast %21 : vector<16x16x4xbf16> to vector<256x4xbf16>
    %c0_20 = arith.constant 0 : index
    %c0_21 = arith.constant 0 : index
    %23 = vector.load %arg16[%c0_20, %c0_21] : memref<256x36xbf16, #tpu.memory_space<vmem>>, vector<256x4xbf16>
    tpu.vector_store %arg16[%c0_20, %c0_21], %22 {strides = array<i32>} : memref<256x36xbf16, #tpu.memory_space<vmem>>, vector<256x4xbf16>,
    %c0_22 = arith.constant 0 : index
    %c1_23 = arith.constant 1 : index
    %c0_24 = arith.constant 0 : index
    %24 = vector.load %arg15[%c0_22, %c1_23, %c0_24] : memref<18x18x4xbf16, #tpu.memory_space<vmem>>, vector<16x16x4xbf16>
    %25 = vector.shape_cast %24 : vector<16x16x4xbf16> to vector<256x4xbf16>
    %c0_25 = arith.constant 0 : index
    %c4 = arith.constant 4 : index
    %26 = vector.load %arg16[%c0_25, %c4] : memref<256x36xbf16, #tpu.memory_space<vmem>>, vector<256x4xbf16>
    tpu.vector_store %arg16[%c0_25, %c4], %25 {strides = array<i32>} : memref<256x36xbf16, #tpu.memory_space<vmem>>, vector<256x4xbf16>,
    %c0_26 = arith.constant 0 : index
    %c2 = arith.constant 2 : index
    %c0_27 = arith.constant 0 : index
    %27 = vector.load %arg15[%c0_26, %c2, %c0_27] : memref<18x18x4xbf16, #tpu.memory_space<vmem>>, vector<16x16x4xbf16>
    %28 = vector.shape_cast %27 : vector<16x16x4xbf16> to vector<256x4xbf16>
    %c0_28 = arith.constant 0 : index
    %c8 = arith.constant 8 : index
    %29 = vector.load %arg16[%c0_28, %c8] : memref<256x36xbf16, #tpu.memory_space<vmem>>, vector<256x4xbf16>
    tpu.vector_store %arg16[%c0_28, %c8], %28 {strides = array<i32>} : memref<256x36xbf16, #tpu.memory_space<vmem>>, vector<256x4xbf16>,
    %c1_29 = arith.constant 1 : index
    %c0_30 = arith.constant 0 : index
    %c0_31 = arith.constant 0 : index
    %30 = vector.load %arg15[%c1_29, %c0_30, %c0_31] : memref<18x18x4xbf16, #tpu.memory_space<vmem>>, vector<16x16x4xbf16>
    %31 = vector.shape_cast %30 : vector<16x16x4xbf16> to vector<256x4xbf16>
    %c0_32 = arith.constant 0 : index
    %c12 = arith.constant 12 : index
    %32 = vector.load %arg16[%c0_32, %c12] : memref<256x36xbf16, #tpu.memory_space<vmem>>, vector<256x4xbf16>
    tpu.vector_store %arg16[%c0_32, %c12], %31 {strides = array<i32>} : memref<256x36xbf16, #tpu.memory_space<vmem>>, vector<256x4xbf16>,
    %c1_33 = arith.constant 1 : index
    %c1_34 = arith.constant 1 : index
    %c0_35 = arith.constant 0 : index
    %33 = vector.load %arg15[%c1_33, %c1_34, %c0_35] : memref<18x18x4xbf16, #tpu.memory_space<vmem>>, vector<16x16x4xbf16>
    %34 = vector.shape_cast %33 : vector<16x16x4xbf16> to vector<256x4xbf16>
    %c0_36 = arith.constant 0 : index
    %c16 = arith.constant 16 : index
    %35 = vector.load %arg16[%c0_36, %c16] : memref<256x36xbf16, #tpu.memory_space<vmem>>, vector<256x4xbf16>
    tpu.vector_store %arg16[%c0_36, %c16], %34 {strides = array<i32>} : memref<256x36xbf16, #tpu.memory_space<vmem>>, vector<256x4xbf16>,
    %c1_37 = arith.constant 1 : index
    %c2_38 = arith.constant 2 : index
    %c0_39 = arith.constant 0 : index
    %36 = vector.load %arg15[%c1_37, %c2_38, %c0_39] : memref<18x18x4xbf16, #tpu.memory_space<vmem>>, vector<16x16x4xbf16>
    %37 = vector.shape_cast %36 : vector<16x16x4xbf16> to vector<256x4xbf16>
    %c0_40 = arith.constant 0 : index
    %c20 = arith.constant 20 : index
    %38 = vector.load %arg16[%c0_40, %c20] : memref<256x36xbf16, #tpu.memory_space<vmem>>, vector<256x4xbf16>
    tpu.vector_store %arg16[%c0_40, %c20], %37 {strides = array<i32>} : memref<256x36xbf16, #tpu.memory_space<vmem>>, vector<256x4xbf16>,
    %c2_41 = arith.constant 2 : index
    %c0_42 = arith.constant 0 : index
    %c0_43 = arith.constant 0 : index
    %39 = vector.load %arg15[%c2_41, %c0_42, %c0_43] : memref<18x18x4xbf16, #tpu.memory_space<vmem>>, vector<16x16x4xbf16>
    %40 = vector.shape_cast %39 : vector<16x16x4xbf16> to vector<256x4xbf16>
    %c0_44 = arith.constant 0 : index
    %c24 = arith.constant 24 : index
    %41 = vector.load %arg16[%c0_44, %c24] : memref<256x36xbf16, #tpu.memory_space<vmem>>, vector<256x4xbf16>
    tpu.vector_store %arg16[%c0_44, %c24], %40 {strides = array<i32>} : memref<256x36xbf16, #tpu.memory_space<vmem>>, vector<256x4xbf16>,
    %c2_45 = arith.constant 2 : index
    %c1_46 = arith.constant 1 : index
    %c0_47 = arith.constant 0 : index
    %42 = vector.load %arg15[%c2_45, %c1_46, %c0_47] : memref<18x18x4xbf16, #tpu.memory_space<vmem>>, vector<16x16x4xbf16>
    %43 = vector.shape_cast %42 : vector<16x16x4xbf16> to vector<256x4xbf16>
    %c0_48 = arith.constant 0 : index
    %c28 = arith.constant 28 : index
    %44 = vector.load %arg16[%c0_48, %c28] : memref<256x36xbf16, #tpu.memory_space<vmem>>, vector<256x4xbf16>
    tpu.vector_store %arg16[%c0_48, %c28], %43 {strides = array<i32>} : memref<256x36xbf16, #tpu.memory_space<vmem>>, vector<256x4xbf16>,
    %c2_49 = arith.constant 2 : index
    %c2_50 = arith.constant 2 : index
    %c0_51 = arith.constant 0 : index
    %45 = vector.load %arg15[%c2_49, %c2_50, %c0_51] : memref<18x18x4xbf16, #tpu.memory_space<vmem>>, vector<16x16x4xbf16>
    %46 = vector.shape_cast %45 : vector<16x16x4xbf16> to vector<256x4xbf16>
    %c0_52 = arith.constant 0 : index
    %c32 = arith.constant 32 : index
    %47 = vector.load %arg16[%c0_52, %c32] : memref<256x36xbf16, #tpu.memory_space<vmem>>, vector<256x4xbf16>
    tpu.vector_store %arg16[%c0_52, %c32], %46 {strides = array<i32>} : memref<256x36xbf16, #tpu.memory_space<vmem>>, vector<256x4xbf16>,
    %c0_53 = arith.constant 0 : index
    %c0_54 = arith.constant 0 : index
    %48 = vector.load %arg16[%c0_53, %c0_54] : memref<256x36xbf16, #tpu.memory_space<vmem>>, vector<256x36xbf16>
    %c0_55 = arith.constant 0 : index
    %c0_56 = arith.constant 0 : index
    %49 = vector.load %arg5[%c0_55, %c0_56] : memref<36x4xbf16, #tpu.memory_space<vmem>>, vector<36x4xbf16>
    %cst_57 = arith.constant dense<0.000000e+00> : vector<256x4xf32>
    %50 = tpu.matmul %48, %49, %cst_57 {dimension_numbers = #tpu.dot_dimension_numbers<[1], [0], [0], [1], [0, 0, 1, 1], [], []>} : vector<256x36xbf16>, vector<36x4xbf16>, vector<256x4xf32> -> vector<256x4xf32>
    %c0_58 = arith.constant 0 : index
    %c0_59 = arith.constant 0 : index
    %51 = vector.load %arg6[%c0_58, %c0_59] : memref<1x4xf32, #tpu.memory_space<vmem>>, vector<1x4xf32>
    %52 = vector.broadcast %51 : vector<1x4xf32> to vector<256x4xf32>
    %53 = arith.mulf %50, %52 : vector<256x4xf32>
    %c0_60 = arith.constant 0 : index
    %c0_61 = arith.constant 0 : index
    %54 = vector.load %arg7[%c0_60, %c0_61] : memref<1x4xf32, #tpu.memory_space<vmem>>, vector<1x4xf32>
    %55 = vector.broadcast %54 : vector<1x4xf32> to vector<256x4xf32>
    %56 = arith.addf %53, %55 : vector<256x4xf32>
    %cst_62 = arith.constant 0.000000e+00 : f32
    %57 = vector.broadcast %cst_62 : f32 to vector<256x4xf32>
    %58 = arith.maximumf %56, %57 : vector<256x4xf32>
    %59 = arith.truncf %58 : vector<256x4xf32> to vector<256x4xbf16>
    %c0_63 = arith.constant 0 : index
    %c0_64 = arith.constant 0 : index
    %c0_65 = arith.constant 0 : index
    %60 = vector.load %arg13[%c0_63, %c0_64, %c0_65] : memref<1x256x4xbf16, #tpu.memory_space<vmem>>, vector<1x256x4xbf16>
    %61 = vector.shape_cast %60 : vector<1x256x4xbf16> to vector<256x4xbf16>
    %62 = vector.shape_cast %59 : vector<256x4xbf16> to vector<1x256x4xbf16>
    tpu.vector_store %arg13[%c0_63, %c0_64, %c0_65], %62 {strides = array<i32>} : memref<1x256x4xbf16, #tpu.memory_space<vmem>>, vector<1x256x4xbf16>,
    %cst_66 = arith.constant dense<0.000000e+00> : vector<4xf32>
    %63 = vector.multi_reduction <add>, %58, %cst_66 [0] : vector<256x4xf32> to vector<4xf32>
    %64 = vector.shape_cast %63 : vector<4xf32> to vector<1x4xf32>
    %cst_67 = arith.constant 3.906250e-03 : f32
    %65 = vector.broadcast %cst_67 : f32 to vector<1x4xf32>
    %66 = arith.mulf %64, %65 : vector<1x4xf32>
    %c0_68 = arith.constant 0 : index
    %c0_69 = arith.constant 0 : index
    %67 = vector.load %arg8[%c0_68, %c0_69] : memref<4x32xf32, #tpu.memory_space<vmem>>, vector<4x32xf32>
    %cst_70 = arith.constant dense<0.000000e+00> : vector<1x32xf32>
    %68 = tpu.matmul %66, %67, %cst_70 {dimension_numbers = #tpu.dot_dimension_numbers<[1], [0], [0], [1], [0, 0, 1, 1], [], []>} : vector<1x4xf32>, vector<4x32xf32>, vector<1x32xf32> -> vector<1x32xf32>
    %c0_71 = arith.constant 0 : index
    %c0_72 = arith.constant 0 : index
    %69 = vector.load %arg9[%c0_71, %c0_72] : memref<1x32xf32, #tpu.memory_space<vmem>>, vector<1x32xf32>
    %70 = arith.mulf %68, %69 : vector<1x32xf32>
    %c0_73 = arith.constant 0 : index
    %c0_74 = arith.constant 0 : index
    %71 = vector.load %arg10[%c0_73, %c0_74] : memref<1x32xf32, #tpu.memory_space<vmem>>, vector<1x32xf32>
    %72 = arith.addf %70, %71 : vector<1x32xf32>
    %cst_75 = arith.constant 0.000000e+00 : f32
    %73 = vector.broadcast %cst_75 : f32 to vector<1x32xf32>
    %74 = arith.maximumf %72, %73 : vector<1x32xf32>
    %c0_76 = arith.constant 0 : index
    %c0_77 = arith.constant 0 : index
    %75 = vector.load %arg11[%c0_76, %c0_77] : memref<32x4xf32, #tpu.memory_space<vmem>>, vector<32x4xf32>
    %cst_78 = arith.constant dense<0.000000e+00> : vector<1x4xf32>
    %76 = tpu.matmul %74, %75, %cst_78 {dimension_numbers = #tpu.dot_dimension_numbers<[1], [0], [0], [1], [0, 0, 1, 1], [], []>} : vector<1x32xf32>, vector<32x4xf32>, vector<1x4xf32> -> vector<1x4xf32>
    %c0_79 = arith.constant 0 : index
    %c0_80 = arith.constant 0 : index
    %77 = vector.load %arg12[%c0_79, %c0_80] : memref<1x4xf32, #tpu.memory_space<vmem>>, vector<1x4xf32>
    %78 = arith.addf %76, %77 : vector<1x4xf32>
    %79 = arith.negf %78 : vector<1x4xf32>
    %80 = math.exp %79 : vector<1x4xf32>
    %cst_81 = arith.constant 1.000000e+00 : f32
    %81 = vector.broadcast %cst_81 : f32 to vector<1x4xf32>
    %82 = arith.addf %81, %80 : vector<1x4xf32>
    %83 = arith.divf %81, %82 : vector<1x4xf32>
    %c0_82 = arith.constant 0 : index
    %c0_83 = arith.constant 0 : index
    %c0_84 = arith.constant 0 : index
    %84 = vector.load %arg14[%c0_82, %c0_83, %c0_84] : memref<1x1x4xf32, #tpu.memory_space<vmem>>, vector<1x1x4xf32>
    %85 = vector.shape_cast %84 : vector<1x1x4xf32> to vector<1x4xf32>
    %86 = vector.shape_cast %83 : vector<1x4xf32> to vector<1x1x4xf32>
    tpu.vector_store %arg14[%c0_82, %c0_83, %c0_84], %86 {strides = array<i32>} : memref<1x1x4xf32, #tpu.memory_space<vmem>>, vector<1x1x4xf32>,
    return
  }
  func.func @transform_0(%arg0: i32) -> (i32, i32, i32, i32) {
    %c0_i32 = arith.constant 0 : i32
    %c0_i32_0 = arith.constant 0 : i32
    %c0_i32_1 = arith.constant 0 : i32
    %c0_i32_2 = arith.constant 0 : i32
    return %arg0, %c0_i32, %c0_i32_0, %c0_i32_1 : i32, i32, i32, i32
  }
  func.func @transform_1(%arg0: i32) -> (i32, i32) {
    %c0_i32 = arith.constant 0 : i32
    %c0_i32_0 = arith.constant 0 : i32
    %c0_i32_1 = arith.constant 0 : i32
    return %c0_i32, %c0_i32_0 : i32, i32
  }
  func.func @transform_2(%arg0: i32) -> (i32, i32) {
    %c0_i32 = arith.constant 0 : i32
    %c0_i32_0 = arith.constant 0 : i32
    %c0_i32_1 = arith.constant 0 : i32
    return %c0_i32, %c0_i32_0 : i32, i32
  }
  func.func @transform_3(%arg0: i32) -> (i32, i32) {
    %c0_i32 = arith.constant 0 : i32
    %c0_i32_0 = arith.constant 0 : i32
    %c0_i32_1 = arith.constant 0 : i32
    return %c0_i32, %c0_i32_0 : i32, i32
  }
  func.func @transform_4(%arg0: i32) -> (i32, i32) {
    %c0_i32 = arith.constant 0 : i32
    %c0_i32_0 = arith.constant 0 : i32
    %c0_i32_1 = arith.constant 0 : i32
    return %c0_i32, %c0_i32_0 : i32, i32
  }
  func.func @transform_5(%arg0: i32) -> (i32, i32) {
    %c0_i32 = arith.constant 0 : i32
    %c0_i32_0 = arith.constant 0 : i32
    %c0_i32_1 = arith.constant 0 : i32
    return %c0_i32, %c0_i32_0 : i32, i32
  }
  func.func @transform_6(%arg0: i32) -> (i32, i32) {
    %c0_i32 = arith.constant 0 : i32
    %c0_i32_0 = arith.constant 0 : i32
    %c0_i32_1 = arith.constant 0 : i32
    return %c0_i32, %c0_i32_0 : i32, i32
  }
  func.func @transform_7(%arg0: i32) -> (i32, i32) {
    %c0_i32 = arith.constant 0 : i32
    %c0_i32_0 = arith.constant 0 : i32
    %c0_i32_1 = arith.constant 0 : i32
    return %c0_i32, %c0_i32_0 : i32, i32
  }
  func.func @transform_8(%arg0: i32) -> (i32, i32) {
    %c0_i32 = arith.constant 0 : i32
    %c0_i32_0 = arith.constant 0 : i32
    %c0_i32_1 = arith.constant 0 : i32
    return %c0_i32, %c0_i32_0 : i32, i32
  }
  func.func @transform_9(%arg0: i32) -> (i32, i32) {
    %c0_i32 = arith.constant 0 : i32
    %c0_i32_0 = arith.constant 0 : i32
    %c0_i32_1 = arith.constant 0 : i32
    return %c0_i32, %c0_i32_0 : i32, i32
  }
  func.func @transform_10(%arg0: i32) -> (i32, i32) {
    %c0_i32 = arith.constant 0 : i32
    %c0_i32_0 = arith.constant 0 : i32
    %c0_i32_1 = arith.constant 0 : i32
    return %c0_i32, %c0_i32_0 : i32, i32
  }
  func.func @transform_11(%arg0: i32) -> (i32, i32) {
    %c0_i32 = arith.constant 0 : i32
    %c0_i32_0 = arith.constant 0 : i32
    %c0_i32_1 = arith.constant 0 : i32
    return %c0_i32, %c0_i32_0 : i32, i32
  }
  func.func @transform_12(%arg0: i32) -> (i32, i32, i32) {
    %c0_i32 = arith.constant 0 : i32
    %c0_i32_0 = arith.constant 0 : i32
    %c0_i32_1 = arith.constant 0 : i32
    return %arg0, %c0_i32, %c0_i32_0 : i32, i32, i32
  }
  func.func @transform_13(%arg0: i32) -> (i32, i32, i32) {
    %c0_i32 = arith.constant 0 : i32
    %c0_i32_0 = arith.constant 0 : i32
    %c0_i32_1 = arith.constant 0 : i32
    return %arg0, %c0_i32, %c0_i32_0 : i32, i32, i32
  }
}

module attributes {stable_mosaic.version = 11 : i64} {
  func.func @_gated_conv3_kernel(%arg0: i32, %arg1: i32, %arg2: memref<1x256x4xbf16, #tpu.memory_space<vmem>>, %arg3: memref<1x1x4xf32, #tpu.memory_space<vmem>>, %arg4: memref<4x16xbf16, #tpu.memory_space<vmem>>, %arg5: memref<1x16xf32, #tpu.memory_space<vmem>>, %arg6: memref<1x16xf32, #tpu.memory_space<vmem>>, %arg7: memref<1x256x16xbf16, #tpu.memory_space<vmem>>, %arg8: memref<1x256x16xf32, #tpu.memory_space<vmem>>) attributes {dimension_semantics = [#tpu.dimension_semantics<parallel>, #tpu.dimension_semantics<parallel>], iteration_bounds = array<i64: 2, 1>, scalar_prefetch = 0 : i64, scratch_operands = 0 : i64, tpu.core_type = #tpu.core_type<tc>, window_params = [{transform_indices = @transform_0, window_bounds = array<i64: 1, 256, 4>}, {transform_indices = @transform_1, window_bounds = array<i64: 1, 1, 4>}, {pipeline_mode = #tpu.pipeline_mode<synchronous>, transform_indices = @transform_2, window_bounds = array<i64: 4, 16>}, {pipeline_mode = #tpu.pipeline_mode<synchronous>, transform_indices = @transform_3, window_bounds = array<i64: 1, 16>}, {pipeline_mode = #tpu.pipeline_mode<synchronous>, transform_indices = @transform_4, window_bounds = array<i64: 1, 16>}, {transform_indices = @transform_5, window_bounds = array<i64: 1, 256, 16>}, {transform_indices = @transform_6, window_bounds = array<i64: 1, 256, 16>}]} {
    %c0 = arith.constant 0 : index
    %c0_0 = arith.constant 0 : index
    %c0_1 = arith.constant 0 : index
    %0 = vector.load %arg2[%c0, %c0_0, %c0_1] : memref<1x256x4xbf16, #tpu.memory_space<vmem>>, vector<1x256x4xbf16>
    %1 = vector.shape_cast %0 : vector<1x256x4xbf16> to vector<256x4xbf16>
    %c0_2 = arith.constant 0 : index
    %c0_3 = arith.constant 0 : index
    %c0_4 = arith.constant 0 : index
    %2 = vector.load %arg3[%c0_2, %c0_3, %c0_4] : memref<1x1x4xf32, #tpu.memory_space<vmem>>, vector<1x1x4xf32>
    %3 = vector.shape_cast %2 : vector<1x1x4xf32> to vector<1x4xf32>
    %4 = arith.truncf %3 : vector<1x4xf32> to vector<1x4xbf16>
    %5 = vector.broadcast %4 : vector<1x4xbf16> to vector<256x4xbf16>
    %6 = arith.mulf %1, %5 : vector<256x4xbf16>
    %c0_5 = arith.constant 0 : index
    %c0_6 = arith.constant 0 : index
    %7 = vector.load %arg4[%c0_5, %c0_6] : memref<4x16xbf16, #tpu.memory_space<vmem>>, vector<4x16xbf16>
    %cst = arith.constant dense<0.000000e+00> : vector<256x16xf32>
    %8 = tpu.matmul %6, %7, %cst {dimension_numbers = #tpu.dot_dimension_numbers<[1], [0], [0], [1], [0, 0, 1, 1], [], []>} : vector<256x4xbf16>, vector<4x16xbf16>, vector<256x16xf32> -> vector<256x16xf32>
    %c0_7 = arith.constant 0 : index
    %c0_8 = arith.constant 0 : index
    %9 = vector.load %arg5[%c0_7, %c0_8] : memref<1x16xf32, #tpu.memory_space<vmem>>, vector<1x16xf32>
    %10 = vector.broadcast %9 : vector<1x16xf32> to vector<256x16xf32>
    %11 = arith.mulf %8, %10 : vector<256x16xf32>
    %c0_9 = arith.constant 0 : index
    %c0_10 = arith.constant 0 : index
    %12 = vector.load %arg6[%c0_9, %c0_10] : memref<1x16xf32, #tpu.memory_space<vmem>>, vector<1x16xf32>
    %13 = vector.broadcast %12 : vector<1x16xf32> to vector<256x16xf32>
    %14 = arith.addf %11, %13 : vector<256x16xf32>
    %c0_11 = arith.constant 0 : index
    %c0_12 = arith.constant 0 : index
    %c0_13 = arith.constant 0 : index
    %15 = vector.load %arg7[%c0_11, %c0_12, %c0_13] : memref<1x256x16xbf16, #tpu.memory_space<vmem>>, vector<1x256x16xbf16>
    %16 = vector.shape_cast %15 : vector<1x256x16xbf16> to vector<256x16xbf16>
    %17 = arith.extf %16 : vector<256x16xbf16> to vector<256x16xf32>
    %18 = arith.addf %14, %17 : vector<256x16xf32>
    %cst_14 = arith.constant 0.000000e+00 : f32
    %19 = vector.broadcast %cst_14 : f32 to vector<256x16xf32>
    %20 = arith.cmpf ogt, %18, %19 : vector<256x16xf32>
    %cst_15 = arith.constant 0.00999999977 : f32
    %21 = vector.broadcast %cst_15 : f32 to vector<256x16xf32>
    %22 = arith.mulf %21, %18 : vector<256x16xf32>
    %23 = arith.select %20, %18, %22 : vector<256x16xi1>, vector<256x16xf32>
    %c0_16 = arith.constant 0 : index
    %c0_17 = arith.constant 0 : index
    %c0_18 = arith.constant 0 : index
    %24 = vector.load %arg8[%c0_16, %c0_17, %c0_18] : memref<1x256x16xf32, #tpu.memory_space<vmem>>, vector<1x256x16xf32>
    %25 = vector.shape_cast %24 : vector<1x256x16xf32> to vector<256x16xf32>
    %26 = vector.shape_cast %23 : vector<256x16xf32> to vector<1x256x16xf32>
    tpu.vector_store %arg8[%c0_16, %c0_17, %c0_18], %26 {strides = array<i32>} : memref<1x256x16xf32, #tpu.memory_space<vmem>>, vector<1x256x16xf32>,
    return
  }
  func.func @transform_0(%arg0: i32, %arg1: i32) -> (i32, i32, i32) {
    %c0_i32 = arith.constant 0 : i32
    %c0_i32_0 = arith.constant 0 : i32
    return %arg0, %arg1, %c0_i32 : i32, i32, i32
  }
  func.func @transform_1(%arg0: i32, %arg1: i32) -> (i32, i32, i32) {
    %c0_i32 = arith.constant 0 : i32
    %c0_i32_0 = arith.constant 0 : i32
    %c0_i32_1 = arith.constant 0 : i32
    return %arg0, %c0_i32, %c0_i32_0 : i32, i32, i32
  }
  func.func @transform_2(%arg0: i32, %arg1: i32) -> (i32, i32) {
    %c0_i32 = arith.constant 0 : i32
    %c0_i32_0 = arith.constant 0 : i32
    %c0_i32_1 = arith.constant 0 : i32
    return %c0_i32, %c0_i32_0 : i32, i32
  }
  func.func @transform_3(%arg0: i32, %arg1: i32) -> (i32, i32) {
    %c0_i32 = arith.constant 0 : i32
    %c0_i32_0 = arith.constant 0 : i32
    %c0_i32_1 = arith.constant 0 : i32
    return %c0_i32, %c0_i32_0 : i32, i32
  }
  func.func @transform_4(%arg0: i32, %arg1: i32) -> (i32, i32) {
    %c0_i32 = arith.constant 0 : i32
    %c0_i32_0 = arith.constant 0 : i32
    %c0_i32_1 = arith.constant 0 : i32
    return %c0_i32, %c0_i32_0 : i32, i32
  }
  func.func @transform_5(%arg0: i32, %arg1: i32) -> (i32, i32, i32) {
    %c0_i32 = arith.constant 0 : i32
    %c0_i32_0 = arith.constant 0 : i32
    return %arg0, %arg1, %c0_i32 : i32, i32, i32
  }
  func.func @transform_6(%arg0: i32, %arg1: i32) -> (i32, i32, i32) {
    %c0_i32 = arith.constant 0 : i32
    %c0_i32_0 = arith.constant 0 : i32
    return %arg0, %arg1, %c0_i32 : i32, i32, i32
  }
}

</mosaic_0001>

<llo_original>
// kernel: bottleneck_forward.3
$region0: #{bottleneck_forward.3}
  #allocation0 [shape = 'u32[]', space=smem, size = 0x4, offset = 0x4, fixed_abs, tag = 'smem constant byte address 0x4 - core index']
  #allocation1 [shape = 'u32[144,128]{1,0:T(1,128)}', space=vmem, size = 0x12000, scoped, tag = 'internal scratch']
  %s0 = inlined_call_operand.vmem [shape: bf16[2,256,4], index: 0, kind: input, shape index: {}]
  %s1 = inlined_call_operand.vmem [shape: f32[2,1,4], index: 1, kind: input, shape index: {}]
  %s2 = inlined_call_operand.vmem [shape: bf16[4,16], index: 2, kind: input, shape index: {}]
  %s3 = inlined_call_operand.vmem [shape: f32[1,16], index: 3, kind: input, shape index: {}]
  %s4 = inlined_call_operand.vmem [shape: f32[1,16], index: 4, kind: input, shape index: {}]
  %s5 = inlined_call_operand.vmem [shape: bf16[2,256,16], index: 5, kind: input, shape index: {}]
  %s6 = inlined_call_operand.hbm [shape: f32[2,256,16], index: 6, kind: output, shape index: {}]
  %s7 = sld [smem:[#allocation0]]
  $region57: #{bottleneck_forward.3} parent=0
    _
  %s9 = ssub.s32 1, %s7
  %s10 = scalar_select 0, %s9, %s7
  $region1: #{bottleneck_forward.3} parent=0
    #allocation2 [shape = 'u8[262144]{0}', space=vmem, size = 0x40000, scoped, tag = 'output window, operand 0']
    #allocation3 [shape = 's32[2]{0}', space=sflag, size = 0x8, scoped, tag = 'scoped memory for bottleneck_forward.3']
    %11 = vsyncpa [#allocation3], 0
    %s12 = scalar_lea.sflag [#allocation3], 1
    %13 = vsyncpa %s12, 0
    loop: start=0, step=1, limit=4
    $region2: #{bottleneck_forward.3} parent=1 // loop_pre_header
      _
    $region3: #{bottleneck_forward.3} parent=1 // loop_header
      %s15 = sphi 0, %s19
      %p16 = scmp.ge.s32.totalorder %s15, 4
      %s22 = sphi 0, %s34
      %s23 = sphi 0, %s30
      %s24 = sphi 0, %s22
      %s25 = sphi 0, %s23
      %s26 = sphi 0, %s24
      %s27 = sphi 0, %s25
      %s39 = sphi 0, %s41
      %s42 = sphi 0, %s39
      %s43 = sphi 0, %s42
      %s59 = sphi 0, %s43
      %s65 = sphi 0, %s67
      %s68 = sphi 0, %s65
      %s69 = sphi 0, %s68
      %s85 = sphi 0, %s69
      %s89 = sphi 0, %s89
      %s91 = sphi 0, %s89
      %s92 = sphi 0, %s91
      %s106 = sphi 0, %s92
      %s110 = sphi 0, %s110
      %s112 = sphi 0, %s110
      %s113 = sphi 0, %s112
      %s127 = sphi 0, %s113
      %s131 = sphi 0, %s131
      %s133 = sphi 0, %s131
      %s134 = sphi 0, %s133
      %s148 = sphi 0, %s134
      %s156 = sphi 0, %s158
      %s159 = sphi 0, %s156
      %s160 = sphi 0, %s159
      %s176 = sphi 0, %s160
      %s184 = sphi 0, %s186
      %s187 = sphi 0, %s184
      %s188 = sphi 0, %s187
      %s204 = sphi 0, %s188
    $region4: #{bottleneck_forward.3} parent=1 // loop_header_branch
      %18 = sbr.rel (%p16) target = $region8
    $region5: #{bottleneck_forward.3} parent=1 // loop_body
      %s20 = ssub.s32 %s15, 1
      %s21 = ssub.s32 %s15, 2
      %s28 = sadd.s32 1, %s23
      %p29 = scmp.ge.s32.totalorder %s28, 1
      %s30 = scalar_select %p29, 0, %s28
      %s31 = sadd.s32 1, %s22
      %s32 = scalar_select %p29, %s31, %s22
      %p33 = scmp.ge.s32.totalorder %s32, 2
      %s34 = scalar_select %p33, 0, %s32
      %s35 = ssub.s32 %s22, %s34
      %s36 = ssub.s32 %s23, %s30
      %s37 = sor.u32 %s35, %s36
      %p38 = scmp.eq.s32.totalorder %s37, 0
      %s40 = sadd.s32 %s39, 1
      %s41 = scalar_select %p38, %s39, %s40
      %p44 = pneg %p38
      %p45 = scmp.eq.s32.totalorder %s15, 1
      %p46 = por %p44, %p45
      %p47 = scmp.ne.s32.totalorder %s39, %s42
      %p48 = scmp.eq.s32.totalorder %s15, 0
      %p49 = por %p47, %p48
      %p50 = scmp.ne.s32.totalorder %s39, %s42
      %p51 = scmp.eq.s32.totalorder %s20, 1
      %p52 = por %p50, %p51
      %p53 = scmp.ne.s32.totalorder %s42, %s43
      %p54 = scmp.eq.s32.totalorder %s20, 0
      %p55 = por %p53, %p54
      %p56 = scmp.ne.s32.totalorder %s42, %s43
      %p57 = scmp.eq.s32.totalorder %s21, 1
      %p58 = por %p56, %p57
      %p60 = scmp.ne.s32.totalorder %s43, %s59
      %p61 = scmp.eq.s32.totalorder %s21, 0
      %p62 = por %p60, %p61
      %s63 = ssub.s32 %s22, %s34
      %p64 = scmp.eq.s32.totalorder %s63, 0
      %s66 = sadd.s32 %s65, 1
      %s67 = scalar_select %p64, %s65, %s66
      %p70 = pneg %p64
      %p71 = scmp.eq.s32.totalorder %s15, 1
      %p72 = por %p70, %p71
      %p73 = scmp.ne.s32.totalorder %s65, %s68
      %p74 = scmp.eq.s32.totalorder %s15, 0
      %p75 = por %p73, %p74
      %p76 = scmp.ne.s32.totalorder %s65, %s68
      %p77 = scmp.eq.s32.totalorder %s20, 1
      %p78 = por %p76, %p77
      %p79 = scmp.ne.s32.totalorder %s68, %s69
      %p80 = scmp.eq.s32.totalorder %s20, 0
      %p81 = por %p79, %p80
      %p82 = scmp.ne.s32.totalorder %s68, %s69
      %p83 = scmp.eq.s32.totalorder %s21, 1
      %p84 = por %p82, %p83
      %p86 = scmp.ne.s32.totalorder %s69, %s85
      %p87 = scmp.eq.s32.totalorder %s21, 0
      %p88 = por %p86, %p87
      %s90 = sadd.s32 %s89, 1
      %p93 = scmp.eq.s32.totalorder %s15, 1
      %p94 = scmp.ne.s32.totalorder %s89, %s91
      %p95 = scmp.eq.s32.totalorder %s15, 0
      %p96 = por %p94, %p95
      %p97 = scmp.ne.s32.totalorder %s89, %s91
      %p98 = scmp.eq.s32.totalorder %s20, 1
      %p99 = por %p97, %p98
      %p100 = scmp.ne.s32.totalorder %s91, %s92
      %p101 = scmp.eq.s32.totalorder %s20, 0
      %p102 = por %p100, %p101
      %p103 = scmp.ne.s32.totalorder %s91, %s92
      %p104 = scmp.eq.s32.totalorder %s21, 1
      %p105 = por %p103, %p104
      %p107 = scmp.ne.s32.totalorder %s92, %s106
      %p108 = scmp.eq.s32.totalorder %s21, 0
      %p109 = por %p107, %p108
      %s111 = sadd.s32 %s110, 1
      %p114 = scmp.eq.s32.totalorder %s15, 1
      %p115 = scmp.ne.s32.totalorder %s110, %s112
      %p116 = scmp.eq.s32.totalorder %s15, 0
      %p117 = por %p115, %p116
      %p118 = scmp.ne.s32.totalorder %s110, %s112
      %p119 = scmp.eq.s32.totalorder %s20, 1
      %p120 = por %p118, %p119
      %p121 = scmp.ne.s32.totalorder %s112, %s113
      %p122 = scmp.eq.s32.totalorder %s20, 0
      %p123 = por %p121, %p122
      %p124 = scmp.ne.s32.totalorder %s112, %s113
      %p125 = scmp.eq.s32.totalorder %s21, 1
      %p126 = por %p124, %p125
      %p128 = scmp.ne.s32.totalorder %s113, %s127
      %p129 = scmp.eq.s32.totalorder %s21, 0
      %p130 = por %p128, %p129
      %s132 = sadd.s32 %s131, 1
      %p135 = scmp.eq.s32.totalorder %s15, 1
      %p136 = scmp.ne.s32.totalorder %s131, %s133
      %p137 = scmp.eq.s32.totalorder %s15, 0
      %p138 = por %p136, %p137
      %p139 = scmp.ne.s32.totalorder %s131, %s133
      %p140 = scmp.eq.s32.totalorder %s20, 1
      %p141 = por %p139, %p140
      %p142 = scmp.ne.s32.totalorder %s133, %s134
      %p143 = scmp.eq.s32.totalorder %s20, 0
      %p144 = por %p142, %p143
      %p145 = scmp.ne.s32.totalorder %s133, %s134
      %p146 = scmp.eq.s32.totalorder %s21, 1
      %p147 = por %p145, %p146
      %p149 = scmp.ne.s32.totalorder %s134, %s148
      %p150 = scmp.eq.s32.totalorder %s21, 0
      %p151 = por %p149, %p150
      %s152 = ssub.s32 %s22, %s34
      %s153 = ssub.s32 %s23, %s30
      %s154 = sor.u32 %s152, %s153
      %p155 = scmp.eq.s32.totalorder %s154, 0
      %s157 = sadd.s32 %s156, 1
      %s158 = scalar_select %p155, %s156, %s157
      %p161 = pneg %p155
      %p162 = scmp.eq.s32.totalorder %s15, 1
      %p163 = por %p161, %p162
      %p164 = scmp.ne.s32.totalorder %s156, %s159
      %p165 = scmp.eq.s32.totalorder %s15, 0
      %p166 = por %p164, %p165
      %p167 = scmp.ne.s32.totalorder %s156, %s159
      %p168 = scmp.eq.s32.totalorder %s20, 1
      %p169 = por %p167, %p168
      %p170 = scmp.ne.s32.totalorder %s159, %s160
      %p171 = scmp.eq.s32.totalorder %s20, 0
      %p172 = por %p170, %p171
      %p173 = scmp.ne.s32.totalorder %s159, %s160
      %p174 = scmp.eq.s32.totalorder %s21, 1
      %p175 = por %p173, %p174
      %p177 = scmp.ne.s32.totalorder %s160, %s176
      %p178 = scmp.eq.s32.totalorder %s21, 0
      %p179 = por %p177, %p178
      %s180 = ssub.s32 %s22, %s34
      %s181 = ssub.s32 %s23, %s30
      %s182 = sor.u32 %s180, %s181
      %p183 = scmp.eq.s32.totalorder %s182, 0
      %s185 = sadd.s32 %s184, 1
      %s186 = scalar_select %p183, %s184, %s185
      %p189 = pneg %p183
      %p190 = scmp.eq.s32.totalorder %s15, 1
      %p191 = por %p189, %p190
      %p192 = scmp.ne.s32.totalorder %s184, %s187
      %p193 = scmp.eq.s32.totalorder %s15, 0
      %p194 = por %p192, %p193
      %p195 = scmp.ne.s32.totalorder %s184, %s187
      %p196 = scmp.eq.s32.totalorder %s20, 1
      %p197 = por %p195, %p196
      %p198 = scmp.ne.s32.totalorder %s187, %s188
      %p199 = scmp.eq.s32.totalorder %s20, 0
      %p200 = por %p198, %p199
      %p201 = scmp.ne.s32.totalorder %s187, %s188
      %p202 = scmp.eq.s32.totalorder %s21, 1
      %p203 = por %p201, %p202
      %p205 = scmp.ne.s32.totalorder %s188, %s204
      %p206 = scmp.eq.s32.totalorder %s21, 0
      %p207 = por %p205, %p206
      %p208 = scmp.le.s32.totalorder 1, %s15
      %p209 = scmp.lt.s32.totalorder %s15, 3
      %p210 = pnand %p208, %p209
      %p211 = pneg %p210
      // Predicated region
      $region9: #{bottleneck_forward.3} parent=5 // pred_check
        _
      $region10: #{bottleneck_forward.3} parent=5 // pred_check_branch
        %213 = sbr.rel (%p210) target = $region12
      $region11: #{bottleneck_forward.3} parent=5 // pred_region
        %s214 = ssub.s32 %s15, 1
        // Predicated region
        $region13: #{bottleneck_forward.3} parent=11 // pred_check
          %p215 = pneg %p102
        $region14: #{bottleneck_forward.3} parent=11 // pred_check_branch
          %217 = sbr.rel (%p215) target = $region16
        $region15: #{bottleneck_forward.3} parent=11 // pred_region
          _
        $region16: #{bottleneck_forward.3} parent=11 // pred_fallthru
          _
        // Predicated region
        $region17: #{bottleneck_forward.3} parent=11 // pred_check
          %p218 = pneg %p123
        $region18: #{bottleneck_forward.3} parent=11 // pred_check_branch
          %220 = sbr.rel (%p218) target = $region20
        $region19: #{bottleneck_forward.3} parent=11 // pred_region
          _
        $region20: #{bottleneck_forward.3} parent=11 // pred_fallthru
          _
        // Predicated region
        $region21: #{bottleneck_forward.3} parent=11 // pred_check
          %p221 = pneg %p144
        $region22: #{bottleneck_forward.3} parent=11 // pred_check_branch
          %223 = sbr.rel (%p221) target = $region24
        $region23: #{bottleneck_forward.3} parent=11 // pred_region
          _
        $region24: #{bottleneck_forward.3} parent=11 // pred_fallthru
          _
      $region12: #{bottleneck_forward.3} parent=5 // pred_fallthru
        _
      %p224 = scmp.lt.s32.totalorder %s15, 2
      // Predicated region
      $region25: #{bottleneck_forward.3} parent=5 // pred_check
        %p225 = pneg %p224
      $region26: #{bottleneck_forward.3} parent=5 // pred_check_branch
        %227 = sbr.rel (%p225) target = $region28
      $region27: #{bottleneck_forward.3} parent=5 // pred_region
        // Predicated region
        $region29: #{bottleneck_forward.3} parent=27 // pred_check
          %p228 = pneg %p49
        $region30: #{bottleneck_forward.3} parent=27 // pred_check_branch
          %230 = sbr.rel (%p228) target = $region32
        $region31: #{bottleneck_forward.3} parent=27 // pred_region
          %s231 = smul.u32 32, %s23
          %p232 = scmp.lt.s32.totalorder %s22, 1
          %s233 = scalar_select %p232, %s22, 1
          %p234 = scmp.lt.s32.totalorder %s231, 31
          %s235 = scalar_select %p234, %s231, 31
          %s236 = smul.addr %s233, 32
          %s237 = sadd.s32 %s235, %s236
          %s238 = smul.addr %s237, 4
          %s239 = scalar_lea.vmem %s0, %s238
          %s240 = smul.u32 32, %s23
        $region32: #{bottleneck_forward.3} parent=27 // pred_fallthru
          _
        // Predicated region
        $region33: #{bottleneck_forward.3} parent=27 // pred_check
          %p241 = pneg %p75
        $region34: #{bottleneck_forward.3} parent=27 // pred_check_branch
          %243 = sbr.rel (%p241) target = $region36
        $region35: #{bottleneck_forward.3} parent=27 // pred_region
          %p244 = scmp.lt.s32.totalorder %s22, 1
          %s245 = scalar_select %p244, %s22, 1
          %s246 = scalar_lea.vmem %s1, %s245
        $region36: #{bottleneck_forward.3} parent=27 // pred_fallthru
          _
        // Predicated region
        $region37: #{bottleneck_forward.3} parent=27 // pred_check
          %p247 = pneg %p166
        $region38: #{bottleneck_forward.3} parent=27 // pred_check_branch
          %249 = sbr.rel (%p247) target = $region40
        $region39: #{bottleneck_forward.3} parent=27 // pred_region
          %s250 = smul.u32 32, %s23
          %p251 = scmp.lt.s32.totalorder %s22, 1
          %s252 = scalar_select %p251, %s22, 1
          %p253 = scmp.lt.s32.totalorder %s250, 31
          %s254 = scalar_select %p253, %s250, 31
          %s255 = smul.addr %s252, 32
          %s256 = sadd.s32 %s254, %s255
          %s257 = smul.addr %s256, 4
          %s258 = scalar_lea.vmem %s5, %s257
          %s259 = smul.u32 32, %s23
        $region40: #{bottleneck_forward.3} parent=27 // pred_fallthru
          _
      $region28: #{bottleneck_forward.3} parent=5 // pred_fallthru
        _
      %p260 = scmp.le.s32.totalorder 1, %s15
      %p261 = scmp.lt.s32.totalorder %s15, 3
      %p262 = pnand %p260, %p261
      %p263 = pneg %p262
      // Predicated region
      $region41: #{bottleneck_forward.3} parent=5 // pred_check
        _
      $region42: #{bottleneck_forward.3} parent=5 // pred_check_branch
        %265 = sbr.rel (%p262) target = $region44
      $region43: #{bottleneck_forward.3} parent=5 // pred_region
        %s266 = ssub.s32 %s15, 1
        %s267 = smul.u32 32, %s25
        %p268 = scmp.lt.s32.totalorder %s24, 1
        %s269 = scalar_select %p268, %s24, 1
        %p270 = scmp.lt.s32.totalorder %s267, 31
        %s271 = scalar_select %p270, %s267, 31
        %s272 = smul.addr %s269, 32
        %s273 = sadd.s32 %s271, %s272
        %s274 = smul.addr %s273, 4
        %s275 = scalar_lea.vmem %s0, %s274
        %p276 = pneg %p55
        %p277 = pneg %p52
        %p278 = scmp.lt.s32.totalorder %s24, 1
        %s279 = scalar_select %p278, %s24, 1
        %s280 = scalar_lea.vmem %s1, %s279
        %p281 = pneg %p81
        %p282 = pneg %p78
        %p283 = pneg %p102
        %p284 = pneg %p99
        %p285 = pneg %p123
        %p286 = pneg %p120
        %p287 = pneg %p144
        %p288 = pneg %p141
        %s289 = smul.u32 32, %s25
        %p290 = scmp.lt.s32.totalorder %s24, 1
        %s291 = scalar_select %p290, %s24, 1
        %p292 = scmp.lt.s32.totalorder %s289, 31
        %s293 = scalar_select %p292, %s289, 31
        %s294 = smul.addr %s291, 32
        %s295 = sadd.s32 %s293, %s294
        %s296 = smul.addr %s295, 4
        %s297 = scalar_lea.vmem %s5, %s296
        %p298 = pneg %p172
        %p299 = pneg %p169
        %p300 = pneg %p200
        %p301 = pneg %p197
        %s302 = sand.u32 %s187, 1
        %s303 = scalar_lea.sflag [#allocation3], %s302
        %s304 = sand.u32 %s187, 1
        %s305 = smul.addr %s304, 256
        %s306 = scalar_lea.vmem [#allocation2], %s305
        %s307 = smul.u32 32, %s25
        %p308 = scmp.lt.s32.totalorder %s24, 1
        %s309 = scalar_select %p308, %s24, 1
        %p310 = scmp.lt.s32.totalorder %s307, 31
        %s311 = scalar_select %p310, %s307, 31
        %s312 = smul.addr %s309, 32
        %s313 = sadd.s32 %s311, %s312
        %s314 = smul.addr %s313, 4
        %s315 = scalar_lea.vmem %s0, %s314
        %s316 = smul.u32 32, %s25
        %p317 = scmp.lt.s32.totalorder %s24, 1
        %s318 = scalar_select %p317, %s24, 1
        %s319 = scalar_lea.vmem %s1, %s318
        %s320 = smul.u32 32, %s25
        %p321 = scmp.lt.s32.totalorder %s24, 1
        %s322 = scalar_select %p321, %s24, 1
        %p323 = scmp.lt.s32.totalorder %s320, 31
        %s324 = scalar_select %p323, %s320, 31
        %s325 = smul.addr %s322, 32
        %s326 = sadd.s32 %s324, %s325
        %s327 = smul.addr %s326, 4
        %s328 = scalar_lea.vmem %s5, %s327
        %s329 = smul.u32 32, %s25
        %s330 = smul.u32 32, %s25
        %v332 = vld [vmem:[%s315] sm:$0xf]
        %v333 = vld [vmem:[%s315 + $0x4] sm:$0xf]
        %v334 = vld [vmem:[%s315 + $0x8] sm:$0xf]
        %v335 = vld [vmem:[%s315 + $0xc] sm:$0xf]
        %v336 = vld [vmem:[%s315 + $0x10] sm:$0xf]
        %v337 = vld [vmem:[%s315 + $0x14] sm:$0xf]
        %v338 = vld [vmem:[%s315 + $0x18] sm:$0xf]
        %v339 = vld [vmem:[%s315 + $0x1c] sm:$0xf]
        %v340 = vld [vmem:[%s315 + $0x20] sm:$0xf]
        %v341 = vld [vmem:[%s315 + $0x24] sm:$0xf]
        %v342 = vld [vmem:[%s315 + $0x28] sm:$0xf]
        %v343 = vld [vmem:[%s315 + $0x2c] sm:$0xf]
        %v344 = vld [vmem:[%s315 + $0x30] sm:$0xf]
        %v345 = vld [vmem:[%s315 + $0x34] sm:$0xf]
        %v346 = vld [vmem:[%s315 + $0x38] sm:$0xf]
        %v347 = vld [vmem:[%s315 + $0x3c] sm:$0xf]
        %v348 = vld [vmem:[%s315 + $0x40] sm:$0xf]
        %v349 = vld [vmem:[%s315 + $0x44] sm:$0xf]
        %v350 = vld [vmem:[%s315 + $0x48] sm:$0xf]
        %v351 = vld [vmem:[%s315 + $0x4c] sm:$0xf]
        %v352 = vld [vmem:[%s315 + $0x50] sm:$0xf]
        %v353 = vld [vmem:[%s315 + $0x54] sm:$0xf]
        %v354 = vld [vmem:[%s315 + $0x58] sm:$0xf]
        %v355 = vld [vmem:[%s315 + $0x5c] sm:$0xf]
        %v356 = vld [vmem:[%s315 + $0x60] sm:$0xf]
        %v357 = vld [vmem:[%s315 + $0x64] sm:$0xf]
        %v358 = vld [vmem:[%s315 + $0x68] sm:$0xf]
        %v359 = vld [vmem:[%s315 + $0x6c] sm:$0xf]
        %v360 = vld [vmem:[%s315 + $0x70] sm:$0xf]
        %v361 = vld [vmem:[%s315 + $0x74] sm:$0xf]
        %v362 = vld [vmem:[%s315 + $0x78] sm:$0xf]
        %v363 = vld [vmem:[%s315 + $0x7c] sm:$0xf]
        %v364 = vld [vmem:[%s319] sm:$0x1]
        %v365 = vpack.c.bf16 %v364, %v364
        %v367 = vpack.i.b16 %v365, %v365
        %v369 = vlaneseq
        %v370 = vshrl.u32 %v369, 7
        %v371 = vsub.s32 0, %v370
        %v372 = vrot.slane %v367, %v371
        %v374 = vunpack.c.l.b16 %v372
        %v375 = vpack.c.b16 %v374, %v374
        %v377 = vmul.bf16 %v332, %v375
        %v378 = vmul.bf16 %v333, %v375
        %v379 = vmul.bf16 %v334, %v375
        %v380 = vmul.bf16 %v335, %v375
        %v381 = vmul.bf16 %v336, %v375
        %v382 = vmul.bf16 %v337, %v375
        %v383 = vmul.bf16 %v338, %v375
        %v384 = vmul.bf16 %v339, %v375
        %v385 = vmul.bf16 %v340, %v375
        %v386 = vmul.bf16 %v341, %v375
        %v387 = vmul.bf16 %v342, %v375
        %v388 = vmul.bf16 %v343, %v375
        %v389 = vmul.bf16 %v344, %v375
        %v390 = vmul.bf16 %v345, %v375
        %v391 = vmul.bf16 %v346, %v375
        %v392 = vmul.bf16 %v347, %v375
        %v393 = vmul.bf16 %v348, %v375
        %v394 = vmul.bf16 %v349, %v375
        %v395 = vmul.bf16 %v350, %v375
        %v396 = vmul.bf16 %v351, %v375
        %v397 = vmul.bf16 %v352, %v375
        %v398 = vmul.bf16 %v353, %v375
        %v399 = vmul.bf16 %v354, %v375
        %v400 = vmul.bf16 %v355, %v375
        %v401 = vmul.bf16 %v356, %v375
        %v402 = vmul.bf16 %v357, %v375
        %v403 = vmul.bf16 %v358, %v375
        %v404 = vmul.bf16 %v359, %v375
        %v405 = vmul.bf16 %v360, %v375
        %v406 = vmul.bf16 %v361, %v375
        %v407 = vmul.bf16 %v362, %v375
        %v408 = vmul.bf16 %v363, %v375
        %v409 = vld [vmem:[%s2] sm:$0x3]
        %v442 = vunpack.c.l.b16 %v377
        %v443 = vunpack.c.l.b16 %v378
        %v444 = vunpack.c.l.b16 %v379
        %v445 = vunpack.c.l.b16 %v380
        %v446 = vunpack.c.l.b16 %v381
        %v447 = vunpack.c.l.b16 %v382
        %v448 = vunpack.c.l.b16 %v383
        %v449 = vunpack.c.l.b16 %v384
        %v450 = vunpack.c.l.b16 %v385
        %v451 = vunpack.c.l.b16 %v386
        %v452 = vunpack.c.l.b16 %v387
        %v453 = vunpack.c.l.b16 %v388
        %v454 = vunpack.c.l.b16 %v389
        %v455 = vunpack.c.l.b16 %v390
        %v456 = vunpack.c.l.b16 %v391
        %v457 = vunpack.c.l.b16 %v392
        %v458 = vunpack.c.l.b16 %v393
        %v459 = vunpack.c.l.b16 %v394
        %v460 = vunpack.c.l.b16 %v395
        %v461 = vunpack.c.l.b16 %v396
        %v462 = vunpack.c.l.b16 %v397
        %v463 = vunpack.c.l.b16 %v398
        %v464 = vunpack.c.l.b16 %v399
        %v465 = vunpack.c.l.b16 %v400
        %v466 = vunpack.c.l.b16 %v401
        %v467 = vunpack.c.l.b16 %v402
        %v468 = vunpack.c.l.b16 %v403
        %v469 = vunpack.c.l.b16 %v404
        %v470 = vunpack.c.l.b16 %v405
        %v471 = vunpack.c.l.b16 %v406
        %v472 = vunpack.c.l.b16 %v407
        %v473 = vunpack.c.l.b16 %v408
        %v474 = vpack.c.b16 %v443, %v442
        %v475 = vpack.c.b16 %v445, %v444
        %v476 = vpack.c.b16 %v447, %v446
        %v477 = vpack.c.b16 %v449, %v448
        %v478 = vpack.c.b16 %v451, %v450
        %v479 = vpack.c.b16 %v453, %v452
        %v480 = vpack.c.b16 %v455, %v454
        %v481 = vpack.c.b16 %v457, %v456
        %v482 = vpack.c.b16 %v459, %v458
        %v483 = vpack.c.b16 %v461, %v460
        %v484 = vpack.c.b16 %v463, %v462
        %v485 = vpack.c.b16 %v465, %v464
        %v486 = vpack.c.b16 %v467, %v466
        %v487 = vpack.c.b16 %v469, %v468
        %v488 = vpack.c.b16 %v471, %v470
        %v489 = vpack.c.b16 %v473, %v472
        %vm490 = vcmask 31744
        %v492 = vsel %vm490, %v474, 0
        %v495 = vsel %vm490, %v475, 0
        %v498 = vsel %vm490, %v476, 0
        %v501 = vsel %vm490, %v477, 0
        %v504 = vsel %vm490, %v478, 0
        %v507 = vsel %vm490, %v479, 0
        %v510 = vsel %vm490, %v480, 0
        %v513 = vsel %vm490, %v481, 0
        %v516 = vsel %vm490, %v482, 0
        %v519 = vsel %vm490, %v483, 0
        %v522 = vsel %vm490, %v484, 0
        %v525 = vsel %vm490, %v485, 0
        %v528 = vsel %vm490, %v486, 0
        %v531 = vsel %vm490, %v487, 0
        %v534 = vsel %vm490, %v488, 0
        %v537 = vsel %vm490, %v489, 0
        %vm539 = vcmask 1041408
        %v541 = vsel %vm539, %v409, 0
        %543 = vmatprep.subr.bf16.mxu0 0
        %544 = vmatpush1.bf16.msra.mxu0 %v541
        %545 = vmatprep.subr.bf16.mxu0 0
        %546 = vmatpush1.bf16.msra.mxu0 0
        %547 = vmatprep.subr.bf16.mxu0 0
        %548 = vmatpush1.bf16.msra.mxu0 0
        %549 = vmatprep.subr.bf16.mxu0 0
        %550 = vmatpush1.bf16.msra.mxu0 0
        %551 = vmatprep.subr.bf16.mxu0 0
        %552 = vmatpush1.bf16.msra.mxu0 0
        %553 = vmatprep.subr.bf16.mxu0 0
        %554 = vmatpush1.bf16.msra.mxu0 0
        %555 = vmatprep.subr.bf16.mxu0 0
        %556 = vmatpush1.bf16.msra.mxu0 0
        %557 = vmatprep.subr.bf16.mxu0 0
        %558 = vmatpush1.bf16.msra.mxu0 0
        %559 = vmatprep.subr.bf16.mxu0 0
        %560 = vmatpush1.bf16.msra.mxu0 0
        %561 = vmatprep.subr.bf16.mxu0 0
        %562 = vmatpush1.bf16.msra.mxu0 0
        %563 = vmatprep.subr.bf16.mxu0 0
        %564 = vmatpush1.bf16.msra.mxu0 0
        %565 = vmatprep.subr.bf16.mxu0 0
        %566 = vmatpush1.bf16.msra.mxu0 0
        %567 = vmatprep.subr.bf16.mxu0 0
        %568 = vmatpush1.bf16.msra.mxu0 0
        %569 = vmatprep.subr.bf16.mxu0 0
        %570 = vmatpush1.bf16.msra.mxu0 0
        %571 = vmatprep.subr.bf16.mxu0 0
        %572 = vmatpush1.bf16.msra.mxu0 0
        %573 = vmatprep.subr.bf16.mxu0 0
        %574 = vmatpush1.bf16.msra.mxu0 0
        %575 = vmatprep.mubr.bf16.mxu0 0
        %576 = vmatmul.mubr.bf16.gmra.mrb[0].mxu0 %v492
        %v577 = vpop.f32.mrb[0].mxu0
        %v578 = vadd.f32 0.0, %v577
        %v579 = vpop.f32.mrb[0].mxu0
        %v580 = vpop.f32.mrb[0].mxu0
        %v581 = vadd.f32 0.0, %v580
        %v582 = vpop.f32.mrb[0].mxu0
        %583 = vmatprep.mubr.bf16.mxu0 0
        %584 = vmatmul.mubr.bf16.gmra.mrb[0].mxu0 %v495
        %v585 = vpop.f32.mrb[0].mxu0
        %v586 = vadd.f32 0.0, %v585
        %v587 = vpop.f32.mrb[0].mxu0
        %v588 = vpop.f32.mrb[0].mxu0
        %v589 = vadd.f32 0.0, %v588
        %v590 = vpop.f32.mrb[0].mxu0
        %591 = vmatprep.mubr.bf16.mxu0 0
        %592 = vmatmul.mubr.bf16.gmra.mrb[0].mxu0 %v498
        %v593 = vpop.f32.mrb[0].mxu0
        %v594 = vadd.f32 0.0, %v593
        %v595 = vpop.f32.mrb[0].mxu0
        %v596 = vpop.f32.mrb[0].mxu0
        %v597 = vadd.f32 0.0, %v596
        %v598 = vpop.f32.mrb[0].mxu0
        %599 = vmatprep.mubr.bf16.mxu0 0
        %600 = vmatmul.mubr.bf16.gmra.mrb[0].mxu0 %v501
        %v601 = vpop.f32.mrb[0].mxu0
        %v602 = vadd.f32 0.0, %v601
        %v603 = vpop.f32.mrb[0].mxu0
        %v604 = vpop.f32.mrb[0].mxu0
        %v605 = vadd.f32 0.0, %v604
        %v606 = vpop.f32.mrb[0].mxu0
        %607 = vmatprep.mubr.bf16.mxu0 0
        %608 = vmatmul.mubr.bf16.gmra.mrb[0].mxu0 %v504
        %v609 = vpop.f32.mrb[0].mxu0
        %v610 = vadd.f32 0.0, %v609
        %v611 = vpop.f32.mrb[0].mxu0
        %v612 = vpop.f32.mrb[0].mxu0
        %v613 = vadd.f32 0.0, %v612
        %v614 = vpop.f32.mrb[0].mxu0
        %615 = vmatprep.mubr.bf16.mxu0 0
        %616 = vmatmul.mubr.bf16.gmra.mrb[0].mxu0 %v507
        %v617 = vpop.f32.mrb[0].mxu0
        %v618 = vadd.f32 0.0, %v617
        %v619 = vpop.f32.mrb[0].mxu0
        %v620 = vpop.f32.mrb[0].mxu0
        %v621 = vadd.f32 0.0, %v620
        %v622 = vpop.f32.mrb[0].mxu0
        %623 = vmatprep.mubr.bf16.mxu0 0
        %624 = vmatmul.mubr.bf16.gmra.mrb[0].mxu0 %v510
        %v625 = vpop.f32.mrb[0].mxu0
        %v626 = vadd.f32 0.0, %v625
        %v627 = vpop.f32.mrb[0].mxu0
        %v628 = vpop.f32.mrb[0].mxu0
        %v629 = vadd.f32 0.0, %v628
        %v630 = vpop.f32.mrb[0].mxu0
        %631 = vmatprep.mubr.bf16.mxu0 0
        %632 = vmatmul.mubr.bf16.gmra.mrb[0].mxu0 %v513
        %v633 = vpop.f32.mrb[0].mxu0
        %v634 = vadd.f32 0.0, %v633
        %v635 = vpop.f32.mrb[0].mxu0
        %v636 = vpop.f32.mrb[0].mxu0
        %v637 = vadd.f32 0.0, %v636
        %v638 = vpop.f32.mrb[0].mxu0
        %639 = vmatprep.mubr.bf16.mxu0 0
        %640 = vmatmul.mubr.bf16.gmra.mrb[0].mxu0 %v516
        %v641 = vpop.f32.mrb[0].mxu0
        %v642 = vadd.f32 0.0, %v641
        %v643 = vpop.f32.mrb[0].mxu0
        %v644 = vpop.f32.mrb[0].mxu0
        %v645 = vadd.f32 0.0, %v644
        %v646 = vpop.f32.mrb[0].mxu0
        %647 = vmatprep.mubr.bf16.mxu0 0
        %648 = vmatmul.mubr.bf16.gmra.mrb[0].mxu0 %v519
        %v649 = vpop.f32.mrb[0].mxu0
        %v650 = vadd.f32 0.0, %v649
        %v651 = vpop.f32.mrb[0].mxu0
        %v652 = vpop.f32.mrb[0].mxu0
        %v653 = vadd.f32 0.0, %v652
        %v654 = vpop.f32.mrb[0].mxu0
        %655 = vmatprep.mubr.bf16.mxu0 0
        %656 = vmatmul.mubr.bf16.gmra.mrb[0].mxu0 %v522
        %v657 = vpop.f32.mrb[0].mxu0
        %v658 = vadd.f32 0.0, %v657
        %v659 = vpop.f32.mrb[0].mxu0
        %v660 = vpop.f32.mrb[0].mxu0
        %v661 = vadd.f32 0.0, %v660
        %v662 = vpop.f32.mrb[0].mxu0
        %663 = vmatprep.mubr.bf16.mxu0 0
        %664 = vmatmul.mubr.bf16.gmra.mrb[0].mxu0 %v525
        %v665 = vpop.f32.mrb[0].mxu0
        %v666 = vadd.f32 0.0, %v665
        %v667 = vpop.f32.mrb[0].mxu0
        %v668 = vpop.f32.mrb[0].mxu0
        %v669 = vadd.f32 0.0, %v668
        %v670 = vpop.f32.mrb[0].mxu0
        %671 = vmatprep.mubr.bf16.mxu0 0
        %672 = vmatmul.mubr.bf16.gmra.mrb[0].mxu0 %v528
        %v673 = vpop.f32.mrb[0].mxu0
        %v674 = vadd.f32 0.0, %v673
        %v675 = vpop.f32.mrb[0].mxu0
        %v676 = vpop.f32.mrb[0].mxu0
        %v677 = vadd.f32 0.0, %v676
        %v678 = vpop.f32.mrb[0].mxu0
        %679 = vmatprep.mubr.bf16.mxu0 0
        %680 = vmatmul.mubr.bf16.gmra.mrb[0].mxu0 %v531
        %v681 = vpop.f32.mrb[0].mxu0
        %v682 = vadd.f32 0.0, %v681
        %v683 = vpop.f32.mrb[0].mxu0
        %v684 = vpop.f32.mrb[0].mxu0
        %v685 = vadd.f32 0.0, %v684
        %v686 = vpop.f32.mrb[0].mxu0
        %687 = vmatprep.mubr.bf16.mxu0 0
        %688 = vmatmul.mubr.bf16.gmra.mrb[0].mxu0 %v534
        %v689 = vpop.f32.mrb[0].mxu0
        %v690 = vadd.f32 0.0, %v689
        %v691 = vpop.f32.mrb[0].mxu0
        %v692 = vpop.f32.mrb[0].mxu0
        %v693 = vadd.f32 0.0, %v692
        %v694 = vpop.f32.mrb[0].mxu0
        %695 = vmatprep.mubr.bf16.mxu0 0
        %696 = vmatmul.mubr.bf16.gmra.mrb[0].mxu0 %v537
        %v697 = vpop.f32.mrb[0].mxu0
        %v698 = vadd.f32 0.0, %v697
        %v699 = vpop.f32.mrb[0].mxu0
        %v700 = vpop.f32.mrb[0].mxu0
        %v701 = vadd.f32 0.0, %v700
        %v702 = vpop.f32.mrb[0].mxu0
        %703 = vdwg.mxu0
        %v704 = vld [vmem:[%s3] sm:$0x1]
        %v706 = vlaneseq
        %v707 = vshrl.u32 %v706, 7
        %v708 = vsub.s32 0, %v707
        %v709 = vrot.slane %v704, %v708
        %v711 = vmul.f32 %v578, %v709
        %v712 = vmul.f32 %v581, %v709
        %v713 = vmul.f32 %v586, %v709
        %v714 = vmul.f32 %v589, %v709
        %v715 = vmul.f32 %v594, %v709
        %v716 = vmul.f32 %v597, %v709
        %v717 = vmul.f32 %v602, %v709
        %v718 = vmul.f32 %v605, %v709
        %v719 = vmul.f32 %v610, %v709
        %v720 = vmul.f32 %v613, %v709
        %v721 = vmul.f32 %v618, %v709
        %v722 = vmul.f32 %v621, %v709
        %v723 = vmul.f32 %v626, %v709
        %v724 = vmul.f32 %v629, %v709
        %v725 = vmul.f32 %v634, %v709
        %v726 = vmul.f32 %v637, %v709
        %v727 = vmul.f32 %v642, %v709
        %v728 = vmul.f32 %v645, %v709
        %v729 = vmul.f32 %v650, %v709
        %v730 = vmul.f32 %v653, %v709
        %v731 = vmul.f32 %v658, %v709
        %v732 = vmul.f32 %v661, %v709
        %v733 = vmul.f32 %v666, %v709
        %v734 = vmul.f32 %v669, %v709
        %v735 = vmul.f32 %v674, %v709
        %v736 = vmul.f32 %v677, %v709
        %v737 = vmul.f32 %v682, %v709
        %v738 = vmul.f32 %v685, %v709
        %v739 = vmul.f32 %v690, %v709
        %v740 = vmul.f32 %v693, %v709
        %v741 = vmul.f32 %v698, %v709
        %v742 = vmul.f32 %v701, %v709
        %v743 = vld [vmem:[%s4] sm:$0x1]
        %v745 = vlaneseq
        %v746 = vshrl.u32 %v745, 7
        %v747 = vsub.s32 0, %v746
        %v748 = vrot.slane %v743, %v747
        %v750 = vadd.f32 %v711, %v748
        %v751 = vadd.f32 %v712, %v748
        %v752 = vadd.f32 %v713, %v748
        %v753 = vadd.f32 %v714, %v748
        %v754 = vadd.f32 %v715, %v748
        %v755 = vadd.f32 %v716, %v748
        %v756 = vadd.f32 %v717, %v748
        %v757 = vadd.f32 %v718, %v748
        %v758 = vadd.f32 %v719, %v748
        %v759 = vadd.f32 %v720, %v748
        %v760 = vadd.f32 %v721, %v748
        %v761 = vadd.f32 %v722, %v748
        %v762 = vadd.f32 %v723, %v748
        %v763 = vadd.f32 %v724, %v748
        %v764 = vadd.f32 %v725, %v748
        %v765 = vadd.f32 %v726, %v748
        %v766 = vadd.f32 %v727, %v748
        %v767 = vadd.f32 %v728, %v748
        %v768 = vadd.f32 %v729, %v748
        %v769 = vadd.f32 %v730, %v748
        %v770 = vadd.f32 %v731, %v748
        %v771 = vadd.f32 %v732, %v748
        %v772 = vadd.f32 %v733, %v748
        %v773 = vadd.f32 %v734, %v748
        %v774 = vadd.f32 %v735, %v748
        %v775 = vadd.f32 %v736, %v748
        %v776 = vadd.f32 %v737, %v748
        %v777 = vadd.f32 %v738, %v748
        %v778 = vadd.f32 %v739, %v748
        %v779 = vadd.f32 %v740, %v748
        %v780 = vadd.f32 %v741, %v748
        %v781 = vadd.f32 %v742, %v748
        %v782 = vld [vmem:[%s328] sm:$0xf]
        %v783 = vld [vmem:[%s328 + $0x4] sm:$0xf]
        %v784 = vld [vmem:[%s328 + $0x8] sm:$0xf]
        %v785 = vld [vmem:[%s328 + $0xc] sm:$0xf]
        %v786 = vld [vmem:[%s328 + $0x10] sm:$0xf]
        %v787 = vld [vmem:[%s328 + $0x14] sm:$0xf]
        %v788 = vld [vmem:[%s328 + $0x18] sm:$0xf]
        %v789 = vld [vmem:[%s328 + $0x1c] sm:$0xf]
        %v790 = vld [vmem:[%s328 + $0x20] sm:$0xf]
        %v791 = vld [vmem:[%s328 + $0x24] sm:$0xf]
        %v792 = vld [vmem:[%s328 + $0x28] sm:$0xf]
        %v793 = vld [vmem:[%s328 + $0x2c] sm:$0xf]
        %v794 = vld [vmem:[%s328 + $0x30] sm:$0xf]
        %v795 = vld [vmem:[%s328 + $0x34] sm:$0xf]
        %v796 = vld [vmem:[%s328 + $0x38] sm:$0xf]
        %v797 = vld [vmem:[%s328 + $0x3c] sm:$0xf]
        %v798 = vld [vmem:[%s328 + $0x40] sm:$0xf]
        %v799 = vld [vmem:[%s328 + $0x44] sm:$0xf]
        %v800 = vld [vmem:[%s328 + $0x48] sm:$0xf]
        %v801 = vld [vmem:[%s328 + $0x4c] sm:$0xf]
        %v802 = vld [vmem:[%s328 + $0x50] sm:$0xf]
        %v803 = vld [vmem:[%s328 + $0x54] sm:$0xf]
        %v804 = vld [vmem:[%s328 + $0x58] sm:$0xf]
        %v805 = vld [vmem:[%s328 + $0x5c] sm:$0xf]
        %v806 = vld [vmem:[%s328 + $0x60] sm:$0xf]
        %v807 = vld [vmem:[%s328 + $0x64] sm:$0xf]
        %v808 = vld [vmem:[%s328 + $0x68] sm:$0xf]
        %v809 = vld [vmem:[%s328 + $0x6c] sm:$0xf]
        %v810 = vld [vmem:[%s328 + $0x70] sm:$0xf]
        %v811 = vld [vmem:[%s328 + $0x74] sm:$0xf]
        %v812 = vld [vmem:[%s328 + $0x78] sm:$0xf]
        %v813 = vld [vmem:[%s328 + $0x7c] sm:$0xf]
        %v814 = vunpack.c.l.bf16 %v782
        %v815 = vunpack.c.l.bf16 %v783
        %v816 = vunpack.c.l.bf16 %v784
        %v817 = vunpack.c.l.bf16 %v785
        %v818 = vunpack.c.l.bf16 %v786
        %v819 = vunpack.c.l.bf16 %v787
        %v820 = vunpack.c.l.bf16 %v788
        %v821 = vunpack.c.l.bf16 %v789
        %v822 = vunpack.c.l.bf16 %v790
        %v823 = vunpack.c.l.bf16 %v791
        %v824 = vunpack.c.l.bf16 %v792
        %v825 = vunpack.c.l.bf16 %v793
        %v826 = vunpack.c.l.bf16 %v794
        %v827 = vunpack.c.l.bf16 %v795
        %v828 = vunpack.c.l.bf16 %v796
        %v829 = vunpack.c.l.bf16 %v797
        %v830 = vunpack.c.l.bf16 %v798
        %v831 = vunpack.c.l.bf16 %v799
        %v832 = vunpack.c.l.bf16 %v800
        %v833 = vunpack.c.l.bf16 %v801
        %v834 = vunpack.c.l.bf16 %v802
        %v835 = vunpack.c.l.bf16 %v803
        %v836 = vunpack.c.l.bf16 %v804
        %v837 = vunpack.c.l.bf16 %v805
        %v838 = vunpack.c.l.bf16 %v806
        %v839 = vunpack.c.l.bf16 %v807
        %v840 = vunpack.c.l.bf16 %v808
        %v841 = vunpack.c.l.bf16 %v809
        %v842 = vunpack.c.l.bf16 %v810
        %v843 = vunpack.c.l.bf16 %v811
        %v844 = vunpack.c.l.bf16 %v812
        %v845 = vunpack.c.l.bf16 %v813
        %v846 = vadd.f32 %v750, %v814
        %v847 = vadd.f32 %v751, %v815
        %v848 = vadd.f32 %v752, %v816
        %v849 = vadd.f32 %v753, %v817
        %v850 = vadd.f32 %v754, %v818
        %v851 = vadd.f32 %v755, %v819
        %v852 = vadd.f32 %v756, %v820
        %v853 = vadd.f32 %v757, %v821
        %v854 = vadd.f32 %v758, %v822
        %v855 = vadd.f32 %v759, %v823
        %v856 = vadd.f32 %v760, %v824
        %v857 = vadd.f32 %v761, %v825
        %v858 = vadd.f32 %v762, %v826
        %v859 = vadd.f32 %v763, %v827
        %v860 = vadd.f32 %v764, %v828
        %v861 = vadd.f32 %v765, %v829
        %v862 = vadd.f32 %v766, %v830
        %v863 = vadd.f32 %v767, %v831
        %v864 = vadd.f32 %v768, %v832
        %v865 = vadd.f32 %v769, %v833
        %v866 = vadd.f32 %v770, %v834
        %v867 = vadd.f32 %v771, %v835
        %v868 = vadd.f32 %v772, %v836
        %v869 = vadd.f32 %v773, %v837
        %v870 = vadd.f32 %v774, %v838
        %v871 = vadd.f32 %v775, %v839
        %v872 = vadd.f32 %v776, %v840
        %v873 = vadd.f32 %v777, %v841
        %v874 = vadd.f32 %v778, %v842
        %v875 = vadd.f32 %v779, %v843
        %v876 = vadd.f32 %v780, %v844
        %v877 = vadd.f32 %v781, %v845
        %vm878 = vcmp.gt.f32.partialorder %v846, 0.0
        %vm879 = vcmp.gt.f32.partialorder %v847, 0.0
        %vm880 = vcmp.gt.f32.partialorder %v848, 0.0
        %vm881 = vcmp.gt.f32.partialorder %v849, 0.0
        %vm882 = vcmp.gt.f32.partialorder %v850, 0.0
        %vm883 = vcmp.gt.f32.partialorder %v851, 0.0
        %vm884 = vcmp.gt.f32.partialorder %v852, 0.0
        %vm885 = vcmp.gt.f32.partialorder %v853, 0.0
        %vm886 = vcmp.gt.f32.partialorder %v854, 0.0
        %vm887 = vcmp.gt.f32.partialorder %v855, 0.0
        %vm888 = vcmp.gt.f32.partialorder %v856, 0.0
        %vm889 = vcmp.gt.f32.partialorder %v857, 0.0
        %vm890 = vcmp.gt.f32.partialorder %v858, 0.0
        %vm891 = vcmp.gt.f32.partialorder %v859, 0.0
        %vm892 = vcmp.gt.f32.partialorder %v860, 0.0
        %vm893 = vcmp.gt.f32.partialorder %v861, 0.0
        %vm894 = vcmp.gt.f32.partialorder %v862, 0.0
        %vm895 = vcmp.gt.f32.partialorder %v863, 0.0
        %vm896 = vcmp.gt.f32.partialorder %v864, 0.0
        %vm897 = vcmp.gt.f32.partialorder %v865, 0.0
        %vm898 = vcmp.gt.f32.partialorder %v866, 0.0
        %vm899 = vcmp.gt.f32.partialorder %v867, 0.0
        %vm900 = vcmp.gt.f32.partialorder %v868, 0.0
        %vm901 = vcmp.gt.f32.partialorder %v869, 0.0
        %vm902 = vcmp.gt.f32.partialorder %v870, 0.0
        %vm903 = vcmp.gt.f32.partialorder %v871, 0.0
        %vm904 = vcmp.gt.f32.partialorder %v872, 0.0
        %vm905 = vcmp.gt.f32.partialorder %v873, 0.0
        %vm906 = vcmp.gt.f32.partialorder %v874, 0.0
        %vm907 = vcmp.gt.f32.partialorder %v875, 0.0
        %vm908 = vcmp.gt.f32.partialorder %v876, 0.0
        %vm909 = vcmp.gt.f32.partialorder %v877, 0.0
        %v910 = vmul.f32 %v846, 0.01
        %v911 = vmul.f32 %v847, 0.01
        %v912 = vmul.f32 %v848, 0.01
        %v913 = vmul.f32 %v849, 0.01
        %v914 = vmul.f32 %v850, 0.01
        %v915 = vmul.f32 %v851, 0.01
        %v916 = vmul.f32 %v852, 0.01
        %v917 = vmul.f32 %v853, 0.01
        %v918 = vmul.f32 %v854, 0.01
        %v919 = vmul.f32 %v855, 0.01
        %v920 = vmul.f32 %v856, 0.01
        %v921 = vmul.f32 %v857, 0.01
        %v922 = vmul.f32 %v858, 0.01
        %v923 = vmul.f32 %v859, 0.01
        %v924 = vmul.f32 %v860, 0.01
        %v925 = vmul.f32 %v861, 0.01
        %v926 = vmul.f32 %v862, 0.01
        %v927 = vmul.f32 %v863, 0.01
        %v928 = vmul.f32 %v864, 0.01
        %v929 = vmul.f32 %v865, 0.01
        %v930 = vmul.f32 %v866, 0.01
        %v931 = vmul.f32 %v867, 0.01
        %v932 = vmul.f32 %v868, 0.01
        %v933 = vmul.f32 %v869, 0.01
        %v934 = vmul.f32 %v870, 0.01
        %v935 = vmul.f32 %v871, 0.01
        %v936 = vmul.f32 %v872, 0.01
        %v937 = vmul.f32 %v873, 0.01
        %v938 = vmul.f32 %v874, 0.01
        %v939 = vmul.f32 %v875, 0.01
        %v940 = vmul.f32 %v876, 0.01
        %v941 = vmul.f32 %v877, 0.01
        %v942 = vsel %vm878, %v846, %v910
        %v943 = vsel %vm879, %v847, %v911
        %v944 = vsel %vm880, %v848, %v912
        %v945 = vsel %vm881, %v849, %v913
        %v946 = vsel %vm882, %v850, %v914
        %v947 = vsel %vm883, %v851, %v915
        %v948 = vsel %vm884, %v852, %v916
        %v949 = vsel %vm885, %v853, %v917
        %v950 = vsel %vm886, %v854, %v918
        %v951 = vsel %vm887, %v855, %v919
        %v952 = vsel %vm888, %v856, %v920
        %v953 = vsel %vm889, %v857, %v921
        %v954 = vsel %vm890, %v858, %v922
        %v955 = vsel %vm891, %v859, %v923
        %v956 = vsel %vm892, %v860, %v924
        %v957 = vsel %vm893, %v861, %v925
        %v958 = vsel %vm894, %v862, %v926
        %v959 = vsel %vm895, %v863, %v927
        %v960 = vsel %vm896, %v864, %v928
        %v961 = vsel %vm897, %v865, %v929
        %v962 = vsel %vm898, %v866, %v930
        %v963 = vsel %vm899, %v867, %v931
        %v964 = vsel %vm900, %v868, %v932
        %v965 = vsel %vm901, %v869, %v933
        %v966 = vsel %vm902, %v870, %v934
        %v967 = vsel %vm903, %v871, %v935
        %v968 = vsel %vm904, %v872, %v936
        %v969 = vsel %vm905, %v873, %v937
        %v970 = vsel %vm906, %v874, %v938
        %v971 = vsel %vm907, %v875, %v939
        %v972 = vsel %vm908, %v876, %v940
        %v973 = vsel %vm909, %v877, %v941
        %vm974 = vcmask 130048
        %975 = vst.msk [vmem:[%s306] sm:$0xff] %vm974, %v942
        %976 = vst.msk [vmem:[%s306 + $0x8] sm:$0xff] %vm974, %v943
        %977 = vst.msk [vmem:[%s306 + $0x10] sm:$0xff] %vm974, %v944
        %978 = vst.msk [vmem:[%s306 + $0x18] sm:$0xff] %vm974, %v945
        %979 = vst.msk [vmem:[%s306 + $0x20] sm:$0xff] %vm974, %v946
        %980 = vst.msk [vmem:[%s306 + $0x28] sm:$0xff] %vm974, %v947
        %981 = vst.msk [vmem:[%s306 + $0x30] sm:$0xff] %vm974, %v948
        %982 = vst.msk [vmem:[%s306 + $0x38] sm:$0xff] %vm974, %v949
        %983 = vst.msk [vmem:[%s306 + $0x40] sm:$0xff] %vm974, %v950
        %984 = vst.msk [vmem:[%s306 + $0x48] sm:$0xff] %vm974, %v951
        %985 = vst.msk [vmem:[%s306 + $0x50] sm:$0xff] %vm974, %v952
        %986 = vst.msk [vmem:[%s306 + $0x58] sm:$0xff] %vm974, %v953
        %987 = vst.msk [vmem:[%s306 + $0x60] sm:$0xff] %vm974, %v954
        %988 = vst.msk [vmem:[%s306 + $0x68] sm:$0xff] %vm974, %v955
        %989 = vst.msk [vmem:[%s306 + $0x70] sm:$0xff] %vm974, %v956
        %990 = vst.msk [vmem:[%s306 + $0x78] sm:$0xff] %vm974, %v957
        %991 = vst.msk [vmem:[%s306 + $0x80] sm:$0xff] %vm974, %v958
        %992 = vst.msk [vmem:[%s306 + $0x88] sm:$0xff] %vm974, %v959
        %993 = vst.msk [vmem:[%s306 + $0x90] sm:$0xff] %vm974, %v960
        %994 = vst.msk [vmem:[%s306 + $0x98] sm:$0xff] %vm974, %v961
        %995 = vst.msk [vmem:[%s306 + $0xa0] sm:$0xff] %vm974, %v962
        %996 = vst.msk [vmem:[%s306 + $0xa8] sm:$0xff] %vm974, %v963
        %997 = vst.msk [vmem:[%s306 + $0xb0] sm:$0xff] %vm974, %v964
        %998 = vst.msk [vmem:[%s306 + $0xb8] sm:$0xff] %vm974, %v965
        %999 = vst.msk [vmem:[%s306 + $0xc0] sm:$0xff] %vm974, %v966
        %1000 = vst.msk [vmem:[%s306 + $0xc8] sm:$0xff] %vm974, %v967
        %1001 = vst.msk [vmem:[%s306 + $0xd0] sm:$0xff] %vm974, %v968
        %1002 = vst.msk [vmem:[%s306 + $0xd8] sm:$0xff] %vm974, %v969
        %1003 = vst.msk [vmem:[%s306 + $0xe0] sm:$0xff] %vm974, %v970
        %1004 = vst.msk [vmem:[%s306 + $0xe8] sm:$0xff] %vm974, %v971
        %1005 = vst.msk [vmem:[%s306 + $0xf0] sm:$0xff] %vm974, %v972
        %1006 = vst.msk [vmem:[%s306 + $0xf8] sm:$0xff] %vm974, %v973
        %s1007 = sand.u32 %s187, 1
        %s1008 = scalar_lea.sflag [#allocation3], %s1007
        %s1009 = sand.u32 %s187, 1
        %s1010 = smul.addr %s1009, 256
        %s1011 = scalar_lea.vmem [#allocation2], %s1010
        // Predicated region
        $region45: #{bottleneck_forward.3} parent=43 // pred_check
          %p1012 = pneg %p197
        $region46: #{bottleneck_forward.3} parent=43 // pred_check_branch
          %1014 = sbr.rel (%p1012) target = $region48
        $region47: #{bottleneck_forward.3} parent=43 // pred_region
          %s1015 = smul.u32 32, %s25
          %s1017 = ssub.s32 4096, 4096
          %1018 = vsyncadd %s1008, %s1017
          %s1019 = smul.addr %s24, 32
          %s1020 = sadd.s32 %s1015, %s1019
          %s1021 = smul.addr %s1020, 128
          %s1022 = scalar_lea.hbm %s6, %s1021
          %s1023 = sshll.u32 %s1011, 4
          %s1024 = int_to_ptr.vmem [resolvable:$true] %s1023
          %1029 = dma.vmem_to_hbm [thread:$0]  %s1024, 4096, %s1022, %s1008, 128, 128, 8
        $region48: #{bottleneck_forward.3} parent=43 // pred_fallthru
          _
      $region44: #{bottleneck_forward.3} parent=5 // pred_fallthru
        _
      %p1030 = scmp.le.s32.totalorder 2, %s15
      // Predicated region
      $region49: #{bottleneck_forward.3} parent=5 // pred_check
        %p1031 = pneg %p1030
      $region50: #{bottleneck_forward.3} parent=5 // pred_check_branch
        %1033 = sbr.rel (%p1031) target = $region52
      $region51: #{bottleneck_forward.3} parent=5 // pred_region
        %s1034 = ssub.s32 %s15, 2
        // Predicated region
        $region53: #{bottleneck_forward.3} parent=51 // pred_check
          %p1035 = pneg %p203
        $region54: #{bottleneck_forward.3} parent=51 // pred_check_branch
          %1037 = sbr.rel (%p1035) target = $region56
        $region55: #{bottleneck_forward.3} parent=51 // pred_region
          %s1038 = sand.u32 %s188, 1
          %s1039 = scalar_lea.sflag [#allocation3], %s1038
          %s1040 = sand.u32 %s188, 1
          %s1041 = smul.addr %s1040, 256
          %s1042 = scalar_lea.vmem [#allocation2], %s1041
          %1043 = dma.done %s1039, 4096
        $region56: #{bottleneck_forward.3} parent=51 // pred_fallthru
          _
      $region52: #{bottleneck_forward.3} parent=5 // pred_fallthru
        _
    $region6: #{bottleneck_forward.3} parent=1 // loop_footer
      %s19 = sadd.s32 1, %s15
    $region7: #{bottleneck_forward.3} parent=1 // loop_footer_branch
      %14 = sbr.rel target = $region3
    $region8: #{bottleneck_forward.3} parent=1 // loop_exit
      _
    %1044 = vsyncpa [#allocation3], 1
    %s1045 = scalar_lea.sflag [#allocation3], 1
    %1046 = vsyncpa %s1045, 1

// kernel: bottleneck_forward.2
$region0: #{bottleneck_forward.2}
  #allocation0 [shape = 'u32[]', space=smem, size = 0x4, offset = 0x4, fixed_abs, tag = 'smem constant byte address 0x4 - core index']
  #allocation1 [shape = 'u32[144,128]{1,0:T(1,128)}', space=vmem, size = 0x12000, scoped, tag = 'internal scratch']
  #allocation2 [shape = 'bf16[18,18,4]{2,1,0:T(8,128)(2,1)}', space=vmem, size = 0x1b000, scoped, tag = 'scratch operand']
  #allocation3 [shape = 'bf16[256,36]{1,0:T(16,128)(2,1)}', space=vmem, size = 0x10000, scoped, tag = 'scratch operand']
  %s0 = inlined_call_operand.vmem [shape: bf16[2,16,16,16], index: 0, kind: input, shape index: {}]
  %s1 = inlined_call_operand.vmem [shape: bf16[16,4], index: 1, kind: input, shape index: {}]
  %s2 = inlined_call_operand.vmem [shape: f32[1,4], index: 2, kind: input, shape index: {}]
  %s3 = inlined_call_operand.vmem [shape: f32[1,4], index: 3, kind: input, shape index: {}]
  %s4 = inlined_call_operand.vmem [shape: bf16[36,4], index: 4, kind: input, shape index: {}]
  %s5 = inlined_call_operand.vmem [shape: f32[1,4], index: 5, kind: input, shape index: {}]
  %s6 = inlined_call_operand.vmem [shape: f32[1,4], index: 6, kind: input, shape index: {}]
  %s7 = inlined_call_operand.vmem [shape: f32[4,32], index: 7, kind: input, shape index: {}]
  %s8 = inlined_call_operand.vmem [shape: f32[1,32], index: 8, kind: input, shape index: {}]
  %s9 = inlined_call_operand.vmem [shape: f32[1,32], index: 9, kind: input, shape index: {}]
  %s10 = inlined_call_operand.vmem [shape: f32[32,4], index: 10, kind: input, shape index: {}]
  %s11 = inlined_call_operand.vmem [shape: f32[1,4], index: 11, kind: input, shape index: {}]
  %s12 = inlined_call_operand.vmem [shape: bf16[2,256,4], index: 12, kind: output, shape index: {0}]
  %s13 = inlined_call_operand.vmem [shape: f32[2,1,4], index: 13, kind: output, shape index: {1}]
  %14 = xla_tuple %s12, %s13
  %s15 = sld [smem:[#allocation0]]
  $region89: #{bottleneck_forward.2} parent=0
    _
  %s17 = ssub.s32 1, %s15
  %s18 = scalar_select 0, %s17, %s15
  loop: start=0, step=1, limit=4
  $region2: #{bottleneck_forward.2} parent=0 // loop_pre_header
    _
  $region3: #{bottleneck_forward.2} parent=0 // loop_header
    %s20 = sphi 0, %s24
    %p21 = scmp.ge.s32.totalorder %s20, 4
    %s30 = sphi 0, %s32
    %s33 = sphi 0, %s30
    %s34 = sphi 0, %s33
    %s50 = sphi 0, %s34
    %s54 = sphi 0, %s54
    %s56 = sphi 0, %s54
    %s57 = sphi 0, %s56
    %s71 = sphi 0, %s57
    %s75 = sphi 0, %s75
    %s77 = sphi 0, %s75
    %s78 = sphi 0, %s77
    %s92 = sphi 0, %s78
    %s96 = sphi 0, %s96
    %s98 = sphi 0, %s96
    %s99 = sphi 0, %s98
    %s113 = sphi 0, %s99
    %s117 = sphi 0, %s117
    %s119 = sphi 0, %s117
    %s120 = sphi 0, %s119
    %s134 = sphi 0, %s120
    %s138 = sphi 0, %s138
    %s140 = sphi 0, %s138
    %s141 = sphi 0, %s140
    %s155 = sphi 0, %s141
    %s159 = sphi 0, %s159
    %s161 = sphi 0, %s159
    %s162 = sphi 0, %s161
    %s176 = sphi 0, %s162
    %s180 = sphi 0, %s180
    %s182 = sphi 0, %s180
    %s183 = sphi 0, %s182
    %s197 = sphi 0, %s183
    %s201 = sphi 0, %s201
    %s203 = sphi 0, %s201
    %s204 = sphi 0, %s203
    %s218 = sphi 0, %s204
    %s222 = sphi 0, %s222
    %s224 = sphi 0, %s222
    %s225 = sphi 0, %s224
    %s239 = sphi 0, %s225
    %s243 = sphi 0, %s243
    %s245 = sphi 0, %s243
    %s246 = sphi 0, %s245
    %s260 = sphi 0, %s246
    %s264 = sphi 0, %s264
    %s266 = sphi 0, %s264
    %s267 = sphi 0, %s266
    %s281 = sphi 0, %s267
    %s287 = sphi 0, %s289
    %s290 = sphi 0, %s287
    %s291 = sphi 0, %s290
    %s307 = sphi 0, %s291
    %s313 = sphi 0, %s315
    %s316 = sphi 0, %s313
    %s317 = sphi 0, %s316
    %s333 = sphi 0, %s317
  $region4: #{bottleneck_forward.2} parent=0 // loop_header_branch
    %23 = sbr.rel (%p21) target = $region8
  $region5: #{bottleneck_forward.2} parent=0 // loop_body
    %s25 = ssub.s32 %s20, 1
    %s26 = ssub.s32 %s20, 2
    %s27 = sadd.s32 %s20, 1
    %s28 = ssub.s32 %s20, %s27
    %p29 = scmp.eq.s32.totalorder %s28, 0
    %s31 = sadd.s32 %s30, 1
    %s32 = scalar_select %p29, %s30, %s31
    %p35 = pneg %p29
    %p36 = scmp.eq.s32.totalorder %s20, 1
    %p37 = por %p35, %p36
    %p38 = scmp.ne.s32.totalorder %s30, %s33
    %p39 = scmp.eq.s32.totalorder %s20, 0
    %p40 = por %p38, %p39
    %p41 = scmp.ne.s32.totalorder %s30, %s33
    %p42 = scmp.eq.s32.totalorder %s25, 1
    %p43 = por %p41, %p42
    %p44 = scmp.ne.s32.totalorder %s33, %s34
    %p45 = scmp.eq.s32.totalorder %s25, 0
    %p46 = por %p44, %p45
    %p47 = scmp.ne.s32.totalorder %s33, %s34
    %p48 = scmp.eq.s32.totalorder %s26, 1
    %p49 = por %p47, %p48
    %p51 = scmp.ne.s32.totalorder %s34, %s50
    %p52 = scmp.eq.s32.totalorder %s26, 0
    %p53 = por %p51, %p52
    %s55 = sadd.s32 %s54, 1
    %p58 = scmp.eq.s32.totalorder %s20, 1
    %p59 = scmp.ne.s32.totalorder %s54, %s56
    %p60 = scmp.eq.s32.totalorder %s20, 0
    %p61 = por %p59, %p60
    %p62 = scmp.ne.s32.totalorder %s54, %s56
    %p63 = scmp.eq.s32.totalorder %s25, 1
    %p64 = por %p62, %p63
    %p65 = scmp.ne.s32.totalorder %s56, %s57
    %p66 = scmp.eq.s32.totalorder %s25, 0
    %p67 = por %p65, %p66
    %p68 = scmp.ne.s32.totalorder %s56, %s57
    %p69 = scmp.eq.s32.totalorder %s26, 1
    %p70 = por %p68, %p69
    %p72 = scmp.ne.s32.totalorder %s57, %s71
    %p73 = scmp.eq.s32.totalorder %s26, 0
    %p74 = por %p72, %p73
    %s76 = sadd.s32 %s75, 1
    %p79 = scmp.eq.s32.totalorder %s20, 1
    %p80 = scmp.ne.s32.totalorder %s75, %s77
    %p81 = scmp.eq.s32.totalorder %s20, 0
    %p82 = por %p80, %p81
    %p83 = scmp.ne.s32.totalorder %s75, %s77
    %p84 = scmp.eq.s32.totalorder %s25, 1
    %p85 = por %p83, %p84
    %p86 = scmp.ne.s32.totalorder %s77, %s78
    %p87 = scmp.eq.s32.totalorder %s25, 0
    %p88 = por %p86, %p87
    %p89 = scmp.ne.s32.totalorder %s77, %s78
    %p90 = scmp.eq.s32.totalorder %s26, 1
    %p91 = por %p89, %p90
    %p93 = scmp.ne.s32.totalorder %s78, %s92
    %p94 = scmp.eq.s32.totalorder %s26, 0
    %p95 = por %p93, %p94
    %s97 = sadd.s32 %s96, 1
    %p100 = scmp.eq.s32.totalorder %s20, 1
    %p101 = scmp.ne.s32.totalorder %s96, %s98
    %p102 = scmp.eq.s32.totalorder %s20, 0
    %p103 = por %p101, %p102
    %p104 = scmp.ne.s32.totalorder %s96, %s98
    %p105 = scmp.eq.s32.totalorder %s25, 1
    %p106 = por %p104, %p105
    %p107 = scmp.ne.s32.totalorder %s98, %s99
    %p108 = scmp.eq.s32.totalorder %s25, 0
    %p109 = por %p107, %p108
    %p110 = scmp.ne.s32.totalorder %s98, %s99
    %p111 = scmp.eq.s32.totalorder %s26, 1
    %p112 = por %p110, %p111
    %p114 = scmp.ne.s32.totalorder %s99, %s113
    %p115 = scmp.eq.s32.totalorder %s26, 0
    %p116 = por %p114, %p115
    %s118 = sadd.s32 %s117, 1
    %p121 = scmp.eq.s32.totalorder %s20, 1
    %p122 = scmp.ne.s32.totalorder %s117, %s119
    %p123 = scmp.eq.s32.totalorder %s20, 0
    %p124 = por %p122, %p123
    %p125 = scmp.ne.s32.totalorder %s117, %s119
    %p126 = scmp.eq.s32.totalorder %s25, 1
    %p127 = por %p125, %p126
    %p128 = scmp.ne.s32.totalorder %s119, %s120
    %p129 = scmp.eq.s32.totalorder %s25, 0
    %p130 = por %p128, %p129
    %p131 = scmp.ne.s32.totalorder %s119, %s120
    %p132 = scmp.eq.s32.totalorder %s26, 1
    %p133 = por %p131, %p132
    %p135 = scmp.ne.s32.totalorder %s120, %s134
    %p136 = scmp.eq.s32.totalorder %s26, 0
    %p137 = por %p135, %p136
    %s139 = sadd.s32 %s138, 1
    %p142 = scmp.eq.s32.totalorder %s20, 1
    %p143 = scmp.ne.s32.totalorder %s138, %s140
    %p144 = scmp.eq.s32.totalorder %s20, 0
    %p145 = por %p143, %p144
    %p146 = scmp.ne.s32.totalorder %s138, %s140
    %p147 = scmp.eq.s32.totalorder %s25, 1
    %p148 = por %p146, %p147
    %p149 = scmp.ne.s32.totalorder %s140, %s141
    %p150 = scmp.eq.s32.totalorder %s25, 0
    %p151 = por %p149, %p150
    %p152 = scmp.ne.s32.totalorder %s140, %s141
    %p153 = scmp.eq.s32.totalorder %s26, 1
    %p154 = por %p152, %p153
    %p156 = scmp.ne.s32.totalorder %s141, %s155
    %p157 = scmp.eq.s32.totalorder %s26, 0
    %p158 = por %p156, %p157
    %s160 = sadd.s32 %s159, 1
    %p163 = scmp.eq.s32.totalorder %s20, 1
    %p164 = scmp.ne.s32.totalorder %s159, %s161
    %p165 = scmp.eq.s32.totalorder %s20, 0
    %p166 = por %p164, %p165
    %p167 = scmp.ne.s32.totalorder %s159, %s161
    %p168 = scmp.eq.s32.totalorder %s25, 1
    %p169 = por %p167, %p168
    %p170 = scmp.ne.s32.totalorder %s161, %s162
    %p171 = scmp.eq.s32.totalorder %s25, 0
    %p172 = por %p170, %p171
    %p173 = scmp.ne.s32.totalorder %s161, %s162
    %p174 = scmp.eq.s32.totalorder %s26, 1
    %p175 = por %p173, %p174
    %p177 = scmp.ne.s32.totalorder %s162, %s176
    %p178 = scmp.eq.s32.totalorder %s26, 0
    %p179 = por %p177, %p178
    %s181 = sadd.s32 %s180, 1
    %p184 = scmp.eq.s32.totalorder %s20, 1
    %p185 = scmp.ne.s32.totalorder %s180, %s182
    %p186 = scmp.eq.s32.totalorder %s20, 0
    %p187 = por %p185, %p186
    %p188 = scmp.ne.s32.totalorder %s180, %s182
    %p189 = scmp.eq.s32.totalorder %s25, 1
    %p190 = por %p188, %p189
    %p191 = scmp.ne.s32.totalorder %s182, %s183
    %p192 = scmp.eq.s32.totalorder %s25, 0
    %p193 = por %p191, %p192
    %p194 = scmp.ne.s32.totalorder %s182, %s183
    %p195 = scmp.eq.s32.totalorder %s26, 1
    %p196 = por %p194, %p195
    %p198 = scmp.ne.s32.totalorder %s183, %s197
    %p199 = scmp.eq.s32.totalorder %s26, 0
    %p200 = por %p198, %p199
    %s202 = sadd.s32 %s201, 1
    %p205 = scmp.eq.s32.totalorder %s20, 1
    %p206 = scmp.ne.s32.totalorder %s201, %s203
    %p207 = scmp.eq.s32.totalorder %s20, 0
    %p208 = por %p206, %p207
    %p209 = scmp.ne.s32.totalorder %s201, %s203
    %p210 = scmp.eq.s32.totalorder %s25, 1
    %p211 = por %p209, %p210
    %p212 = scmp.ne.s32.totalorder %s203, %s204
    %p213 = scmp.eq.s32.totalorder %s25, 0
    %p214 = por %p212, %p213
    %p215 = scmp.ne.s32.totalorder %s203, %s204
    %p216 = scmp.eq.s32.totalorder %s26, 1
    %p217 = por %p215, %p216
    %p219 = scmp.ne.s32.totalorder %s204, %s218
    %p220 = scmp.eq.s32.totalorder %s26, 0
    %p221 = por %p219, %p220
    %s223 = sadd.s32 %s222, 1
    %p226 = scmp.eq.s32.totalorder %s20, 1
    %p227 = scmp.ne.s32.totalorder %s222, %s224
    %p228 = scmp.eq.s32.totalorder %s20, 0
    %p229 = por %p227, %p228
    %p230 = scmp.ne.s32.totalorder %s222, %s224
    %p231 = scmp.eq.s32.totalorder %s25, 1
    %p232 = por %p230, %p231
    %p233 = scmp.ne.s32.totalorder %s224, %s225
    %p234 = scmp.eq.s32.totalorder %s25, 0
    %p235 = por %p233, %p234
    %p236 = scmp.ne.s32.totalorder %s224, %s225
    %p237 = scmp.eq.s32.totalorder %s26, 1
    %p238 = por %p236, %p237
    %p240 = scmp.ne.s32.totalorder %s225, %s239
    %p241 = scmp.eq.s32.totalorder %s26, 0
    %p242 = por %p240, %p241
    %s244 = sadd.s32 %s243, 1
    %p247 = scmp.eq.s32.totalorder %s20, 1
    %p248 = scmp.ne.s32.totalorder %s243, %s245
    %p249 = scmp.eq.s32.totalorder %s20, 0
    %p250 = por %p248, %p249
    %p251 = scmp.ne.s32.totalorder %s243, %s245
    %p252 = scmp.eq.s32.totalorder %s25, 1
    %p253 = por %p251, %p252
    %p254 = scmp.ne.s32.totalorder %s245, %s246
    %p255 = scmp.eq.s32.totalorder %s25, 0
    %p256 = por %p254, %p255
    %p257 = scmp.ne.s32.totalorder %s245, %s246
    %p258 = scmp.eq.s32.totalorder %s26, 1
    %p259 = por %p257, %p258
    %p261 = scmp.ne.s32.totalorder %s246, %s260
    %p262 = scmp.eq.s32.totalorder %s26, 0
    %p263 = por %p261, %p262
    %s265 = sadd.s32 %s264, 1
    %p268 = scmp.eq.s32.totalorder %s20, 1
    %p269 = scmp.ne.s32.totalorder %s264, %s266
    %p270 = scmp.eq.s32.totalorder %s20, 0
    %p271 = por %p269, %p270
    %p272 = scmp.ne.s32.totalorder %s264, %s266
    %p273 = scmp.eq.s32.totalorder %s25, 1
    %p274 = por %p272, %p273
    %p275 = scmp.ne.s32.totalorder %s266, %s267
    %p276 = scmp.eq.s32.totalorder %s25, 0
    %p277 = por %p275, %p276
    %p278 = scmp.ne.s32.totalorder %s266, %s267
    %p279 = scmp.eq.s32.totalorder %s26, 1
    %p280 = por %p278, %p279
    %p282 = scmp.ne.s32.totalorder %s267, %s281
    %p283 = scmp.eq.s32.totalorder %s26, 0
    %p284 = por %p282, %p283
    %s285 = ssub.s32 %s20, %s27
    %p286 = scmp.eq.s32.totalorder %s285, 0
    %s288 = sadd.s32 %s287, 1
    %s289 = scalar_select %p286, %s287, %s288
    %p292 = pneg %p286
    %p293 = scmp.eq.s32.totalorder %s20, 1
    %p294 = por %p292, %p293
    %p295 = scmp.ne.s32.totalorder %s287, %s290
    %p296 = scmp.eq.s32.totalorder %s20, 0
    %p297 = por %p295, %p296
    %p298 = scmp.ne.s32.totalorder %s287, %s290
    %p299 = scmp.eq.s32.totalorder %s25, 1
    %p300 = por %p298, %p299
    %p301 = scmp.ne.s32.totalorder %s290, %s291
    %p302 = scmp.eq.s32.totalorder %s25, 0
    %p303 = por %p301, %p302
    %p304 = scmp.ne.s32.totalorder %s290, %s291
    %p305 = scmp.eq.s32.totalorder %s26, 1
    %p306 = por %p304, %p305
    %p308 = scmp.ne.s32.totalorder %s291, %s307
    %p309 = scmp.eq.s32.totalorder %s26, 0
    %p310 = por %p308, %p309
    %s311 = ssub.s32 %s20, %s27
    %p312 = scmp.eq.s32.totalorder %s311, 0
    %s314 = sadd.s32 %s313, 1
    %s315 = scalar_select %p312, %s313, %s314
    %p318 = pneg %p312
    %p319 = scmp.eq.s32.totalorder %s20, 1
    %p320 = por %p318, %p319
    %p321 = scmp.ne.s32.totalorder %s313, %s316
    %p322 = scmp.eq.s32.totalorder %s20, 0
    %p323 = por %p321, %p322
    %p324 = scmp.ne.s32.totalorder %s313, %s316
    %p325 = scmp.eq.s32.totalorder %s25, 1
    %p326 = por %p324, %p325
    %p327 = scmp.ne.s32.totalorder %s316, %s317
    %p328 = scmp.eq.s32.totalorder %s25, 0
    %p329 = por %p327, %p328
    %p330 = scmp.ne.s32.totalorder %s316, %s317
    %p331 = scmp.eq.s32.totalorder %s26, 1
    %p332 = por %p330, %p331
    %p334 = scmp.ne.s32.totalorder %s317, %s333
    %p335 = scmp.eq.s32.totalorder %s26, 0
    %p336 = por %p334, %p335
    %p337 = scmp.le.s32.totalorder 1, %s20
    %p338 = scmp.lt.s32.totalorder %s20, 3
    %p339 = pnand %p337, %p338
    %p340 = pneg %p339
    // Predicated region
    $region9: #{bottleneck_forward.2} parent=5 // pred_check
      _
    $region10: #{bottleneck_forward.2} parent=5 // pred_check_branch
      %342 = sbr.rel (%p339) target = $region12
    $region11: #{bottleneck_forward.2} parent=5 // pred_region
      %s343 = ssub.s32 %s20, 1
      // Predicated region
      $region13: #{bottleneck_forward.2} parent=11 // pred_check
        %p344 = pneg %p67
      $region14: #{bottleneck_forward.2} parent=11 // pred_check_branch
        %346 = sbr.rel (%p344) target = $region16
      $region15: #{bottleneck_forward.2} parent=11 // pred_region
        _
      $region16: #{bottleneck_forward.2} parent=11 // pred_fallthru
        _
      // Predicated region
      $region17: #{bottleneck_forward.2} parent=11 // pred_check
        %p347 = pneg %p88
      $region18: #{bottleneck_forward.2} parent=11 // pred_check_branch
        %349 = sbr.rel (%p347) target = $region20
      $region19: #{bottleneck_forward.2} parent=11 // pred_region
        _
      $region20: #{bottleneck_forward.2} parent=11 // pred_fallthru
        _
      // Predicated region
      $region21: #{bottleneck_forward.2} parent=11 // pred_check
        %p350 = pneg %p109
      $region22: #{bottleneck_forward.2} parent=11 // pred_check_branch
        %352 = sbr.rel (%p350) target = $region24
      $region23: #{bottleneck_forward.2} parent=11 // pred_region
        _
      $region24: #{bottleneck_forward.2} parent=11 // pred_fallthru
        _
      // Predicated region
      $region25: #{bottleneck_forward.2} parent=11 // pred_check
        %p353 = pneg %p130
      $region26: #{bottleneck_forward.2} parent=11 // pred_check_branch
        %355 = sbr.rel (%p353) target = $region28
      $region27: #{bottleneck_forward.2} parent=11 // pred_region
        _
      $region28: #{bottleneck_forward.2} parent=11 // pred_fallthru
        _
      // Predicated region
      $region29: #{bottleneck_forward.2} parent=11 // pred_check
        %p356 = pneg %p151
      $region30: #{bottleneck_forward.2} parent=11 // pred_check_branch
        %358 = sbr.rel (%p356) target = $region32
      $region31: #{bottleneck_forward.2} parent=11 // pred_region
        _
      $region32: #{bottleneck_forward.2} parent=11 // pred_fallthru
        _
      // Predicated region
      $region33: #{bottleneck_forward.2} parent=11 // pred_check
        %p359 = pneg %p172
      $region34: #{bottleneck_forward.2} parent=11 // pred_check_branch
        %361 = sbr.rel (%p359) target = $region36
      $region35: #{bottleneck_forward.2} parent=11 // pred_region
        _
      $region36: #{bottleneck_forward.2} parent=11 // pred_fallthru
        _
      // Predicated region
      $region37: #{bottleneck_forward.2} parent=11 // pred_check
        %p362 = pneg %p193
      $region38: #{bottleneck_forward.2} parent=11 // pred_check_branch
        %364 = sbr.rel (%p362) target = $region40
      $region39: #{bottleneck_forward.2} parent=11 // pred_region
        _
      $region40: #{bottleneck_forward.2} parent=11 // pred_fallthru
        _
      // Predicated region
      $region41: #{bottleneck_forward.2} parent=11 // pred_check
        %p365 = pneg %p214
      $region42: #{bottleneck_forward.2} parent=11 // pred_check_branch
        %367 = sbr.rel (%p365) target = $region44
      $region43: #{bottleneck_forward.2} parent=11 // pred_region
        _
      $region44: #{bottleneck_forward.2} parent=11 // pred_fallthru
        _
      // Predicated region
      $region45: #{bottleneck_forward.2} parent=11 // pred_check
        %p368 = pneg %p235
      $region46: #{bottleneck_forward.2} parent=11 // pred_check_branch
        %370 = sbr.rel (%p368) target = $region48
      $region47: #{bottleneck_forward.2} parent=11 // pred_region
        _
      $region48: #{bottleneck_forward.2} parent=11 // pred_fallthru
        _
      // Predicated region
      $region49: #{bottleneck_forward.2} parent=11 // pred_check
        %p371 = pneg %p256
      $region50: #{bottleneck_forward.2} parent=11 // pred_check_branch
        %373 = sbr.rel (%p371) target = $region52
      $region51: #{bottleneck_forward.2} parent=11 // pred_region
        _
      $region52: #{bottleneck_forward.2} parent=11 // pred_fallthru
        _
      // Predicated region
      $region53: #{bottleneck_forward.2} parent=11 // pred_check
        %p374 = pneg %p277
      $region54: #{bottleneck_forward.2} parent=11 // pred_check_branch
        %376 = sbr.rel (%p374) target = $region56
      $region55: #{bottleneck_forward.2} parent=11 // pred_region
        _
      $region56: #{bottleneck_forward.2} parent=11 // pred_fallthru
        _
    $region12: #{bottleneck_forward.2} parent=5 // pred_fallthru
      _
    %p377 = scmp.lt.s32.totalorder %s20, 2
    // Predicated region
    $region57: #{bottleneck_forward.2} parent=5 // pred_check
      %p378 = pneg %p377
    $region58: #{bottleneck_forward.2} parent=5 // pred_check_branch
      %380 = sbr.rel (%p378) target = $region60
    $region59: #{bottleneck_forward.2} parent=5 // pred_region
      // Predicated region
      $region61: #{bottleneck_forward.2} parent=59 // pred_check
        %p381 = pneg %p40
      $region62: #{bottleneck_forward.2} parent=59 // pred_check_branch
        %383 = sbr.rel (%p381) target = $region64
      $region63: #{bottleneck_forward.2} parent=59 // pred_region
        %p384 = scmp.lt.s32.totalorder %s20, 1
        %s385 = scalar_select %p384, %s20, 1
        %s386 = smul.addr %s385, 32
        %s387 = smul.addr %s386, 4
        %s388 = scalar_lea.vmem %s0, %s387
      $region64: #{bottleneck_forward.2} parent=59 // pred_fallthru
        _
    $region60: #{bottleneck_forward.2} parent=5 // pred_fallthru
      _
    %p389 = scmp.le.s32.totalorder 1, %s20
    %p390 = scmp.lt.s32.totalorder %s20, 3
    %p391 = pnand %p389, %p390
    %p392 = pneg %p391
    // Predicated region
    $region65: #{bottleneck_forward.2} parent=5 // pred_check
      _
    $region66: #{bottleneck_forward.2} parent=5 // pred_check_branch
      %394 = sbr.rel (%p391) target = $region68
    $region67: #{bottleneck_forward.2} parent=5 // pred_region
      %s395 = ssub.s32 %s20, 1
      %p396 = scmp.lt.s32.totalorder %s25, 1
      %s397 = scalar_select %p396, %s25, 1
      %s398 = smul.addr %s397, 32
      %s399 = smul.addr %s398, 4
      %s400 = scalar_lea.vmem %s0, %s399
      %p401 = pneg %p46
      %p402 = pneg %p43
      %p403 = pneg %p67
      %p404 = pneg %p64
      %p405 = pneg %p88
      %p406 = pneg %p85
      %p407 = pneg %p109
      %p408 = pneg %p106
      %p409 = pneg %p130
      %p410 = pneg %p127
      %p411 = pneg %p151
      %p412 = pneg %p148
      %p413 = pneg %p172
      %p414 = pneg %p169
      %p415 = pneg %p193
      %p416 = pneg %p190
      %p417 = pneg %p214
      %p418 = pneg %p211
      %p419 = pneg %p235
      %p420 = pneg %p232
      %p421 = pneg %p256
      %p422 = pneg %p253
      %p423 = pneg %p277
      %p424 = pneg %p274
      %p425 = pneg %p303
      %p426 = pneg %p300
      %p427 = scmp.lt.s32.totalorder %s25, 1
      %s428 = scalar_select %p427, %s25, 1
      %s429 = smul.addr %s428, 32
      %s430 = smul.addr %s429, 4
      %s431 = scalar_lea.vmem %s12, %s430
      %p432 = pneg %p329
      %p433 = pneg %p326
      %p434 = scmp.lt.s32.totalorder %s25, 1
      %s435 = scalar_select %p434, %s25, 1
      %s436 = scalar_lea.vmem %s13, %s435
      %p437 = scmp.lt.s32.totalorder %s25, 1
      %s438 = scalar_select %p437, %s25, 1
      %s439 = smul.addr %s438, 32
      %s440 = smul.addr %s439, 4
      %s441 = scalar_lea.vmem %s0, %s440
      %p442 = scmp.lt.s32.totalorder %s25, 1
      %s443 = scalar_select %p442, %s25, 1
      %s444 = smul.addr %s443, 32
      %s445 = smul.addr %s444, 4
      %s446 = scalar_lea.vmem %s12, %s445
      %p447 = scmp.lt.s32.totalorder %s25, 1
      %s448 = scalar_select %p447, %s25, 1
      %s449 = scalar_lea.vmem %s13, %s448
      %v451 = vld [vmem:[%s441] sm:$0xf]
      %v452 = vld [vmem:[%s441 + $0x4] sm:$0xf]
      %v453 = vld [vmem:[%s441 + $0x8] sm:$0xf]
      %v454 = vld [vmem:[%s441 + $0xc] sm:$0xf]
      %v455 = vld [vmem:[%s441 + $0x10] sm:$0xf]
      %v456 = vld [vmem:[%s441 + $0x14] sm:$0xf]
      %v457 = vld [vmem:[%s441 + $0x18] sm:$0xf]
      %v458 = vld [vmem:[%s441 + $0x1c] sm:$0xf]
      %v459 = vld [vmem:[%s441 + $0x20] sm:$0xf]
      %v460 = vld [vmem:[%s441 + $0x24] sm:$0xf]
      %v461 = vld [vmem:[%s441 + $0x28] sm:$0xf]
      %v462 = vld [vmem:[%s441 + $0x2c] sm:$0xf]
      %v463 = vld [vmem:[%s441 + $0x30] sm:$0xf]
      %v464 = vld [vmem:[%s441 + $0x34] sm:$0xf]
      %v465 = vld [vmem:[%s441 + $0x38] sm:$0xf]
      %v466 = vld [vmem:[%s441 + $0x3c] sm:$0xf]
      %v467 = vld [vmem:[%s441 + $0x40] sm:$0xf]
      %v468 = vld [vmem:[%s441 + $0x44] sm:$0xf]
      %v469 = vld [vmem:[%s441 + $0x48] sm:$0xf]
      %v470 = vld [vmem:[%s441 + $0x4c] sm:$0xf]
      %v471 = vld [vmem:[%s441 + $0x50] sm:$0xf]
      %v472 = vld [vmem:[%s441 + $0x54] sm:$0xf]
      %v473 = vld [vmem:[%s441 + $0x58] sm:$0xf]
      %v474 = vld [vmem:[%s441 + $0x5c] sm:$0xf]
      %v475 = vld [vmem:[%s441 + $0x60] sm:$0xf]
      %v476 = vld [vmem:[%s441 + $0x64] sm:$0xf]
      %v477 = vld [vmem:[%s441 + $0x68] sm:$0xf]
      %v478 = vld [vmem:[%s441 + $0x6c] sm:$0xf]
      %v479 = vld [vmem:[%s441 + $0x70] sm:$0xf]
      %v480 = vld [vmem:[%s441 + $0x74] sm:$0xf]
      %v481 = vld [vmem:[%s441 + $0x78] sm:$0xf]
      %v482 = vld [vmem:[%s441 + $0x7c] sm:$0xf]
      %v483 = vld [vmem:[%s1] sm:$0xf]
      %v484 = vld [vmem:[%s1 + $0x4] sm:$0xf]
      %v517 = vunpack.c.l.b16 %v451
      %v518 = vunpack.c.l.b16 %v452
      %v519 = vunpack.c.l.b16 %v453
      %v520 = vunpack.c.l.b16 %v454
      %v521 = vunpack.c.l.b16 %v455
      %v522 = vunpack.c.l.b16 %v456
      %v523 = vunpack.c.l.b16 %v457
      %v524 = vunpack.c.l.b16 %v458
      %v525 = vunpack.c.l.b16 %v459
      %v526 = vunpack.c.l.b16 %v460
      %v527 = vunpack.c.l.b16 %v461
      %v528 = vunpack.c.l.b16 %v462
      %v529 = vunpack.c.l.b16 %v463
      %v530 = vunpack.c.l.b16 %v464
      %v531 = vunpack.c.l.b16 %v465
      %v532 = vunpack.c.l.b16 %v466
      %v533 = vunpack.c.l.b16 %v467
      %v534 = vunpack.c.l.b16 %v468
      %v535 = vunpack.c.l.b16 %v469
      %v536 = vunpack.c.l.b16 %v470
      %v537 = vunpack.c.l.b16 %v471
      %v538 = vunpack.c.l.b16 %v472
      %v539 = vunpack.c.l.b16 %v473
      %v540 = vunpack.c.l.b16 %v474
      %v541 = vunpack.c.l.b16 %v475
      %v542 = vunpack.c.l.b16 %v476
      %v543 = vunpack.c.l.b16 %v477
      %v544 = vunpack.c.l.b16 %v478
      %v545 = vunpack.c.l.b16 %v479
      %v546 = vunpack.c.l.b16 %v480
      %v547 = vunpack.c.l.b16 %v481
      %v548 = vunpack.c.l.b16 %v482
      %v549 = vpack.c.b16 %v518, %v517
      %v550 = vpack.c.b16 %v520, %v519
      %v551 = vpack.c.b16 %v522, %v521
      %v552 = vpack.c.b16 %v524, %v523
      %v553 = vpack.c.b16 %v526, %v525
      %v554 = vpack.c.b16 %v528, %v527
      %v555 = vpack.c.b16 %v530, %v529
      %v556 = vpack.c.b16 %v532, %v531
      %v557 = vpack.c.b16 %v534, %v533
      %v558 = vpack.c.b16 %v536, %v535
      %v559 = vpack.c.b16 %v538, %v537
      %v560 = vpack.c.b16 %v540, %v539
      %v561 = vpack.c.b16 %v542, %v541
      %v562 = vpack.c.b16 %v544, %v543
      %v563 = vpack.c.b16 %v546, %v545
      %v564 = vpack.c.b16 %v548, %v547
      %v567 = vunpack.c.l.b16 %v483
      %v568 = vunpack.c.l.b16 %v484
      %v569 = vpack.c.b16 %v568, %v567
      %vm571 = vcmask 130048
      %v573 = vsel %vm571, %v549, 0
      %v576 = vsel %vm571, %v550, 0
      %v579 = vsel %vm571, %v551, 0
      %v582 = vsel %vm571, %v552, 0
      %v585 = vsel %vm571, %v553, 0
      %v588 = vsel %vm571, %v554, 0
      %v591 = vsel %vm571, %v555, 0
      %v594 = vsel %vm571, %v556, 0
      %v597 = vsel %vm571, %v557, 0
      %v600 = vsel %vm571, %v558, 0
      %v603 = vsel %vm571, %v559, 0
      %v606 = vsel %vm571, %v560, 0
      %v609 = vsel %vm571, %v561, 0
      %v612 = vsel %vm571, %v562, 0
      %v615 = vsel %vm571, %v563, 0
      %v618 = vsel %vm571, %v564, 0
      %620 = vmatprep.subr.bf16.mxu0 0
      %621 = vmatpush1.bf16.msra.mxu0 %v569
      %622 = vmatprep.subr.bf16.mxu0 0
      %623 = vmatpush1.bf16.msra.mxu0 0
      %624 = vmatprep.subr.bf16.mxu0 0
      %625 = vmatpush1.bf16.msra.mxu0 0
      %626 = vmatprep.subr.bf16.mxu0 0
      %627 = vmatpush1.bf16.msra.mxu0 0
      %628 = vmatprep.subr.bf16.mxu0 0
      %629 = vmatpush1.bf16.msra.mxu0 0
      %630 = vmatprep.subr.bf16.mxu0 0
      %631 = vmatpush1.bf16.msra.mxu0 0
      %632 = vmatprep.subr.bf16.mxu0 0
      %633 = vmatpush1.bf16.msra.mxu0 0
      %634 = vmatprep.subr.bf16.mxu0 0
      %635 = vmatpush1.bf16.msra.mxu0 0
      %636 = vmatprep.subr.bf16.mxu0 0
      %637 = vmatpush1.bf16.msra.mxu0 0
      %638 = vmatprep.subr.bf16.mxu0 0
      %639 = vmatpush1.bf16.msra.mxu0 0
      %640 = vmatprep.subr.bf16.mxu0 0
      %641 = vmatpush1.bf16.msra.mxu0 0
      %642 = vmatprep.subr.bf16.mxu0 0
      %643 = vmatpush1.bf16.msra.mxu0 0
      %644 = vmatprep.subr.bf16.mxu0 0
      %645 = vmatpush1.bf16.msra.mxu0 0
      %646 = vmatprep.subr.bf16.mxu0 0
      %647 = vmatpush1.bf16.msra.mxu0 0
      %648 = vmatprep.subr.bf16.mxu0 0
      %649 = vmatpush1.bf16.msra.mxu0 0
      %650 = vmatprep.subr.bf16.mxu0 0
      %651 = vmatpush1.bf16.msra.mxu0 0
      %652 = vmatprep.mubr.bf16.mxu0 0
      %653 = vmatmul.mubr.bf16.gmra.mrb[0].mxu0 %v573
      %v654 = vpop.f32.mrb[0].mxu0
      %v655 = vadd.f32 0.0, %v654
      %v656 = vpop.f32.mrb[0].mxu0
      %v657 = vpop.f32.mrb[0].mxu0
      %v658 = vadd.f32 0.0, %v657
      %v659 = vpop.f32.mrb[0].mxu0
      %660 = vmatprep.mubr.bf16.mxu0 0
      %661 = vmatmul.mubr.bf16.gmra.mrb[0].mxu0 %v576
      %v662 = vpop.f32.mrb[0].mxu0
      %v663 = vadd.f32 0.0, %v662
      %v664 = vpop.f32.mrb[0].mxu0
      %v665 = vpop.f32.mrb[0].mxu0
      %v666 = vadd.f32 0.0, %v665
      %v667 = vpop.f32.mrb[0].mxu0
      %668 = vmatprep.mubr.bf16.mxu0 0
      %669 = vmatmul.mubr.bf16.gmra.mrb[0].mxu0 %v579
      %v670 = vpop.f32.mrb[0].mxu0
      %v671 = vadd.f32 0.0, %v670
      %v672 = vpop.f32.mrb[0].mxu0
      %v673 = vpop.f32.mrb[0].mxu0
      %v674 = vadd.f32 0.0, %v673
      %v675 = vpop.f32.mrb[0].mxu0
      %676 = vmatprep.mubr.bf16.mxu0 0
      %677 = vmatmul.mubr.bf16.gmra.mrb[0].mxu0 %v582
      %v678 = vpop.f32.mrb[0].mxu0
      %v679 = vadd.f32 0.0, %v678
      %v680 = vpop.f32.mrb[0].mxu0
      %v681 = vpop.f32.mrb[0].mxu0
      %v682 = vadd.f32 0.0, %v681
      %v683 = vpop.f32.mrb[0].mxu0
      %684 = vmatprep.mubr.bf16.mxu0 0
      %685 = vmatmul.mubr.bf16.gmra.mrb[0].mxu0 %v585
      %v686 = vpop.f32.mrb[0].mxu0
      %v687 = vadd.f32 0.0, %v686
      %v688 = vpop.f32.mrb[0].mxu0
      %v689 = vpop.f32.mrb[0].mxu0
      %v690 = vadd.f32 0.0, %v689
      %v691 = vpop.f32.mrb[0].mxu0
      %692 = vmatprep.mubr.bf16.mxu0 0
      %693 = vmatmul.mubr.bf16.gmra.mrb[0].mxu0 %v588
      %v694 = vpop.f32.mrb[0].mxu0
      %v695 = vadd.f32 0.0, %v694
      %v696 = vpop.f32.mrb[0].mxu0
      %v697 = vpop.f32.mrb[0].mxu0
      %v698 = vadd.f32 0.0, %v697
      %v699 = vpop.f32.mrb[0].mxu0
      %700 = vmatprep.mubr.bf16.mxu0 0
      %701 = vmatmul.mubr.bf16.gmra.mrb[0].mxu0 %v591
      %v702 = vpop.f32.mrb[0].mxu0
      %v703 = vadd.f32 0.0, %v702
      %v704 = vpop.f32.mrb[0].mxu0
      %v705 = vpop.f32.mrb[0].mxu0
      %v706 = vadd.f32 0.0, %v705
      %v707 = vpop.f32.mrb[0].mxu0
      %708 = vmatprep.mubr.bf16.mxu0 0
      %709 = vmatmul.mubr.bf16.gmra.mrb[0].mxu0 %v594
      %v710 = vpop.f32.mrb[0].mxu0
      %v711 = vadd.f32 0.0, %v710
      %v712 = vpop.f32.mrb[0].mxu0
      %v713 = vpop.f32.mrb[0].mxu0
      %v714 = vadd.f32 0.0, %v713
      %v715 = vpop.f32.mrb[0].mxu0
      %716 = vmatprep.mubr.bf16.mxu0 0
      %717 = vmatmul.mubr.bf16.gmra.mrb[0].mxu0 %v597
      %v718 = vpop.f32.mrb[0].mxu0
      %v719 = vadd.f32 0.0, %v718
      %v720 = vpop.f32.mrb[0].mxu0
      %v721 = vpop.f32.mrb[0].mxu0
      %v722 = vadd.f32 0.0, %v721
      %v723 = vpop.f32.mrb[0].mxu0
      %724 = vmatprep.mubr.bf16.mxu0 0
      %725 = vmatmul.mubr.bf16.gmra.mrb[0].mxu0 %v600
      %v726 = vpop.f32.mrb[0].mxu0
      %v727 = vadd.f32 0.0, %v726
      %v728 = vpop.f32.mrb[0].mxu0
      %v729 = vpop.f32.mrb[0].mxu0
      %v730 = vadd.f32 0.0, %v729
      %v731 = vpop.f32.mrb[0].mxu0
      %732 = vmatprep.mubr.bf16.mxu0 0
      %733 = vmatmul.mubr.bf16.gmra.mrb[0].mxu0 %v603
      %v734 = vpop.f32.mrb[0].mxu0
      %v735 = vadd.f32 0.0, %v734
      %v736 = vpop.f32.mrb[0].mxu0
      %v737 = vpop.f32.mrb[0].mxu0
      %v738 = vadd.f32 0.0, %v737
      %v739 = vpop.f32.mrb[0].mxu0
      %740 = vmatprep.mubr.bf16.mxu0 0
      %741 = vmatmul.mubr.bf16.gmra.mrb[0].mxu0 %v606
      %v742 = vpop.f32.mrb[0].mxu0
      %v743 = vadd.f32 0.0, %v742
      %v744 = vpop.f32.mrb[0].mxu0
      %v745 = vpop.f32.mrb[0].mxu0
      %v746 = vadd.f32 0.0, %v745
      %v747 = vpop.f32.mrb[0].mxu0
      %748 = vmatprep.mubr.bf16.mxu0 0
      %749 = vmatmul.mubr.bf16.gmra.mrb[0].mxu0 %v609
      %v750 = vpop.f32.mrb[0].mxu0
      %v751 = vadd.f32 0.0, %v750
      %v752 = vpop.f32.mrb[0].mxu0
      %v753 = vpop.f32.mrb[0].mxu0
      %v754 = vadd.f32 0.0, %v753
      %v755 = vpop.f32.mrb[0].mxu0
      %756 = vmatprep.mubr.bf16.mxu0 0
      %757 = vmatmul.mubr.bf16.gmra.mrb[0].mxu0 %v612
      %v758 = vpop.f32.mrb[0].mxu0
      %v759 = vadd.f32 0.0, %v758
      %v760 = vpop.f32.mrb[0].mxu0
      %v761 = vpop.f32.mrb[0].mxu0
      %v762 = vadd.f32 0.0, %v761
      %v763 = vpop.f32.mrb[0].mxu0
      %764 = vmatprep.mubr.bf16.mxu0 0
      %765 = vmatmul.mubr.bf16.gmra.mrb[0].mxu0 %v615
      %v766 = vpop.f32.mrb[0].mxu0
      %v767 = vadd.f32 0.0, %v766
      %v768 = vpop.f32.mrb[0].mxu0
      %v769 = vpop.f32.mrb[0].mxu0
      %v770 = vadd.f32 0.0, %v769
      %v771 = vpop.f32.mrb[0].mxu0
      %772 = vmatprep.mubr.bf16.mxu0 0
      %773 = vmatmul.mubr.bf16.gmra.mrb[0].mxu0 %v618
      %v774 = vpop.f32.mrb[0].mxu0
      %v775 = vadd.f32 0.0, %v774
      %v776 = vpop.f32.mrb[0].mxu0
      %v777 = vpop.f32.mrb[0].mxu0
      %v778 = vadd.f32 0.0, %v777
      %v779 = vpop.f32.mrb[0].mxu0
      %780 = vdwg.mxu0
      %v781 = vld [vmem:[%s2] sm:$0x1]
      %v783 = vlaneseq
      %v784 = vshrl.u32 %v783, 7
      %v785 = vsub.s32 0, %v784
      %v786 = vrot.slane %v781, %v785
      %v788 = vmul.f32 %v655, %v786
      %v789 = vmul.f32 %v658, %v786
      %v790 = vmul.f32 %v663, %v786
      %v791 = vmul.f32 %v666, %v786
      %v792 = vmul.f32 %v671, %v786
      %v793 = vmul.f32 %v674, %v786
      %v794 = vmul.f32 %v679, %v786
      %v795 = vmul.f32 %v682, %v786
      %v796 = vmul.f32 %v687, %v786
      %v797 = vmul.f32 %v690, %v786
      %v798 = vmul.f32 %v695, %v786
      %v799 = vmul.f32 %v698, %v786
      %v800 = vmul.f32 %v703, %v786
      %v801 = vmul.f32 %v706, %v786
      %v802 = vmul.f32 %v711, %v786
      %v803 = vmul.f32 %v714, %v786
      %v804 = vmul.f32 %v719, %v786
      %v805 = vmul.f32 %v722, %v786
      %v806 = vmul.f32 %v727, %v786
      %v807 = vmul.f32 %v730, %v786
      %v808 = vmul.f32 %v735, %v786
      %v809 = vmul.f32 %v738, %v786
      %v810 = vmul.f32 %v743, %v786
      %v811 = vmul.f32 %v746, %v786
      %v812 = vmul.f32 %v751, %v786
      %v813 = vmul.f32 %v754, %v786
      %v814 = vmul.f32 %v759, %v786
      %v815 = vmul.f32 %v762, %v786
      %v816 = vmul.f32 %v767, %v786
      %v817 = vmul.f32 %v770, %v786
      %v818 = vmul.f32 %v775, %v786
      %v819 = vmul.f32 %v778, %v786
      %v820 = vld [vmem:[%s3] sm:$0x1]
      %v822 = vlaneseq
      %v823 = vshrl.u32 %v822, 7
      %v824 = vsub.s32 0, %v823
      %v825 = vrot.slane %v820, %v824
      %v827 = vadd.f32 %v788, %v825
      %v828 = vadd.f32 %v789, %v825
      %v829 = vadd.f32 %v790, %v825
      %v830 = vadd.f32 %v791, %v825
      %v831 = vadd.f32 %v792, %v825
      %v832 = vadd.f32 %v793, %v825
      %v833 = vadd.f32 %v794, %v825
      %v834 = vadd.f32 %v795, %v825
      %v835 = vadd.f32 %v796, %v825
      %v836 = vadd.f32 %v797, %v825
      %v837 = vadd.f32 %v798, %v825
      %v838 = vadd.f32 %v799, %v825
      %v839 = vadd.f32 %v800, %v825
      %v840 = vadd.f32 %v801, %v825
      %v841 = vadd.f32 %v802, %v825
      %v842 = vadd.f32 %v803, %v825
      %v843 = vadd.f32 %v804, %v825
      %v844 = vadd.f32 %v805, %v825
      %v845 = vadd.f32 %v806, %v825
      %v846 = vadd.f32 %v807, %v825
      %v847 = vadd.f32 %v808, %v825
      %v848 = vadd.f32 %v809, %v825
      %v849 = vadd.f32 %v810, %v825
      %v850 = vadd.f32 %v811, %v825
      %v851 = vadd.f32 %v812, %v825
      %v852 = vadd.f32 %v813, %v825
      %v853 = vadd.f32 %v814, %v825
      %v854 = vadd.f32 %v815, %v825
      %v855 = vadd.f32 %v816, %v825
      %v856 = vadd.f32 %v817, %v825
      %v857 = vadd.f32 %v818, %v825
      %v858 = vadd.f32 %v819, %v825
      %vm859 = vcmp.gt.f32.partialorder %v827, 0.0
      %vm860 = vcmp.gt.f32.partialorder %v828, 0.0
      %vm861 = vcmp.gt.f32.partialorder %v829, 0.0
      %vm862 = vcmp.gt.f32.partialorder %v830, 0.0
      %vm863 = vcmp.gt.f32.partialorder %v831, 0.0
      %vm864 = vcmp.gt.f32.partialorder %v832, 0.0
      %vm865 = vcmp.gt.f32.partialorder %v833, 0.0
      %vm866 = vcmp.gt.f32.partialorder %v834, 0.0
      %vm867 = vcmp.gt.f32.partialorder %v835, 0.0
      %vm868 = vcmp.gt.f32.partialorder %v836, 0.0
      %vm869 = vcmp.gt.f32.partialorder %v837, 0.0
      %vm870 = vcmp.gt.f32.partialorder %v838, 0.0
      %vm871 = vcmp.gt.f32.partialorder %v839, 0.0
      %vm872 = vcmp.gt.f32.partialorder %v840, 0.0
      %vm873 = vcmp.gt.f32.partialorder %v841, 0.0
      %vm874 = vcmp.gt.f32.partialorder %v842, 0.0
      %vm875 = vcmp.gt.f32.partialorder %v843, 0.0
      %vm876 = vcmp.gt.f32.partialorder %v844, 0.0
      %vm877 = vcmp.gt.f32.partialorder %v845, 0.0
      %vm878 = vcmp.gt.f32.partialorder %v846, 0.0
      %vm879 = vcmp.gt.f32.partialorder %v847, 0.0
      %vm880 = vcmp.gt.f32.partialorder %v848, 0.0
      %vm881 = vcmp.gt.f32.partialorder %v849, 0.0
      %vm882 = vcmp.gt.f32.partialorder %v850, 0.0
      %vm883 = vcmp.gt.f32.partialorder %v851, 0.0
      %vm884 = vcmp.gt.f32.partialorder %v852, 0.0
      %vm885 = vcmp.gt.f32.partialorder %v853, 0.0
      %vm886 = vcmp.gt.f32.partialorder %v854, 0.0
      %vm887 = vcmp.gt.f32.partialorder %v855, 0.0
      %vm888 = vcmp.gt.f32.partialorder %v856, 0.0
      %vm889 = vcmp.gt.f32.partialorder %v857, 0.0
      %vm890 = vcmp.gt.f32.partialorder %v858, 0.0
      %v891 = vmul.f32 %v827, 0.01
      %v892 = vmul.f32 %v828, 0.01
      %v893 = vmul.f32 %v829, 0.01
      %v894 = vmul.f32 %v830, 0.01
      %v895 = vmul.f32 %v831, 0.01
      %v896 = vmul.f32 %v832, 0.01
      %v897 = vmul.f32 %v833, 0.01
      %v898 = vmul.f32 %v834, 0.01
      %v899 = vmul.f32 %v835, 0.01
      %v900 = vmul.f32 %v836, 0.01
      %v901 = vmul.f32 %v837, 0.01
      %v902 = vmul.f32 %v838, 0.01
      %v903 = vmul.f32 %v839, 0.01
      %v904 = vmul.f32 %v840, 0.01
      %v905 = vmul.f32 %v841, 0.01
      %v906 = vmul.f32 %v842, 0.01
      %v907 = vmul.f32 %v843, 0.01
      %v908 = vmul.f32 %v844, 0.01
      %v909 = vmul.f32 %v845, 0.01
      %v910 = vmul.f32 %v846, 0.01
      %v911 = vmul.f32 %v847, 0.01
      %v912 = vmul.f32 %v848, 0.01
      %v913 = vmul.f32 %v849, 0.01
      %v914 = vmul.f32 %v850, 0.01
      %v915 = vmul.f32 %v851, 0.01
      %v916 = vmul.f32 %v852, 0.01
      %v917 = vmul.f32 %v853, 0.01
      %v918 = vmul.f32 %v854, 0.01
      %v919 = vmul.f32 %v855, 0.01
      %v920 = vmul.f32 %v856, 0.01
      %v921 = vmul.f32 %v857, 0.01
      %v922 = vmul.f32 %v858, 0.01
      %v923 = vsel %vm859, %v827, %v891
      %v924 = vsel %vm860, %v828, %v892
      %v925 = vsel %vm861, %v829, %v893
      %v926 = vsel %vm862, %v830, %v894
      %v927 = vsel %vm863, %v831, %v895
      %v928 = vsel %vm864, %v832, %v896
      %v929 = vsel %vm865, %v833, %v897
      %v930 = vsel %vm866, %v834, %v898
      %v931 = vsel %vm867, %v835, %v899
      %v932 = vsel %vm868, %v836, %v900
      %v933 = vsel %vm869, %v837, %v901
      %v934 = vsel %vm870, %v838, %v902
      %v935 = vsel %vm871, %v839, %v903
      %v936 = vsel %vm872, %v840, %v904
      %v937 = vsel %vm873, %v841, %v905
      %v938 = vsel %vm874, %v842, %v906
      %v939 = vsel %vm875, %v843, %v907
      %v940 = vsel %vm876, %v844, %v908
      %v941 = vsel %vm877, %v845, %v909
      %v942 = vsel %vm878, %v846, %v910
      %v943 = vsel %vm879, %v847, %v911
      %v944 = vsel %vm880, %v848, %v912
      %v945 = vsel %vm881, %v849, %v913
      %v946 = vsel %vm882, %v850, %v914
      %v947 = vsel %vm883, %v851, %v915
      %v948 = vsel %vm884, %v852, %v916
      %v949 = vsel %vm885, %v853, %v917
      %v950 = vsel %vm886, %v854, %v918
      %v951 = vsel %vm887, %v855, %v919
      %v952 = vsel %vm888, %v856, %v920
      %v953 = vsel %vm889, %v857, %v921
      %v954 = vsel %vm890, %v858, %v922
      %v955 = vpack.c.bf16 %v924, %v923
      %v956 = vpack.c.bf16 %v926, %v925
      %v957 = vpack.c.bf16 %v928, %v927
      %v958 = vpack.c.bf16 %v930, %v929
      %v959 = vpack.c.bf16 %v932, %v931
      %v960 = vpack.c.bf16 %v934, %v933
      %v961 = vpack.c.bf16 %v936, %v935
      %v962 = vpack.c.bf16 %v938, %v937
      %v963 = vpack.c.bf16 %v940, %v939
      %v964 = vpack.c.bf16 %v942, %v941
      %v965 = vpack.c.bf16 %v944, %v943
      %v966 = vpack.c.bf16 %v946, %v945
      %v967 = vpack.c.bf16 %v948, %v947
      %v968 = vpack.c.bf16 %v950, %v949
      %v969 = vpack.c.bf16 %v952, %v951
      %v970 = vpack.c.bf16 %v954, %v953
      %vm971 = vcmask 27648
      %972 = vst.msk [vmem:[#allocation2] sm:$0xf] %vm971, 0
      %973 = vst.msk [vmem:[#allocation2 + $0x4] sm:$0xf] %vm971, 0
      %vm974 = vcmask 24576
      %975 = vst.msk [vmem:[#allocation2 + $0x8] sm:$0x1] %vm974, 0
      %976 = vst.msk [vmem:[#allocation2 + $0xc] sm:$0xf] %vm971, 0
      %977 = vst.msk [vmem:[#allocation2 + $0x10] sm:$0xf] %vm971, 0
      %978 = vst.msk [vmem:[#allocation2 + $0x14] sm:$0x1] %vm974, 0
      %979 = vst.msk [vmem:[#allocation2 + $0x18] sm:$0xf] %vm971, 0
      %980 = vst.msk [vmem:[#allocation2 + $0x1c] sm:$0xf] %vm971, 0
      %981 = vst.msk [vmem:[#allocation2 + $0x20] sm:$0x1] %vm974, 0
      %982 = vst.msk [vmem:[#allocation2 + $0x24] sm:$0xf] %vm971, 0
      %983 = vst.msk [vmem:[#allocation2 + $0x28] sm:$0xf] %vm971, 0
      %984 = vst.msk [vmem:[#allocation2 + $0x2c] sm:$0x1] %vm974, 0
      %985 = vst.msk [vmem:[#allocation2 + $0x30] sm:$0xf] %vm971, 0
      %986 = vst.msk [vmem:[#allocation2 + $0x34] sm:$0xf] %vm971, 0
      %987 = vst.msk [vmem:[#allocation2 + $0x38] sm:$0x1] %vm974, 0
      %988 = vst.msk [vmem:[#allocation2 + $0x3c] sm:$0xf] %vm971, 0
      %989 = vst.msk [vmem:[#allocation2 + $0x40] sm:$0xf] %vm971, 0
      %990 = vst.msk [vmem:[#allocation2 + $0x44] sm:$0x1] %vm974, 0
      %991 = vst.msk [vmem:[#allocation2 + $0x48] sm:$0xf] %vm971, 0
      %992 = vst.msk [vmem:[#allocation2 + $0x4c] sm:$0xf] %vm971, 0
      %993 = vst.msk [vmem:[#allocation2 + $0x50] sm:$0x1] %vm974, 0
      %994 = vst.msk [vmem:[#allocation2 + $0x54] sm:$0xf] %vm971, 0
      %995 = vst.msk [vmem:[#allocation2 + $0x58] sm:$0xf] %vm971, 0
      %996 = vst.msk [vmem:[#allocation2 + $0x5c] sm:$0x1] %vm974, 0
      %997 = vst.msk [vmem:[#allocation2 + $0x60] sm:$0xf] %vm971, 0
      %998 = vst.msk [vmem:[#allocation2 + $0x64] sm:$0xf] %vm971, 0
      %999 = vst.msk [vmem:[#allocation2 + $0x68] sm:$0x1] %vm974, 0
      %1000 = vst.msk [vmem:[#allocation2 + $0x6c] sm:$0xf] %vm971, 0
      %1001 = vst.msk [vmem:[#allocation2 + $0x70] sm:$0xf] %vm971, 0
      %1002 = vst.msk [vmem:[#allocation2 + $0x74] sm:$0x1] %vm974, 0
      %1003 = vst.msk [vmem:[#allocation2 + $0x78] sm:$0xf] %vm971, 0
      %1004 = vst.msk [vmem:[#allocation2 + $0x7c] sm:$0xf] %vm971, 0
      %1005 = vst.msk [vmem:[#allocation2 + $0x80] sm:$0x1] %vm974, 0
      %1006 = vst.msk [vmem:[#allocation2 + $0x84] sm:$0xf] %vm971, 0
      %1007 = vst.msk [vmem:[#allocation2 + $0x88] sm:$0xf] %vm971, 0
      %1008 = vst.msk [vmem:[#allocation2 + $0x8c] sm:$0x1] %vm974, 0
      %1009 = vst.msk [vmem:[#allocation2 + $0x90] sm:$0xf] %vm971, 0
      %1010 = vst.msk [vmem:[#allocation2 + $0x94] sm:$0xf] %vm971, 0
      %1011 = vst.msk [vmem:[#allocation2 + $0x98] sm:$0x1] %vm974, 0
      %1012 = vst.msk [vmem:[#allocation2 + $0x9c] sm:$0xf] %vm971, 0
      %1013 = vst.msk [vmem:[#allocation2 + $0xa0] sm:$0xf] %vm971, 0
      %1014 = vst.msk [vmem:[#allocation2 + $0xa4] sm:$0x1] %vm974, 0
      %1015 = vst.msk [vmem:[#allocation2 + $0xa8] sm:$0xf] %vm971, 0
      %1016 = vst.msk [vmem:[#allocation2 + $0xac] sm:$0xf] %vm971, 0
      %1017 = vst.msk [vmem:[#allocation2 + $0xb0] sm:$0x1] %vm974, 0
      %1018 = vst.msk [vmem:[#allocation2 + $0xb4] sm:$0xf] %vm971, 0
      %1019 = vst.msk [vmem:[#allocation2 + $0xb8] sm:$0xf] %vm971, 0
      %1020 = vst.msk [vmem:[#allocation2 + $0xbc] sm:$0x1] %vm974, 0
      %1021 = vst.msk [vmem:[#allocation2 + $0xc0] sm:$0xf] %vm971, 0
      %1022 = vst.msk [vmem:[#allocation2 + $0xc4] sm:$0xf] %vm971, 0
      %1023 = vst.msk [vmem:[#allocation2 + $0xc8] sm:$0x1] %vm974, 0
      %1024 = vst.msk [vmem:[#allocation2 + $0xcc] sm:$0xf] %vm971, 0
      %1025 = vst.msk [vmem:[#allocation2 + $0xd0] sm:$0xf] %vm971, 0
      %1026 = vst.msk [vmem:[#allocation2 + $0xd4] sm:$0x1] %vm974, 0
      %v1043 = vunpack.c.l.b16 %v955
      %v1044 = vunpack.c.h.b16 %v955
      %v1045 = vunpack.c.l.b16 %v956
      %v1046 = vunpack.c.h.b16 %v956
      %v1047 = vunpack.c.l.b16 %v957
      %v1048 = vunpack.c.h.b16 %v957
      %v1049 = vunpack.c.l.b16 %v958
      %v1050 = vunpack.c.h.b16 %v958
      %v1051 = vunpack.c.l.b16 %v959
      %v1052 = vunpack.c.h.b16 %v959
      %v1053 = vunpack.c.l.b16 %v960
      %v1054 = vunpack.c.h.b16 %v960
      %v1055 = vunpack.c.l.b16 %v961
      %v1056 = vunpack.c.h.b16 %v961
      %v1057 = vunpack.c.l.b16 %v962
      %v1058 = vunpack.c.h.b16 %v962
      %v1059 = vunpack.c.l.b16 %v963
      %v1060 = vunpack.c.h.b16 %v963
      %v1061 = vunpack.c.l.b16 %v964
      %v1062 = vunpack.c.h.b16 %v964
      %v1063 = vunpack.c.l.b16 %v965
      %v1064 = vunpack.c.h.b16 %v965
      %v1065 = vunpack.c.l.b16 %v966
      %v1066 = vunpack.c.h.b16 %v966
      %v1067 = vunpack.c.l.b16 %v967
      %v1068 = vunpack.c.h.b16 %v967
      %v1069 = vunpack.c.l.b16 %v968
      %v1070 = vunpack.c.h.b16 %v968
      %v1071 = vunpack.c.l.b16 %v969
      %v1072 = vunpack.c.h.b16 %v969
      %v1073 = vunpack.c.l.b16 %v970
      %v1074 = vunpack.c.h.b16 %v970
      %v1075 = vpack.c.b16 %v1043, %v1043
      %v1076 = vpack.c.b16 %v1044, %v1044
      %v1077 = vpack.c.b16 %v1045, %v1045
      %v1078 = vpack.c.b16 %v1046, %v1046
      %v1079 = vpack.c.b16 %v1047, %v1047
      %v1080 = vpack.c.b16 %v1048, %v1048
      %v1081 = vpack.c.b16 %v1049, %v1049
      %v1082 = vpack.c.b16 %v1050, %v1050
      %v1083 = vpack.c.b16 %v1051, %v1051
      %v1084 = vpack.c.b16 %v1052, %v1052
      %v1085 = vpack.c.b16 %v1053, %v1053
      %v1086 = vpack.c.b16 %v1054, %v1054
      %v1087 = vpack.c.b16 %v1055, %v1055
      %v1088 = vpack.c.b16 %v1056, %v1056
      %v1089 = vpack.c.b16 %v1057, %v1057
      %v1090 = vpack.c.b16 %v1058, %v1058
      %v1091 = vpack.c.b16 %v1059, %v1059
      %v1092 = vpack.c.b16 %v1060, %v1060
      %v1093 = vpack.c.b16 %v1061, %v1061
      %v1094 = vpack.c.b16 %v1062, %v1062
      %v1095 = vpack.c.b16 %v1063, %v1063
      %v1096 = vpack.c.b16 %v1064, %v1064
      %v1097 = vpack.c.b16 %v1065, %v1065
      %v1098 = vpack.c.b16 %v1066, %v1066
      %v1099 = vpack.c.b16 %v1067, %v1067
      %v1100 = vpack.c.b16 %v1068, %v1068
      %v1101 = vpack.c.b16 %v1069, %v1069
      %v1102 = vpack.c.b16 %v1070, %v1070
      %v1103 = vpack.c.b16 %v1071, %v1071
      %v1104 = vpack.c.b16 %v1072, %v1072
      %v1105 = vpack.c.b16 %v1073, %v1073
      %v1106 = vpack.c.b16 %v1074, %v1074
      %vm1107 = vsmask.f32 256
      %vm1108 = vsmask.f32 4368
      %vm1109 = vmor %vm1107, %vm1108
      %v1111 = vshrl.u32 %v1075, 16
      %v1113 = vrot.slane %v1111, 7
      %v1114 = vshll.u32 %v1075, 16
      %v1116 = vor.u32 %v1113, %v1114
      %v1117 = vrot.slane %v1113, 4
      %v1119 = vshrl.u32 %v1076, 16
      %v1121 = vrot.slane %v1119, 7
      %v1122 = vshll.u32 %v1076, 16
      %v1124 = vor.u32 %v1121, %v1122
      %v1125 = vsel %vm1109, %v1117, %v1124
      %v1126 = vrot.slane %v1121, 4
      %v1128 = vshrl.u32 %v1077, 16
      %v1130 = vrot.slane %v1128, 7
      %v1131 = vshll.u32 %v1077, 16
      %v1133 = vor.u32 %v1130, %v1131
      %v1134 = vrot.slane %v1130, 4
      %v1136 = vshrl.u32 %v1078, 16
      %v1138 = vrot.slane %v1136, 7
      %v1139 = vshll.u32 %v1078, 16
      %v1141 = vor.u32 %v1138, %v1139
      %v1142 = vsel %vm1109, %v1134, %v1141
      %v1143 = vrot.slane %v1138, 4
      %v1145 = vshrl.u32 %v1079, 16
      %v1147 = vrot.slane %v1145, 7
      %v1148 = vshll.u32 %v1079, 16
      %v1150 = vor.u32 %v1147, %v1148
      %v1151 = vrot.slane %v1147, 4
      %v1153 = vshrl.u32 %v1080, 16
      %v1155 = vrot.slane %v1153, 7
      %v1156 = vshll.u32 %v1080, 16
      %v1158 = vor.u32 %v1155, %v1156
      %v1159 = vsel %vm1109, %v1151, %v1158
      %v1160 = vrot.slane %v1155, 4
      %v1162 = vshrl.u32 %v1081, 16
      %v1164 = vrot.slane %v1162, 7
      %v1165 = vshll.u32 %v1081, 16
      %v1167 = vor.u32 %v1164, %v1165
      %v1168 = vrot.slane %v1164, 4
      %v1170 = vshrl.u32 %v1082, 16
      %v1172 = vrot.slane %v1170, 7
      %v1173 = vshll.u32 %v1082, 16
      %v1175 = vor.u32 %v1172, %v1173
      %v1176 = vsel %vm1109, %v1168, %v1175
      %v1177 = vrot.slane %v1172, 4
      %v1179 = vshrl.u32 %v1083, 16
      %v1181 = vrot.slane %v1179, 7
      %v1182 = vshll.u32 %v1083, 16
      %v1184 = vor.u32 %v1181, %v1182
      %v1185 = vrot.slane %v1181, 4
      %v1187 = vshrl.u32 %v1084, 16
      %v1189 = vrot.slane %v1187, 7
      %v1190 = vshll.u32 %v1084, 16
      %v1192 = vor.u32 %v1189, %v1190
      %v1193 = vsel %vm1109, %v1185, %v1192
      %v1194 = vrot.slane %v1189, 4
      %v1196 = vshrl.u32 %v1085, 16
      %v1198 = vrot.slane %v1196, 7
      %v1199 = vshll.u32 %v1085, 16
      %v1201 = vor.u32 %v1198, %v1199
      %v1202 = vrot.slane %v1198, 4
      %v1204 = vshrl.u32 %v1086, 16
      %v1206 = vrot.slane %v1204, 7
      %v1207 = vshll.u32 %v1086, 16
      %v1209 = vor.u32 %v1206, %v1207
      %v1210 = vsel %vm1109, %v1202, %v1209
      %v1211 = vrot.slane %v1206, 4
      %v1213 = vshrl.u32 %v1087, 16
      %v1215 = vrot.slane %v1213, 7
      %v1216 = vshll.u32 %v1087, 16
      %v1218 = vor.u32 %v1215, %v1216
      %v1219 = vrot.slane %v1215, 4
      %v1221 = vshrl.u32 %v1088, 16
      %v1223 = vrot.slane %v1221, 7
      %v1224 = vshll.u32 %v1088, 16
      %v1226 = vor.u32 %v1223, %v1224
      %v1227 = vsel %vm1109, %v1219, %v1226
      %v1228 = vrot.slane %v1223, 4
      %v1230 = vshrl.u32 %v1089, 16
      %v1232 = vrot.slane %v1230, 7
      %v1233 = vshll.u32 %v1089, 16
      %v1235 = vor.u32 %v1232, %v1233
      %v1236 = vrot.slane %v1232, 4
      %v1238 = vshrl.u32 %v1090, 16
      %v1240 = vrot.slane %v1238, 7
      %v1241 = vshll.u32 %v1090, 16
      %v1243 = vor.u32 %v1240, %v1241
      %v1244 = vsel %vm1109, %v1236, %v1243
      %v1245 = vrot.slane %v1240, 4
      %v1247 = vshrl.u32 %v1091, 16
      %v1249 = vrot.slane %v1247, 7
      %v1250 = vshll.u32 %v1091, 16
      %v1252 = vor.u32 %v1249, %v1250
      %v1253 = vrot.slane %v1249, 4
      %v1255 = vshrl.u32 %v1092, 16
      %v1257 = vrot.slane %v1255, 7
      %v1258 = vshll.u32 %v1092, 16
      %v1260 = vor.u32 %v1257, %v1258
      %v1261 = vsel %vm1109, %v1253, %v1260
      %v1262 = vrot.slane %v1257, 4
      %v1264 = vshrl.u32 %v1093, 16
      %v1266 = vrot.slane %v1264, 7
      %v1267 = vshll.u32 %v1093, 16
      %v1269 = vor.u32 %v1266, %v1267
      %v1270 = vrot.slane %v1266, 4
      %v1272 = vshrl.u32 %v1094, 16
      %v1274 = vrot.slane %v1272, 7
      %v1275 = vshll.u32 %v1094, 16
      %v1277 = vor.u32 %v1274, %v1275
      %v1278 = vsel %vm1109, %v1270, %v1277
      %v1279 = vrot.slane %v1274, 4
      %v1281 = vshrl.u32 %v1095, 16
      %v1283 = vrot.slane %v1281, 7
      %v1284 = vshll.u32 %v1095, 16
      %v1286 = vor.u32 %v1283, %v1284
      %v1287 = vrot.slane %v1283, 4
      %v1289 = vshrl.u32 %v1096, 16
      %v1291 = vrot.slane %v1289, 7
      %v1292 = vshll.u32 %v1096, 16
      %v1294 = vor.u32 %v1291, %v1292
      %v1295 = vsel %vm1109, %v1287, %v1294
      %v1296 = vrot.slane %v1291, 4
      %v1298 = vshrl.u32 %v1097, 16
      %v1300 = vrot.slane %v1298, 7
      %v1301 = vshll.u32 %v1097, 16
      %v1303 = vor.u32 %v1300, %v1301
      %v1304 = vrot.slane %v1300, 4
      %v1306 = vshrl.u32 %v1098, 16
      %v1308 = vrot.slane %v1306, 7
      %v1309 = vshll.u32 %v1098, 16
      %v1311 = vor.u32 %v1308, %v1309
      %v1312 = vsel %vm1109, %v1304, %v1311
      %v1313 = vrot.slane %v1308, 4
      %v1315 = vshrl.u32 %v1099, 16
      %v1317 = vrot.slane %v1315, 7
      %v1318 = vshll.u32 %v1099, 16
      %v1320 = vor.u32 %v1317, %v1318
      %v1321 = vrot.slane %v1317, 4
      %v1323 = vshrl.u32 %v1100, 16
      %v1325 = vrot.slane %v1323, 7
      %v1326 = vshll.u32 %v1100, 16
      %v1328 = vor.u32 %v1325, %v1326
      %v1329 = vsel %vm1109, %v1321, %v1328
      %v1330 = vrot.slane %v1325, 4
      %v1332 = vshrl.u32 %v1101, 16
      %v1334 = vrot.slane %v1332, 7
      %v1335 = vshll.u32 %v1101, 16
      %v1337 = vor.u32 %v1334, %v1335
      %v1338 = vrot.slane %v1334, 4
      %v1340 = vshrl.u32 %v1102, 16
      %v1342 = vrot.slane %v1340, 7
      %v1343 = vshll.u32 %v1102, 16
      %v1345 = vor.u32 %v1342, %v1343
      %v1346 = vsel %vm1109, %v1338, %v1345
      %v1347 = vrot.slane %v1342, 4
      %v1349 = vshrl.u32 %v1103, 16
      %v1351 = vrot.slane %v1349, 7
      %v1352 = vshll.u32 %v1103, 16
      %v1354 = vor.u32 %v1351, %v1352
      %v1355 = vrot.slane %v1351, 4
      %v1357 = vshrl.u32 %v1104, 16
      %v1359 = vrot.slane %v1357, 7
      %v1360 = vshll.u32 %v1104, 16
      %v1362 = vor.u32 %v1359, %v1360
      %v1363 = vsel %vm1109, %v1355, %v1362
      %v1364 = vrot.slane %v1359, 4
      %v1366 = vshrl.u32 %v1105, 16
      %v1368 = vrot.slane %v1366, 7
      %v1369 = vshll.u32 %v1105, 16
      %v1371 = vor.u32 %v1368, %v1369
      %v1372 = vrot.slane %v1368, 4
      %v1374 = vshrl.u32 %v1106, 16
      %v1376 = vrot.slane %v1374, 7
      %v1377 = vshll.u32 %v1106, 16
      %v1379 = vor.u32 %v1376, %v1377
      %v1380 = vsel %vm1109, %v1372, %v1379
      %v1381 = vrot.slane %v1376, 4
      %s1430 = scalar_lea.vmem [#allocation2], 12
      %vm1431 = vcmask 27648
      %vm1432 = vsmask.f32 7938
      %vm1433 = vmand %vm1431, %vm1432
      %v1434 = vld [vmem:[%s1430] sm:$0xf]
      %v1435 = vsel %vm1433, %v1116, %v1434
      %1436 = vst [vmem:[%s1430] sm:$0xf] %v1435
      %1437 = vst.msk [vmem:[%s1430 + $0x4] sm:$0xf] %vm971, %v1125
      %vm1438 = vcmask 24576
      %vm1439 = vmand %vm1438, %vm1107
      %v1440 = vld [vmem:[%s1430 + $0x8] sm:$0x1]
      %v1441 = vsel %vm1439, %v1126, %v1440
      %1442 = vst [vmem:[%s1430 + $0x8] sm:$0x1] %v1441
      %v1443 = vld [vmem:[%s1430 + $0xc] sm:$0xf]
      %v1444 = vsel %vm1433, %v1133, %v1443
      %1445 = vst [vmem:[%s1430 + $0xc] sm:$0xf] %v1444
      %1446 = vst.msk [vmem:[%s1430 + $0x10] sm:$0xf] %vm971, %v1142
      %v1447 = vld [vmem:[%s1430 + $0x14] sm:$0x1]
      %v1448 = vsel %vm1439, %v1143, %v1447
      %1449 = vst [vmem:[%s1430 + $0x14] sm:$0x1] %v1448
      %v1450 = vld [vmem:[%s1430 + $0x18] sm:$0xf]
      %v1451 = vsel %vm1433, %v1150, %v1450
      %1452 = vst [vmem:[%s1430 + $0x18] sm:$0xf] %v1451
      %1453 = vst.msk [vmem:[%s1430 + $0x1c] sm:$0xf] %vm971, %v1159
      %v1454 = vld [vmem:[%s1430 + $0x20] sm:$0x1]
      %v1455 = vsel %vm1439, %v1160, %v1454
      %1456 = vst [vmem:[%s1430 + $0x20] sm:$0x1] %v1455
      %v1457 = vld [vmem:[%s1430 + $0x24] sm:$0xf]
      %v1458 = vsel %vm1433, %v1167, %v1457
      %1459 = vst [vmem:[%s1430 + $0x24] sm:$0xf] %v1458
      %1460 = vst.msk [vmem:[%s1430 + $0x28] sm:$0xf] %vm971, %v1176
      %v1461 = vld [vmem:[%s1430 + $0x2c] sm:$0x1]
      %v1462 = vsel %vm1439, %v1177, %v1461
      %1463 = vst [vmem:[%s1430 + $0x2c] sm:$0x1] %v1462
      %v1464 = vld [vmem:[%s1430 + $0x30] sm:$0xf]
      %v1465 = vsel %vm1433, %v1184, %v1464
      %1466 = vst [vmem:[%s1430 + $0x30] sm:$0xf] %v1465
      %1467 = vst.msk [vmem:[%s1430 + $0x34] sm:$0xf] %vm971, %v1193
      %v1468 = vld [vmem:[%s1430 + $0x38] sm:$0x1]
      %v1469 = vsel %vm1439, %v1194, %v1468
      %1470 = vst [vmem:[%s1430 + $0x38] sm:$0x1] %v1469
      %v1471 = vld [vmem:[%s1430 + $0x3c] sm:$0xf]
      %v1472 = vsel %vm1433, %v1201, %v1471
      %1473 = vst [vmem:[%s1430 + $0x3c] sm:$0xf] %v1472
      %1474 = vst.msk [vmem:[%s1430 + $0x40] sm:$0xf] %vm971, %v1210
      %v1475 = vld [vmem:[%s1430 + $0x44] sm:$0x1]
      %v1476 = vsel %vm1439, %v1211, %v1475
      %1477 = vst [vmem:[%s1430 + $0x44] sm:$0x1] %v1476
      %v1478 = vld [vmem:[%s1430 + $0x48] sm:$0xf]
      %v1479 = vsel %vm1433, %v1218, %v1478
      %1480 = vst [vmem:[%s1430 + $0x48] sm:$0xf] %v1479
      %1481 = vst.msk [vmem:[%s1430 + $0x4c] sm:$0xf] %vm971, %v1227
      %v1482 = vld [vmem:[%s1430 + $0x50] sm:$0x1]
      %v1483 = vsel %vm1439, %v1228, %v1482
      %1484 = vst [vmem:[%s1430 + $0x50] sm:$0x1] %v1483
      %v1485 = vld [vmem:[%s1430 + $0x54] sm:$0xf]
      %v1486 = vsel %vm1433, %v1235, %v1485
      %1487 = vst [vmem:[%s1430 + $0x54] sm:$0xf] %v1486
      %1488 = vst.msk [vmem:[%s1430 + $0x58] sm:$0xf] %vm971, %v1244
      %v1489 = vld [vmem:[%s1430 + $0x5c] sm:$0x1]
      %v1490 = vsel %vm1439, %v1245, %v1489
      %1491 = vst [vmem:[%s1430 + $0x5c] sm:$0x1] %v1490
      %v1492 = vld [vmem:[%s1430 + $0x60] sm:$0xf]
      %v1493 = vsel %vm1433, %v1252, %v1492
      %1494 = vst [vmem:[%s1430 + $0x60] sm:$0xf] %v1493
      %1495 = vst.msk [vmem:[%s1430 + $0x64] sm:$0xf] %vm971, %v1261
      %v1496 = vld [vmem:[%s1430 + $0x68] sm:$0x1]
      %v1497 = vsel %vm1439, %v1262, %v1496
      %1498 = vst [vmem:[%s1430 + $0x68] sm:$0x1] %v1497
      %v1499 = vld [vmem:[%s1430 + $0x6c] sm:$0xf]
      %v1500 = vsel %vm1433, %v1269, %v1499
      %1501 = vst [vmem:[%s1430 + $0x6c] sm:$0xf] %v1500
      %1502 = vst.msk [vmem:[%s1430 + $0x70] sm:$0xf] %vm971, %v1278
      %v1503 = vld [vmem:[%s1430 + $0x74] sm:$0x1]
      %v1504 = vsel %vm1439, %v1279, %v1503
      %1505 = vst [vmem:[%s1430 + $0x74] sm:$0x1] %v1504
      %v1506 = vld [vmem:[%s1430 + $0x78] sm:$0xf]
      %v1507 = vsel %vm1433, %v1286, %v1506
      %1508 = vst [vmem:[%s1430 + $0x78] sm:$0xf] %v1507
      %1509 = vst.msk [vmem:[%s1430 + $0x7c] sm:$0xf] %vm971, %v1295
      %v1510 = vld [vmem:[%s1430 + $0x80] sm:$0x1]
      %v1511 = vsel %vm1439, %v1296, %v1510
      %1512 = vst [vmem:[%s1430 + $0x80] sm:$0x1] %v1511
      %v1513 = vld [vmem:[%s1430 + $0x84] sm:$0xf]
      %v1514 = vsel %vm1433, %v1303, %v1513
      %1515 = vst [vmem:[%s1430 + $0x84] sm:$0xf] %v1514
      %1516 = vst.msk [vmem:[%s1430 + $0x88] sm:$0xf] %vm971, %v1312
      %v1517 = vld [vmem:[%s1430 + $0x8c] sm:$0x1]
      %v1518 = vsel %vm1439, %v1313, %v1517
      %1519 = vst [vmem:[%s1430 + $0x8c] sm:$0x1] %v1518
      %v1520 = vld [vmem:[%s1430 + $0x90] sm:$0xf]
      %v1521 = vsel %vm1433, %v1320, %v1520
      %1522 = vst [vmem:[%s1430 + $0x90] sm:$0xf] %v1521
      %1523 = vst.msk [vmem:[%s1430 + $0x94] sm:$0xf] %vm971, %v1329
      %v1524 = vld [vmem:[%s1430 + $0x98] sm:$0x1]
      %v1525 = vsel %vm1439, %v1330, %v1524
      %1526 = vst [vmem:[%s1430 + $0x98] sm:$0x1] %v1525
      %v1527 = vld [vmem:[%s1430 + $0x9c] sm:$0xf]
      %v1528 = vsel %vm1433, %v1337, %v1527
      %1529 = vst [vmem:[%s1430 + $0x9c] sm:$0xf] %v1528
      %1530 = vst.msk [vmem:[%s1430 + $0xa0] sm:$0xf] %vm971, %v1346
      %v1531 = vld [vmem:[%s1430 + $0xa4] sm:$0x1]
      %v1532 = vsel %vm1439, %v1347, %v1531
      %1533 = vst [vmem:[%s1430 + $0xa4] sm:$0x1] %v1532
      %v1534 = vld [vmem:[%s1430 + $0xa8] sm:$0xf]
      %v1535 = vsel %vm1433, %v1354, %v1534
      %1536 = vst [vmem:[%s1430 + $0xa8] sm:$0xf] %v1535
      %1537 = vst.msk [vmem:[%s1430 + $0xac] sm:$0xf] %vm971, %v1363
      %v1538 = vld [vmem:[%s1430 + $0xb0] sm:$0x1]
      %v1539 = vsel %vm1439, %v1364, %v1538
      %1540 = vst [vmem:[%s1430 + $0xb0] sm:$0x1] %v1539
      %v1541 = vld [vmem:[%s1430 + $0xb4] sm:$0xf]
      %v1542 = vsel %vm1433, %v1371, %v1541
      %1543 = vst [vmem:[%s1430 + $0xb4] sm:$0xf] %v1542
      %1544 = vst.msk [vmem:[%s1430 + $0xb8] sm:$0xf] %vm971, %v1380
      %v1545 = vld [vmem:[%s1430 + $0xbc] sm:$0x1]
      %v1546 = vsel %vm1439, %v1381, %v1545
      %1547 = vst [vmem:[%s1430 + $0xbc] sm:$0x1] %v1546
      %v1548 = vld [vmem:[#allocation2] sm:$0xf]
      %v1549 = vld [vmem:[#allocation2 + $0x4] sm:$0xf]
      %v1550 = vld [vmem:[#allocation2 + $0xc] sm:$0xf]
      %v1551 = vld [vmem:[#allocation2 + $0x10] sm:$0xf]
      %v1552 = vld [vmem:[#allocation2 + $0x18] sm:$0xf]
      %v1553 = vld [vmem:[#allocation2 + $0x1c] sm:$0xf]
      %v1554 = vld [vmem:[#allocation2 + $0x24] sm:$0xf]
      %v1555 = vld [vmem:[#allocation2 + $0x28] sm:$0xf]
      %v1556 = vld [vmem:[#allocation2 + $0x30] sm:$0xf]
      %v1557 = vld [vmem:[#allocation2 + $0x34] sm:$0xf]
      %v1558 = vld [vmem:[#allocation2 + $0x3c] sm:$0xf]
      %v1559 = vld [vmem:[#allocation2 + $0x40] sm:$0xf]
      %v1560 = vld [vmem:[#allocation2 + $0x48] sm:$0xf]
      %v1561 = vld [vmem:[#allocation2 + $0x4c] sm:$0xf]
      %v1562 = vld [vmem:[#allocation2 + $0x54] sm:$0xf]
      %v1563 = vld [vmem:[#allocation2 + $0x58] sm:$0xf]
      %v1564 = vld [vmem:[#allocation2 + $0x60] sm:$0xf]
      %v1565 = vld [vmem:[#allocation2 + $0x64] sm:$0xf]
      %v1566 = vld [vmem:[#allocation2 + $0x6c] sm:$0xf]
      %v1567 = vld [vmem:[#allocation2 + $0x70] sm:$0xf]
      %v1568 = vld [vmem:[#allocation2 + $0x78] sm:$0xf]
      %v1569 = vld [vmem:[#allocation2 + $0x7c] sm:$0xf]
      %v1570 = vld [vmem:[#allocation2 + $0x84] sm:$0xf]
      %v1571 = vld [vmem:[#allocation2 + $0x88] sm:$0xf]
      %v1572 = vld [vmem:[#allocation2 + $0x90] sm:$0xf]
      %v1573 = vld [vmem:[#allocation2 + $0x94] sm:$0xf]
      %v1574 = vld [vmem:[#allocation2 + $0x9c] sm:$0xf]
      %v1575 = vld [vmem:[#allocation2 + $0xa0] sm:$0xf]
      %v1576 = vld [vmem:[#allocation2 + $0xa8] sm:$0xf]
      %v1577 = vld [vmem:[#allocation2 + $0xac] sm:$0xf]
      %v1578 = vld [vmem:[#allocation2 + $0xb4] sm:$0xf]
      %v1579 = vld [vmem:[#allocation2 + $0xb8] sm:$0xf]
      %v1612 = vunpack.c.l.b16 %v1548
      %v1613 = vunpack.c.l.b16 %v1549
      %v1614 = vunpack.c.l.b16 %v1550
      %v1615 = vunpack.c.l.b16 %v1551
      %v1616 = vunpack.c.l.b16 %v1552
      %v1617 = vunpack.c.l.b16 %v1553
      %v1618 = vunpack.c.l.b16 %v1554
      %v1619 = vunpack.c.l.b16 %v1555
      %v1620 = vunpack.c.l.b16 %v1556
      %v1621 = vunpack.c.l.b16 %v1557
      %v1622 = vunpack.c.l.b16 %v1558
      %v1623 = vunpack.c.l.b16 %v1559
      %v1624 = vunpack.c.l.b16 %v1560
      %v1625 = vunpack.c.l.b16 %v1561
      %v1626 = vunpack.c.l.b16 %v1562
      %v1627 = vunpack.c.l.b16 %v1563
      %v1628 = vunpack.c.l.b16 %v1564
      %v1629 = vunpack.c.l.b16 %v1565
      %v1630 = vunpack.c.l.b16 %v1566
      %v1631 = vunpack.c.l.b16 %v1567
      %v1632 = vunpack.c.l.b16 %v1568
      %v1633 = vunpack.c.l.b16 %v1569
      %v1634 = vunpack.c.l.b16 %v1570
      %v1635 = vunpack.c.l.b16 %v1571
      %v1636 = vunpack.c.l.b16 %v1572
      %v1637 = vunpack.c.l.b16 %v1573
      %v1638 = vunpack.c.l.b16 %v1574
      %v1639 = vunpack.c.l.b16 %v1575
      %v1640 = vunpack.c.l.b16 %v1576
      %v1641 = vunpack.c.l.b16 %v1577
      %v1642 = vunpack.c.l.b16 %v1578
      %v1643 = vunpack.c.l.b16 %v1579
      %v1644 = vpack.c.b16 %v1613, %v1612
      %v1645 = vpack.c.b16 %v1615, %v1614
      %v1646 = vpack.c.b16 %v1617, %v1616
      %v1647 = vpack.c.b16 %v1619, %v1618
      %v1648 = vpack.c.b16 %v1621, %v1620
      %v1649 = vpack.c.b16 %v1623, %v1622
      %v1650 = vpack.c.b16 %v1625, %v1624
      %v1651 = vpack.c.b16 %v1627, %v1626
      %v1652 = vpack.c.b16 %v1629, %v1628
      %v1653 = vpack.c.b16 %v1631, %v1630
      %v1654 = vpack.c.b16 %v1633, %v1632
      %v1655 = vpack.c.b16 %v1635, %v1634
      %v1656 = vpack.c.b16 %v1637, %v1636
      %v1657 = vpack.c.b16 %v1639, %v1638
      %v1658 = vpack.c.b16 %v1641, %v1640
      %v1659 = vpack.c.b16 %v1643, %v1642
      %vm1676 = vcmask 31744
      %1677 = vst.msk [vmem:[#allocation3] sm:$0xff] %vm1676, %v1644
      %1678 = vst.msk [vmem:[#allocation3 + $0x8] sm:$0xff] %vm1676, %v1645
      %1679 = vst.msk [vmem:[#allocation3 + $0x10] sm:$0xff] %vm1676, %v1646
      %1680 = vst.msk [vmem:[#allocation3 + $0x18] sm:$0xff] %vm1676, %v1647
      %1681 = vst.msk [vmem:[#allocation3 + $0x20] sm:$0xff] %vm1676, %v1648
      %1682 = vst.msk [vmem:[#allocation3 + $0x28] sm:$0xff] %vm1676, %v1649
      %1683 = vst.msk [vmem:[#allocation3 + $0x30] sm:$0xff] %vm1676, %v1650
      %1684 = vst.msk [vmem:[#allocation3 + $0x38] sm:$0xff] %vm1676, %v1651
      %1685 = vst.msk [vmem:[#allocation3 + $0x40] sm:$0xff] %vm1676, %v1652
      %1686 = vst.msk [vmem:[#allocation3 + $0x48] sm:$0xff] %vm1676, %v1653
      %1687 = vst.msk [vmem:[#allocation3 + $0x50] sm:$0xff] %vm1676, %v1654
      %1688 = vst.msk [vmem:[#allocation3 + $0x58] sm:$0xff] %vm1676, %v1655
      %1689 = vst.msk [vmem:[#allocation3 + $0x60] sm:$0xff] %vm1676, %v1656
      %1690 = vst.msk [vmem:[#allocation3 + $0x68] sm:$0xff] %vm1676, %v1657
      %1691 = vst.msk [vmem:[#allocation3 + $0x70] sm:$0xff] %vm1676, %v1658
      %1692 = vst.msk [vmem:[#allocation3 + $0x78] sm:$0xff] %vm1676, %v1659
      %v1693 = vld [vmem:[#allocation2] sm:$0xf]
      %v1694 = vld [vmem:[#allocation2 + $0x4] sm:$0xf]
      %v1695 = vld [vmem:[#allocation2 + $0x8] sm:$0x1]
      %v1696 = vld [vmem:[#allocation2 + $0xc] sm:$0xf]
      %v1697 = vld [vmem:[#allocation2 + $0x10] sm:$0xf]
      %v1698 = vld [vmem:[#allocation2 + $0x14] sm:$0x1]
      %v1699 = vld [vmem:[#allocation2 + $0x18] sm:$0xf]
      %v1700 = vld [vmem:[#allocation2 + $0x1c] sm:$0xf]
      %v1701 = vld [vmem:[#allocation2 + $0x20] sm:$0x1]
      %v1702 = vld [vmem:[#allocation2 + $0x24] sm:$0xf]
      %v1703 = vld [vmem:[#allocation2 + $0x28] sm:$0xf]
      %v1704 = vld [vmem:[#allocation2 + $0x2c] sm:$0x1]
      %v1705 = vld [vmem:[#allocation2 + $0x30] sm:$0xf]
      %v1706 = vld [vmem:[#allocation2 + $0x34] sm:$0xf]
      %v1707 = vld [vmem:[#allocation2 + $0x38] sm:$0x1]
      %v1708 = vld [vmem:[#allocation2 + $0x3c] sm:$0xf]
      %v1709 = vld [vmem:[#allocation2 + $0x40] sm:$0xf]
      %v1710 = vld [vmem:[#allocation2 + $0x44] sm:$0x1]
      %v1711 = vld [vmem:[#allocation2 + $0x48] sm:$0xf]
      %v1712 = vld [vmem:[#allocation2 + $0x4c] sm:$0xf]
      %v1713 = vld [vmem:[#allocation2 + $0x50] sm:$0x1]
      %v1714 = vld [vmem:[#allocation2 + $0x54] sm:$0xf]
      %v1715 = vld [vmem:[#allocation2 + $0x58] sm:$0xf]
      %v1716 = vld [vmem:[#allocation2 + $0x5c] sm:$0x1]
      %v1717 = vld [vmem:[#allocation2 + $0x60] sm:$0xf]
      %v1718 = vld [vmem:[#allocation2 + $0x64] sm:$0xf]
      %v1719 = vld [vmem:[#allocation2 + $0x68] sm:$0x1]
      %v1720 = vld [vmem:[#allocation2 + $0x6c] sm:$0xf]
      %v1721 = vld [vmem:[#allocation2 + $0x70] sm:$0xf]
      %v1722 = vld [vmem:[#allocation2 + $0x74] sm:$0x1]
      %v1723 = vld [vmem:[#allocation2 + $0x78] sm:$0xf]
      %v1724 = vld [vmem:[#allocation2 + $0x7c] sm:$0xf]
      %v1725 = vld [vmem:[#allocation2 + $0x80] sm:$0x1]
      %v1726 = vld [vmem:[#allocation2 + $0x84] sm:$0xf]
      %v1727 = vld [vmem:[#allocation2 + $0x88] sm:$0xf]
      %v1728 = vld [vmem:[#allocation2 + $0x8c] sm:$0x1]
      %v1729 = vld [vmem:[#allocation2 + $0x90] sm:$0xf]
      %v1730 = vld [vmem:[#allocation2 + $0x94] sm:$0xf]
      %v1731 = vld [vmem:[#allocation2 + $0x98] sm:$0x1]
      %v1732 = vld [vmem:[#allocation2 + $0x9c] sm:$0xf]
      %v1733 = vld [vmem:[#allocation2 + $0xa0] sm:$0xf]
      %v1734 = vld [vmem:[#allocation2 + $0xa4] sm:$0x1]
      %v1735 = vld [vmem:[#allocation2 + $0xa8] sm:$0xf]
      %v1736 = vld [vmem:[#allocation2 + $0xac] sm:$0xf]
      %v1737 = vld [vmem:[#allocation2 + $0xb0] sm:$0x1]
      %v1738 = vld [vmem:[#allocation2 + $0xb4] sm:$0xf]
      %v1739 = vld [vmem:[#allocation2 + $0xb8] sm:$0xf]
      %v1740 = vld [vmem:[#allocation2 + $0xbc] sm:$0x1]
      %vm1741 = vsmask.f32 3328
      %vm1742 = vsmask.f32 7440
      %vm1743 = vmor %vm1741, %vm1742
      %v1745 = vshrl.u32 %v1693, 16
      %v1747 = vrot.slane %v1745, 4
      %v1748 = vshll.u32 %v1693, 16
      %v1750 = vrot.slane %v1748, 5
      %v1751 = vor.u32 %v1747, %v1750
      %v1752 = vrot.slane %v1751, 4
      %v1754 = vshll.u32 %v1694, 16
      %v1756 = vrot.slane %v1754, 5
      %v1757 = vsel %vm1743, %v1752, %v1756
      %v1758 = vshrl.u32 %v1694, 16
      %v1760 = vrot.slane %v1758, 4
      %v1761 = vor.u32 %v1760, %v1756
      %v1762 = vrot.slane %v1761, 4
      %v1764 = vshll.u32 %v1695, 16
      %v1766 = vrot.slane %v1764, 5
      %v1767 = vsel %vm1743, %v1762, %v1766
      %v1769 = vshrl.u32 %v1696, 16
      %v1771 = vrot.slane %v1769, 4
      %v1772 = vshll.u32 %v1696, 16
      %v1774 = vrot.slane %v1772, 5
      %v1775 = vor.u32 %v1771, %v1774
      %v1776 = vrot.slane %v1775, 4
      %v1778 = vshll.u32 %v1697, 16
      %v1780 = vrot.slane %v1778, 5
      %v1781 = vsel %vm1743, %v1776, %v1780
      %v1782 = vshrl.u32 %v1697, 16
      %v1784 = vrot.slane %v1782, 4
      %v1785 = vor.u32 %v1784, %v1780
      %v1786 = vrot.slane %v1785, 4
      %v1788 = vshll.u32 %v1698, 16
      %v1790 = vrot.slane %v1788, 5
      %v1791 = vsel %vm1743, %v1786, %v1790
      %v1793 = vshrl.u32 %v1699, 16
      %v1795 = vrot.slane %v1793, 4
      %v1796 = vshll.u32 %v1699, 16
      %v1798 = vrot.slane %v1796, 5
      %v1799 = vor.u32 %v1795, %v1798
      %v1800 = vrot.slane %v1799, 4
      %v1802 = vshll.u32 %v1700, 16
      %v1804 = vrot.slane %v1802, 5
      %v1805 = vsel %vm1743, %v1800, %v1804
      %v1806 = vshrl.u32 %v1700, 16
      %v1808 = vrot.slane %v1806, 4
      %v1809 = vor.u32 %v1808, %v1804
      %v1810 = vrot.slane %v1809, 4
      %v1812 = vshll.u32 %v1701, 16
      %v1814 = vrot.slane %v1812, 5
      %v1815 = vsel %vm1743, %v1810, %v1814
      %v1817 = vshrl.u32 %v1702, 16
      %v1819 = vrot.slane %v1817, 4
      %v1820 = vshll.u32 %v1702, 16
      %v1822 = vrot.slane %v1820, 5
      %v1823 = vor.u32 %v1819, %v1822
      %v1824 = vrot.slane %v1823, 4
      %v1826 = vshll.u32 %v1703, 16
      %v1828 = vrot.slane %v1826, 5
      %v1829 = vsel %vm1743, %v1824, %v1828
      %v1830 = vshrl.u32 %v1703, 16
      %v1832 = vrot.slane %v1830, 4
      %v1833 = vor.u32 %v1832, %v1828
      %v1834 = vrot.slane %v1833, 4
      %v1836 = vshll.u32 %v1704, 16
      %v1838 = vrot.slane %v1836, 5
      %v1839 = vsel %vm1743, %v1834, %v1838
      %v1841 = vshrl.u32 %v1705, 16
      %v1843 = vrot.slane %v1841, 4
      %v1844 = vshll.u32 %v1705, 16
      %v1846 = vrot.slane %v1844, 5
      %v1847 = vor.u32 %v1843, %v1846
      %v1848 = vrot.slane %v1847, 4
      %v1850 = vshll.u32 %v1706, 16
      %v1852 = vrot.slane %v1850, 5
      %v1853 = vsel %vm1743, %v1848, %v1852
      %v1854 = vshrl.u32 %v1706, 16
      %v1856 = vrot.slane %v1854, 4
      %v1857 = vor.u32 %v1856, %v1852
      %v1858 = vrot.slane %v1857, 4
      %v1860 = vshll.u32 %v1707, 16
      %v1862 = vrot.slane %v1860, 5
      %v1863 = vsel %vm1743, %v1858, %v1862
      %v1865 = vshrl.u32 %v1708, 16
      %v1867 = vrot.slane %v1865, 4
      %v1868 = vshll.u32 %v1708, 16
      %v1870 = vrot.slane %v1868, 5
      %v1871 = vor.u32 %v1867, %v1870
      %v1872 = vrot.slane %v1871, 4
      %v1874 = vshll.u32 %v1709, 16
      %v1876 = vrot.slane %v1874, 5
      %v1877 = vsel %vm1743, %v1872, %v1876
      %v1878 = vshrl.u32 %v1709, 16
      %v1880 = vrot.slane %v1878, 4
      %v1881 = vor.u32 %v1880, %v1876
      %v1882 = vrot.slane %v1881, 4
      %v1884 = vshll.u32 %v1710, 16
      %v1886 = vrot.slane %v1884, 5
      %v1887 = vsel %vm1743, %v1882, %v1886
      %v1889 = vshrl.u32 %v1711, 16
      %v1891 = vrot.slane %v1889, 4
      %v1892 = vshll.u32 %v1711, 16
      %v1894 = vrot.slane %v1892, 5
      %v1895 = vor.u32 %v1891, %v1894
      %v1896 = vrot.slane %v1895, 4
      %v1898 = vshll.u32 %v1712, 16
      %v1900 = vrot.slane %v1898, 5
      %v1901 = vsel %vm1743, %v1896, %v1900
      %v1902 = vshrl.u32 %v1712, 16
      %v1904 = vrot.slane %v1902, 4
      %v1905 = vor.u32 %v1904, %v1900
      %v1906 = vrot.slane %v1905, 4
      %v1908 = vshll.u32 %v1713, 16
      %v1910 = vrot.slane %v1908, 5
      %v1911 = vsel %vm1743, %v1906, %v1910
      %v1913 = vshrl.u32 %v1714, 16
      %v1915 = vrot.slane %v1913, 4
      %v1916 = vshll.u32 %v1714, 16
      %v1918 = vrot.slane %v1916, 5
      %v1919 = vor.u32 %v1915, %v1918
      %v1920 = vrot.slane %v1919, 4
      %v1922 = vshll.u32 %v1715, 16
      %v1924 = vrot.slane %v1922, 5
      %v1925 = vsel %vm1743, %v1920, %v1924
      %v1926 = vshrl.u32 %v1715, 16
      %v1928 = vrot.slane %v1926, 4
      %v1929 = vor.u32 %v1928, %v1924
      %v1930 = vrot.slane %v1929, 4
      %v1932 = vshll.u32 %v1716, 16
      %v1934 = vrot.slane %v1932, 5
      %v1935 = vsel %vm1743, %v1930, %v1934
      %v1937 = vshrl.u32 %v1717, 16
      %v1939 = vrot.slane %v1937, 4
      %v1940 = vshll.u32 %v1717, 16
      %v1942 = vrot.slane %v1940, 5
      %v1943 = vor.u32 %v1939, %v1942
      %v1944 = vrot.slane %v1943, 4
      %v1946 = vshll.u32 %v1718, 16
      %v1948 = vrot.slane %v1946, 5
      %v1949 = vsel %vm1743, %v1944, %v1948
      %v1950 = vshrl.u32 %v1718, 16
      %v1952 = vrot.slane %v1950, 4
      %v1953 = vor.u32 %v1952, %v1948
      %v1954 = vrot.slane %v1953, 4
      %v1956 = vshll.u32 %v1719, 16
      %v1958 = vrot.slane %v1956, 5
      %v1959 = vsel %vm1743, %v1954, %v1958
      %v1961 = vshrl.u32 %v1720, 16
      %v1963 = vrot.slane %v1961, 4
      %v1964 = vshll.u32 %v1720, 16
      %v1966 = vrot.slane %v1964, 5
      %v1967 = vor.u32 %v1963, %v1966
      %v1968 = vrot.slane %v1967, 4
      %v1970 = vshll.u32 %v1721, 16
      %v1972 = vrot.slane %v1970, 5
      %v1973 = vsel %vm1743, %v1968, %v1972
      %v1974 = vshrl.u32 %v1721, 16
      %v1976 = vrot.slane %v1974, 4
      %v1977 = vor.u32 %v1976, %v1972
      %v1978 = vrot.slane %v1977, 4
      %v1980 = vshll.u32 %v1722, 16
      %v1982 = vrot.slane %v1980, 5
      %v1983 = vsel %vm1743, %v1978, %v1982
      %v1985 = vshrl.u32 %v1723, 16
      %v1987 = vrot.slane %v1985, 4
      %v1988 = vshll.u32 %v1723, 16
      %v1990 = vrot.slane %v1988, 5
      %v1991 = vor.u32 %v1987, %v1990
      %v1992 = vrot.slane %v1991, 4
      %v1994 = vshll.u32 %v1724, 16
      %v1996 = vrot.slane %v1994, 5
      %v1997 = vsel %vm1743, %v1992, %v1996
      %v1998 = vshrl.u32 %v1724, 16
      %v2000 = vrot.slane %v1998, 4
      %v2001 = vor.u32 %v2000, %v1996
      %v2002 = vrot.slane %v2001, 4
      %v2004 = vshll.u32 %v1725, 16
      %v2006 = vrot.slane %v2004, 5
      %v2007 = vsel %vm1743, %v2002, %v2006
      %v2009 = vshrl.u32 %v1726, 16
      %v2011 = vrot.slane %v2009, 4
      %v2012 = vshll.u32 %v1726, 16
      %v2014 = vrot.slane %v2012, 5
      %v2015 = vor.u32 %v2011, %v2014
      %v2016 = vrot.slane %v2015, 4
      %v2018 = vshll.u32 %v1727, 16
      %v2020 = vrot.slane %v2018, 5
      %v2021 = vsel %vm1743, %v2016, %v2020
      %v2022 = vshrl.u32 %v1727, 16
      %v2024 = vrot.slane %v2022, 4
      %v2025 = vor.u32 %v2024, %v2020
      %v2026 = vrot.slane %v2025, 4
      %v2028 = vshll.u32 %v1728, 16
      %v2030 = vrot.slane %v2028, 5
      %v2031 = vsel %vm1743, %v2026, %v2030
      %v2033 = vshrl.u32 %v1729, 16
      %v2035 = vrot.slane %v2033, 4
      %v2036 = vshll.u32 %v1729, 16
      %v2038 = vrot.slane %v2036, 5
      %v2039 = vor.u32 %v2035, %v2038
      %v2040 = vrot.slane %v2039, 4
      %v2042 = vshll.u32 %v1730, 16
      %v2044 = vrot.slane %v2042, 5
      %v2045 = vsel %vm1743, %v2040, %v2044
      %v2046 = vshrl.u32 %v1730, 16
      %v2048 = vrot.slane %v2046, 4
      %v2049 = vor.u32 %v2048, %v2044
      %v2050 = vrot.slane %v2049, 4
      %v2052 = vshll.u32 %v1731, 16
      %v2054 = vrot.slane %v2052, 5
      %v2055 = vsel %vm1743, %v2050, %v2054
      %v2057 = vshrl.u32 %v1732, 16
      %v2059 = vrot.slane %v2057, 4
      %v2060 = vshll.u32 %v1732, 16
      %v2062 = vrot.slane %v2060, 5
      %v2063 = vor.u32 %v2059, %v2062
      %v2064 = vrot.slane %v2063, 4
      %v2066 = vshll.u32 %v1733, 16
      %v2068 = vrot.slane %v2066, 5
      %v2069 = vsel %vm1743, %v2064, %v2068
      %v2070 = vshrl.u32 %v1733, 16
      %v2072 = vrot.slane %v2070, 4
      %v2073 = vor.u32 %v2072, %v2068
      %v2074 = vrot.slane %v2073, 4
      %v2076 = vshll.u32 %v1734, 16
      %v2078 = vrot.slane %v2076, 5
      %v2079 = vsel %vm1743, %v2074, %v2078
      %v2081 = vshrl.u32 %v1735, 16
      %v2083 = vrot.slane %v2081, 4
      %v2084 = vshll.u32 %v1735, 16
      %v2086 = vrot.slane %v2084, 5
      %v2087 = vor.u32 %v2083, %v2086
      %v2088 = vrot.slane %v2087, 4
      %v2090 = vshll.u32 %v1736, 16
      %v2092 = vrot.slane %v2090, 5
      %v2093 = vsel %vm1743, %v2088, %v2092
      %v2094 = vshrl.u32 %v1736, 16
      %v2096 = vrot.slane %v2094, 4
      %v2097 = vor.u32 %v2096, %v2092
      %v2098 = vrot.slane %v2097, 4
      %v2100 = vshll.u32 %v1737, 16
      %v2102 = vrot.slane %v2100, 5
      %v2103 = vsel %vm1743, %v2098, %v2102
      %v2105 = vshrl.u32 %v1738, 16
      %v2107 = vrot.slane %v2105, 4
      %v2108 = vshll.u32 %v1738, 16
      %v2110 = vrot.slane %v2108, 5
      %v2111 = vor.u32 %v2107, %v2110
      %v2112 = vrot.slane %v2111, 4
      %v2114 = vshll.u32 %v1739, 16
      %v2116 = vrot.slane %v2114, 5
      %v2117 = vsel %vm1743, %v2112, %v2116
      %v2118 = vshrl.u32 %v1739, 16
      %v2120 = vrot.slane %v2118, 4
      %v2121 = vor.u32 %v2120, %v2116
      %v2122 = vrot.slane %v2121, 4
      %v2124 = vshll.u32 %v1740, 16
      %v2126 = vrot.slane %v2124, 5
      %v2127 = vsel %vm1743, %v2122, %v2126
      %v2128 = vunpack.c.l.b16 %v1757
      %v2129 = vunpack.c.l.b16 %v1767
      %v2130 = vunpack.c.l.b16 %v1781
      %v2131 = vunpack.c.l.b16 %v1791
      %v2132 = vunpack.c.l.b16 %v1805
      %v2133 = vunpack.c.l.b16 %v1815
      %v2134 = vunpack.c.l.b16 %v1829
      %v2135 = vunpack.c.l.b16 %v1839
      %v2136 = vunpack.c.l.b16 %v1853
      %v2137 = vunpack.c.l.b16 %v1863
      %v2138 = vunpack.c.l.b16 %v1877
      %v2139 = vunpack.c.l.b16 %v1887
      %v2140 = vunpack.c.l.b16 %v1901
      %v2141 = vunpack.c.l.b16 %v1911
      %v2142 = vunpack.c.l.b16 %v1925
      %v2143 = vunpack.c.l.b16 %v1935
      %v2144 = vunpack.c.l.b16 %v1949
      %v2145 = vunpack.c.l.b16 %v1959
      %v2146 = vunpack.c.l.b16 %v1973
      %v2147 = vunpack.c.l.b16 %v1983
      %v2148 = vunpack.c.l.b16 %v1997
      %v2149 = vunpack.c.l.b16 %v2007
      %v2150 = vunpack.c.l.b16 %v2021
      %v2151 = vunpack.c.l.b16 %v2031
      %v2152 = vunpack.c.l.b16 %v2045
      %v2153 = vunpack.c.l.b16 %v2055
      %v2154 = vunpack.c.l.b16 %v2069
      %v2155 = vunpack.c.l.b16 %v2079
      %v2156 = vunpack.c.l.b16 %v2093
      %v2157 = vunpack.c.l.b16 %v2103
      %v2158 = vunpack.c.l.b16 %v2117
      %v2159 = vunpack.c.l.b16 %v2127
      %v2160 = vpack.c.b16 %v2129, %v2128
      %v2161 = vpack.c.b16 %v2131, %v2130
      %v2162 = vpack.c.b16 %v2133, %v2132
      %v2163 = vpack.c.b16 %v2135, %v2134
      %v2164 = vpack.c.b16 %v2137, %v2136
      %v2165 = vpack.c.b16 %v2139, %v2138
      %v2166 = vpack.c.b16 %v2141, %v2140
      %v2167 = vpack.c.b16 %v2143, %v2142
      %v2168 = vpack.c.b16 %v2145, %v2144
      %v2169 = vpack.c.b16 %v2147, %v2146
      %v2170 = vpack.c.b16 %v2149, %v2148
      %v2171 = vpack.c.b16 %v2151, %v2150
      %v2172 = vpack.c.b16 %v2153, %v2152
      %v2173 = vpack.c.b16 %v2155, %v2154
      %v2174 = vpack.c.b16 %v2157, %v2156
      %v2175 = vpack.c.b16 %v2159, %v2158
      %2176 = vrot.lane.b32.xlu0 %v2160, 4
      %v2177 = vpop.permute.xlu0 %2176
      %2178 = vrot.lane.b32.xlu0 %v2161, 4
      %v2179 = vpop.permute.xlu0 %2178
      %2180 = vrot.lane.b32.xlu0 %v2162, 4
      %v2181 = vpop.permute.xlu0 %2180
      %2182 = vrot.lane.b32.xlu0 %v2163, 4
      %v2183 = vpop.permute.xlu0 %2182
      %2184 = vrot.lane.b32.xlu0 %v2164, 4
      %v2185 = vpop.permute.xlu0 %2184
      %2186 = vrot.lane.b32.xlu0 %v2165, 4
      %v2187 = vpop.permute.xlu0 %2186
      %2188 = vrot.lane.b32.xlu0 %v2166, 4
      %v2189 = vpop.permute.xlu0 %2188
      %2190 = vrot.lane.b32.xlu0 %v2167, 4
      %v2191 = vpop.permute.xlu0 %2190
      %2192 = vrot.lane.b32.xlu0 %v2168, 4
      %v2193 = vpop.permute.xlu0 %2192
      %2194 = vrot.lane.b32.xlu0 %v2169, 4
      %v2195 = vpop.permute.xlu0 %2194
      %2196 = vrot.lane.b32.xlu0 %v2170, 4
      %v2197 = vpop.permute.xlu0 %2196
      %2198 = vrot.lane.b32.xlu0 %v2171, 4
      %v2199 = vpop.permute.xlu0 %2198
      %2200 = vrot.lane.b32.xlu0 %v2172, 4
      %v2201 = vpop.permute.xlu0 %2200
      %2202 = vrot.lane.b32.xlu0 %v2173, 4
      %v2203 = vpop.permute.xlu0 %2202
      %2204 = vrot.lane.b32.xlu0 %v2174, 4
      %v2205 = vpop.permute.xlu0 %2204
      %2206 = vrot.lane.b32.xlu0 %v2175, 4
      %v2207 = vpop.permute.xlu0 %2206
      %vm2224 = vcmask 64544
      %2225 = vst.msk [vmem:[#allocation3] sm:$0xff] %vm2224, %v2177
      %2226 = vst.msk [vmem:[#allocation3 + $0x8] sm:$0xff] %vm2224, %v2179
      %2227 = vst.msk [vmem:[#allocation3 + $0x10] sm:$0xff] %vm2224, %v2181
      %2228 = vst.msk [vmem:[#allocation3 + $0x18] sm:$0xff] %vm2224, %v2183
      %2229 = vst.msk [vmem:[#allocation3 + $0x20] sm:$0xff] %vm2224, %v2185
      %2230 = vst.msk [vmem:[#allocation3 + $0x28] sm:$0xff] %vm2224, %v2187
      %2231 = vst.msk [vmem:[#allocation3 + $0x30] sm:$0xff] %vm2224, %v2189
      %2232 = vst.msk [vmem:[#allocation3 + $0x38] sm:$0xff] %vm2224, %v2191
      %2233 = vst.msk [vmem:[#allocation3 + $0x40] sm:$0xff] %vm2224, %v2193
      %2234 = vst.msk [vmem:[#allocation3 + $0x48] sm:$0xff] %vm2224, %v2195
      %2235 = vst.msk [vmem:[#allocation3 + $0x50] sm:$0xff] %vm2224, %v2197
      %2236 = vst.msk [vmem:[#allocation3 + $0x58] sm:$0xff] %vm2224, %v2199
      %2237 = vst.msk [vmem:[#allocation3 + $0x60] sm:$0xff] %vm2224, %v2201
      %2238 = vst.msk [vmem:[#allocation3 + $0x68] sm:$0xff] %vm2224, %v2203
      %2239 = vst.msk [vmem:[#allocation3 + $0x70] sm:$0xff] %vm2224, %v2205
      %2240 = vst.msk [vmem:[#allocation3 + $0x78] sm:$0xff] %vm2224, %v2207
      %v2241 = vld [vmem:[#allocation2] sm:$0xe]
      %v2242 = vld [vmem:[#allocation2 + $0x4] sm:$0xf]
      %v2243 = vld [vmem:[#allocation2 + $0x8] sm:$0x1]
      %v2244 = vld [vmem:[#allocation2 + $0xc] sm:$0xe]
      %v2245 = vld [vmem:[#allocation2 + $0x10] sm:$0xf]
      %v2246 = vld [vmem:[#allocation2 + $0x14] sm:$0x1]
      %v2247 = vld [vmem:[#allocation2 + $0x18] sm:$0xe]
      %v2248 = vld [vmem:[#allocation2 + $0x1c] sm:$0xf]
      %v2249 = vld [vmem:[#allocation2 + $0x20] sm:$0x1]
      %v2250 = vld [vmem:[#allocation2 + $0x24] sm:$0xe]
      %v2251 = vld [vmem:[#allocation2 + $0x28] sm:$0xf]
      %v2252 = vld [vmem:[#allocation2 + $0x2c] sm:$0x1]
      %v2253 = vld [vmem:[#allocation2 + $0x30] sm:$0xe]
      %v2254 = vld [vmem:[#allocation2 + $0x34] sm:$0xf]
      %v2255 = vld [vmem:[#allocation2 + $0x38] sm:$0x1]
      %v2256 = vld [vmem:[#allocation2 + $0x3c] sm:$0xe]
      %v2257 = vld [vmem:[#allocation2 + $0x40] sm:$0xf]
      %v2258 = vld [vmem:[#allocation2 + $0x44] sm:$0x1]
      %v2259 = vld [vmem:[#allocation2 + $0x48] sm:$0xe]
      %v2260 = vld [vmem:[#allocation2 + $0x4c] sm:$0xf]
      %v2261 = vld [vmem:[#allocation2 + $0x50] sm:$0x1]
      %v2262 = vld [vmem:[#allocation2 + $0x54] sm:$0xe]
      %v2263 = vld [vmem:[#allocation2 + $0x58] sm:$0xf]
      %v2264 = vld [vmem:[#allocation2 + $0x5c] sm:$0x1]
      %v2265 = vld [vmem:[#allocation2 + $0x60] sm:$0xe]
      %v2266 = vld [vmem:[#allocation2 + $0x64] sm:$0xf]
      %v2267 = vld [vmem:[#allocation2 + $0x68] sm:$0x1]
      %v2268 = vld [vmem:[#allocation2 + $0x6c] sm:$0xe]
      %v2269 = vld [vmem:[#allocation2 + $0x70] sm:$0xf]
      %v2270 = vld [vmem:[#allocation2 + $0x74] sm:$0x1]
      %v2271 = vld [vmem:[#allocation2 + $0x78] sm:$0xe]
      %v2272 = vld [vmem:[#allocation2 + $0x7c] sm:$0xf]
      %v2273 = vld [vmem:[#allocation2 + $0x80] sm:$0x1]
      %v2274 = vld [vmem:[#allocation2 + $0x84] sm:$0xe]
      %v2275 = vld [vmem:[#allocation2 + $0x88] sm:$0xf]
      %v2276 = vld [vmem:[#allocation2 + $0x8c] sm:$0x1]
      %v2277 = vld [vmem:[#allocation2 + $0x90] sm:$0xe]
      %v2278 = vld [vmem:[#allocation2 + $0x94] sm:$0xf]
      %v2279 = vld [vmem:[#allocation2 + $0x98] sm:$0x1]
      %v2280 = vld [vmem:[#allocation2 + $0x9c] sm:$0xe]
      %v2281 = vld [vmem:[#allocation2 + $0xa0] sm:$0xf]
      %v2282 = vld [vmem:[#allocation2 + $0xa4] sm:$0x1]
      %v2283 = vld [vmem:[#allocation2 + $0xa8] sm:$0xe]
      %v2284 = vld [vmem:[#allocation2 + $0xac] sm:$0xf]
      %v2285 = vld [vmem:[#allocation2 + $0xb0] sm:$0x1]
      %v2286 = vld [vmem:[#allocation2 + $0xb4] sm:$0xe]
      %v2287 = vld [vmem:[#allocation2 + $0xb8] sm:$0xf]
      %v2288 = vld [vmem:[#allocation2 + $0xbc] sm:$0x1]
      %vm2337 = vcmask 1042432
      %vm2338 = vcmask 1046532
      %vm2339 = vmor %vm2337, %vm2338
      %v2340 = vrot.slane %v2241, 5
      %v2341 = vrot.slane %v2340, 4
      %v2342 = vrot.slane %v2242, 5
      %v2343 = vsel %vm2339, %v2341, %v2342
      %v2344 = vrot.slane %v2342, 4
      %v2345 = vrot.slane %v2243, 5
      %v2346 = vsel %vm2339, %v2344, %v2345
      %v2347 = vrot.slane %v2244, 5
      %v2348 = vrot.slane %v2347, 4
      %v2349 = vrot.slane %v2245, 5
      %v2350 = vsel %vm2339, %v2348, %v2349
      %v2351 = vrot.slane %v2349, 4
      %v2352 = vrot.slane %v2246, 5
      %v2353 = vsel %vm2339, %v2351, %v2352
      %v2354 = vrot.slane %v2247, 5
      %v2355 = vrot.slane %v2354, 4
      %v2356 = vrot.slane %v2248, 5
      %v2357 = vsel %vm2339, %v2355, %v2356
      %v2358 = vrot.slane %v2356, 4
      %v2359 = vrot.slane %v2249, 5
      %v2360 = vsel %vm2339, %v2358, %v2359
      %v2361 = vrot.slane %v2250, 5
      %v2362 = vrot.slane %v2361, 4
      %v2363 = vrot.slane %v2251, 5
      %v2364 = vsel %vm2339, %v2362, %v2363
      %v2365 = vrot.slane %v2363, 4
      %v2366 = vrot.slane %v2252, 5
      %v2367 = vsel %vm2339, %v2365, %v2366
      %v2368 = vrot.slane %v2253, 5
      %v2369 = vrot.slane %v2368, 4
      %v2370 = vrot.slane %v2254, 5
      %v2371 = vsel %vm2339, %v2369, %v2370
      %v2372 = vrot.slane %v2370, 4
      %v2373 = vrot.slane %v2255, 5
      %v2374 = vsel %vm2339, %v2372, %v2373
      %v2375 = vrot.slane %v2256, 5
      %v2376 = vrot.slane %v2375, 4
      %v2377 = vrot.slane %v2257, 5
      %v2378 = vsel %vm2339, %v2376, %v2377
      %v2379 = vrot.slane %v2377, 4
      %v2380 = vrot.slane %v2258, 5
      %v2381 = vsel %vm2339, %v2379, %v2380
      %v2382 = vrot.slane %v2259, 5
      %v2383 = vrot.slane %v2382, 4
      %v2384 = vrot.slane %v2260, 5
      %v2385 = vsel %vm2339, %v2383, %v2384
      %v2386 = vrot.slane %v2384, 4
      %v2387 = vrot.slane %v2261, 5
      %v2388 = vsel %vm2339, %v2386, %v2387
      %v2389 = vrot.slane %v2262, 5
      %v2390 = vrot.slane %v2389, 4
      %v2391 = vrot.slane %v2263, 5
      %v2392 = vsel %vm2339, %v2390, %v2391
      %v2393 = vrot.slane %v2391, 4
      %v2394 = vrot.slane %v2264, 5
      %v2395 = vsel %vm2339, %v2393, %v2394
      %v2396 = vrot.slane %v2265, 5
      %v2397 = vrot.slane %v2396, 4
      %v2398 = vrot.slane %v2266, 5
      %v2399 = vsel %vm2339, %v2397, %v2398
      %v2400 = vrot.slane %v2398, 4
      %v2401 = vrot.slane %v2267, 5
      %v2402 = vsel %vm2339, %v2400, %v2401
      %v2403 = vrot.slane %v2268, 5
      %v2404 = vrot.slane %v2403, 4
      %v2405 = vrot.slane %v2269, 5
      %v2406 = vsel %vm2339, %v2404, %v2405
      %v2407 = vrot.slane %v2405, 4
      %v2408 = vrot.slane %v2270, 5
      %v2409 = vsel %vm2339, %v2407, %v2408
      %v2410 = vrot.slane %v2271, 5
      %v2411 = vrot.slane %v2410, 4
      %v2412 = vrot.slane %v2272, 5
      %v2413 = vsel %vm2339, %v2411, %v2412
      %v2414 = vrot.slane %v2412, 4
      %v2415 = vrot.slane %v2273, 5
      %v2416 = vsel %vm2339, %v2414, %v2415
      %v2417 = vrot.slane %v2274, 5
      %v2418 = vrot.slane %v2417, 4
      %v2419 = vrot.slane %v2275, 5
      %v2420 = vsel %vm2339, %v2418, %v2419
      %v2421 = vrot.slane %v2419, 4
      %v2422 = vrot.slane %v2276, 5
      %v2423 = vsel %vm2339, %v2421, %v2422
      %v2424 = vrot.slane %v2277, 5
      %v2425 = vrot.slane %v2424, 4
      %v2426 = vrot.slane %v2278, 5
      %v2427 = vsel %vm2339, %v2425, %v2426
      %v2428 = vrot.slane %v2426, 4
      %v2429 = vrot.slane %v2279, 5
      %v2430 = vsel %vm2339, %v2428, %v2429
      %v2431 = vrot.slane %v2280, 5
      %v2432 = vrot.slane %v2431, 4
      %v2433 = vrot.slane %v2281, 5
      %v2434 = vsel %vm2339, %v2432, %v2433
      %v2435 = vrot.slane %v2433, 4
      %v2436 = vrot.slane %v2282, 5
      %v2437 = vsel %vm2339, %v2435, %v2436
      %v2438 = vrot.slane %v2283, 5
      %v2439 = vrot.slane %v2438, 4
      %v2440 = vrot.slane %v2284, 5
      %v2441 = vsel %vm2339, %v2439, %v2440
      %v2442 = vrot.slane %v2440, 4
      %v2443 = vrot.slane %v2285, 5
      %v2444 = vsel %vm2339, %v2442, %v2443
      %v2445 = vrot.slane %v2286, 5
      %v2446 = vrot.slane %v2445, 4
      %v2447 = vrot.slane %v2287, 5
      %v2448 = vsel %vm2339, %v2446, %v2447
      %v2449 = vrot.slane %v2447, 4
      %v2450 = vrot.slane %v2288, 5
      %v2451 = vsel %vm2339, %v2449, %v2450
      %v2452 = vunpack.c.l.b16 %v2343
      %v2453 = vunpack.c.l.b16 %v2346
      %v2454 = vunpack.c.l.b16 %v2350
      %v2455 = vunpack.c.l.b16 %v2353
      %v2456 = vunpack.c.l.b16 %v2357
      %v2457 = vunpack.c.l.b16 %v2360
      %v2458 = vunpack.c.l.b16 %v2364
      %v2459 = vunpack.c.l.b16 %v2367
      %v2460 = vunpack.c.l.b16 %v2371
      %v2461 = vunpack.c.l.b16 %v2374
      %v2462 = vunpack.c.l.b16 %v2378
      %v2463 = vunpack.c.l.b16 %v2381
      %v2464 = vunpack.c.l.b16 %v2385
      %v2465 = vunpack.c.l.b16 %v2388
      %v2466 = vunpack.c.l.b16 %v2392
      %v2467 = vunpack.c.l.b16 %v2395
      %v2468 = vunpack.c.l.b16 %v2399
      %v2469 = vunpack.c.l.b16 %v2402
      %v2470 = vunpack.c.l.b16 %v2406
      %v2471 = vunpack.c.l.b16 %v2409
      %v2472 = vunpack.c.l.b16 %v2413
      %v2473 = vunpack.c.l.b16 %v2416
      %v2474 = vunpack.c.l.b16 %v2420
      %v2475 = vunpack.c.l.b16 %v2423
      %v2476 = vunpack.c.l.b16 %v2427
      %v2477 = vunpack.c.l.b16 %v2430
      %v2478 = vunpack.c.l.b16 %v2434
      %v2479 = vunpack.c.l.b16 %v2437
      %v2480 = vunpack.c.l.b16 %v2441
      %v2481 = vunpack.c.l.b16 %v2444
      %v2482 = vunpack.c.l.b16 %v2448
      %v2483 = vunpack.c.l.b16 %v2451
      %v2484 = vpack.c.b16 %v2453, %v2452
      %v2485 = vpack.c.b16 %v2455, %v2454
      %v2486 = vpack.c.b16 %v2457, %v2456
      %v2487 = vpack.c.b16 %v2459, %v2458
      %v2488 = vpack.c.b16 %v2461, %v2460
      %v2489 = vpack.c.b16 %v2463, %v2462
      %v2490 = vpack.c.b16 %v2465, %v2464
      %v2491 = vpack.c.b16 %v2467, %v2466
      %v2492 = vpack.c.b16 %v2469, %v2468
      %v2493 = vpack.c.b16 %v2471, %v2470
      %v2494 = vpack.c.b16 %v2473, %v2472
      %v2495 = vpack.c.b16 %v2475, %v2474
      %v2496 = vpack.c.b16 %v2477, %v2476
      %v2497 = vpack.c.b16 %v2479, %v2478
      %v2498 = vpack.c.b16 %v2481, %v2480
      %v2499 = vpack.c.b16 %v2483, %v2482
      %2500 = vrot.lane.b32.xlu0 %v2484, 8
      %v2501 = vpop.permute.xlu0 %2500
      %2502 = vrot.lane.b32.xlu0 %v2485, 8
      %v2503 = vpop.permute.xlu0 %2502
      %2504 = vrot.lane.b32.xlu0 %v2486, 8
      %v2505 = vpop.permute.xlu0 %2504
      %2506 = vrot.lane.b32.xlu0 %v2487, 8
      %v2507 = vpop.permute.xlu0 %2506
      %2508 = vrot.lane.b32.xlu0 %v2488, 8
      %v2509 = vpop.permute.xlu0 %2508
      %2510 = vrot.lane.b32.xlu0 %v2489, 8
      %v2511 = vpop.permute.xlu0 %2510
      %2512 = vrot.lane.b32.xlu0 %v2490, 8
      %v2513 = vpop.permute.xlu0 %2512
      %2514 = vrot.lane.b32.xlu0 %v2491, 8
      %v2515 = vpop.permute.xlu0 %2514
      %2516 = vrot.lane.b32.xlu0 %v2492, 8
      %v2517 = vpop.permute.xlu0 %2516
      %2518 = vrot.lane.b32.xlu0 %v2493, 8
      %v2519 = vpop.permute.xlu0 %2518
      %2520 = vrot.lane.b32.xlu0 %v2494, 8
      %v2521 = vpop.permute.xlu0 %2520
      %2522 = vrot.lane.b32.xlu0 %v2495, 8
      %v2523 = vpop.permute.xlu0 %2522
      %2524 = vrot.lane.b32.xlu0 %v2496, 8
      %v2525 = vpop.permute.xlu0 %2524
      %2526 = vrot.lane.b32.xlu0 %v2497, 8
      %v2527 = vpop.permute.xlu0 %2526
      %2528 = vrot.lane.b32.xlu0 %v2498, 8
      %v2529 = vpop.permute.xlu0 %2528
      %2530 = vrot.lane.b32.xlu0 %v2499, 8
      %v2531 = vpop.permute.xlu0 %2530
      %vm2548 = vcmask 97344
      %2549 = vst.msk [vmem:[#allocation3] sm:$0xff] %vm2548, %v2501
      %2550 = vst.msk [vmem:[#allocation3 + $0x8] sm:$0xff] %vm2548, %v2503
      %2551 = vst.msk [vmem:[#allocation3 + $0x10] sm:$0xff] %vm2548, %v2505
      %2552 = vst.msk [vmem:[#allocation3 + $0x18] sm:$0xff] %vm2548, %v2507
      %2553 = vst.msk [vmem:[#allocation3 + $0x20] sm:$0xff] %vm2548, %v2509
      %2554 = vst.msk [vmem:[#allocation3 + $0x28] sm:$0xff] %vm2548, %v2511
      %2555 = vst.msk [vmem:[#allocation3 + $0x30] sm:$0xff] %vm2548, %v2513
      %2556 = vst.msk [vmem:[#allocation3 + $0x38] sm:$0xff] %vm2548, %v2515
      %2557 = vst.msk [vmem:[#allocation3 + $0x40] sm:$0xff] %vm2548, %v2517
      %2558 = vst.msk [vmem:[#allocation3 + $0x48] sm:$0xff] %vm2548, %v2519
      %2559 = vst.msk [vmem:[#allocation3 + $0x50] sm:$0xff] %vm2548, %v2521
      %2560 = vst.msk [vmem:[#allocation3 + $0x58] sm:$0xff] %vm2548, %v2523
      %2561 = vst.msk [vmem:[#allocation3 + $0x60] sm:$0xff] %vm2548, %v2525
      %2562 = vst.msk [vmem:[#allocation3 + $0x68] sm:$0xff] %vm2548, %v2527
      %2563 = vst.msk [vmem:[#allocation3 + $0x70] sm:$0xff] %vm2548, %v2529
      %2564 = vst.msk [vmem:[#allocation3 + $0x78] sm:$0xff] %vm2548, %v2531
      %v2565 = vld [vmem:[%s1430] sm:$0xf]
      %v2566 = vld [vmem:[%s1430 + $0x4] sm:$0xf]
      %v2567 = vld [vmem:[%s1430 + $0xc] sm:$0xf]
      %v2568 = vld [vmem:[%s1430 + $0x10] sm:$0xf]
      %v2569 = vld [vmem:[%s1430 + $0x18] sm:$0xf]
      %v2570 = vld [vmem:[%s1430 + $0x1c] sm:$0xf]
      %v2571 = vld [vmem:[%s1430 + $0x24] sm:$0xf]
      %v2572 = vld [vmem:[%s1430 + $0x28] sm:$0xf]
      %v2573 = vld [vmem:[%s1430 + $0x30] sm:$0xf]
      %v2574 = vld [vmem:[%s1430 + $0x34] sm:$0xf]
      %v2575 = vld [vmem:[%s1430 + $0x3c] sm:$0xf]
      %v2576 = vld [vmem:[%s1430 + $0x40] sm:$0xf]
      %v2577 = vld [vmem:[%s1430 + $0x48] sm:$0xf]
      %v2578 = vld [vmem:[%s1430 + $0x4c] sm:$0xf]
      %v2579 = vld [vmem:[%s1430 + $0x54] sm:$0xf]
      %v2580 = vld [vmem:[%s1430 + $0x58] sm:$0xf]
      %v2581 = vld [vmem:[%s1430 + $0x60] sm:$0xf]
      %v2582 = vld [vmem:[%s1430 + $0x64] sm:$0xf]
      %v2583 = vld [vmem:[%s1430 + $0x6c] sm:$0xf]
      %v2584 = vld [vmem:[%s1430 + $0x70] sm:$0xf]
      %v2585 = vld [vmem:[%s1430 + $0x78] sm:$0xf]
      %v2586 = vld [vmem:[%s1430 + $0x7c] sm:$0xf]
      %v2587 = vld [vmem:[%s1430 + $0x84] sm:$0xf]
      %v2588 = vld [vmem:[%s1430 + $0x88] sm:$0xf]
      %v2589 = vld [vmem:[%s1430 + $0x90] sm:$0xf]
      %v2590 = vld [vmem:[%s1430 + $0x94] sm:$0xf]
      %v2591 = vld [vmem:[%s1430 + $0x9c] sm:$0xf]
      %v2592 = vld [vmem:[%s1430 + $0xa0] sm:$0xf]
      %v2593 = vld [vmem:[%s1430 + $0xa8] sm:$0xf]
      %v2594 = vld [vmem:[%s1430 + $0xac] sm:$0xf]
      %v2595 = vld [vmem:[%s1430 + $0xb4] sm:$0xf]
      %v2596 = vld [vmem:[%s1430 + $0xb8] sm:$0xf]
      %v2629 = vunpack.c.l.b16 %v2565
      %v2630 = vunpack.c.l.b16 %v2566
      %v2631 = vunpack.c.l.b16 %v2567
      %v2632 = vunpack.c.l.b16 %v2568
      %v2633 = vunpack.c.l.b16 %v2569
      %v2634 = vunpack.c.l.b16 %v2570
      %v2635 = vunpack.c.l.b16 %v2571
      %v2636 = vunpack.c.l.b16 %v2572
      %v2637 = vunpack.c.l.b16 %v2573
      %v2638 = vunpack.c.l.b16 %v2574
      %v2639 = vunpack.c.l.b16 %v2575
      %v2640 = vunpack.c.l.b16 %v2576
      %v2641 = vunpack.c.l.b16 %v2577
      %v2642 = vunpack.c.l.b16 %v2578
      %v2643 = vunpack.c.l.b16 %v2579
      %v2644 = vunpack.c.l.b16 %v2580
      %v2645 = vunpack.c.l.b16 %v2581
      %v2646 = vunpack.c.l.b16 %v2582
      %v2647 = vunpack.c.l.b16 %v2583
      %v2648 = vunpack.c.l.b16 %v2584
      %v2649 = vunpack.c.l.b16 %v2585
      %v2650 = vunpack.c.l.b16 %v2586
      %v2651 = vunpack.c.l.b16 %v2587
      %v2652 = vunpack.c.l.b16 %v2588
      %v2653 = vunpack.c.l.b16 %v2589
      %v2654 = vunpack.c.l.b16 %v2590
      %v2655 = vunpack.c.l.b16 %v2591
      %v2656 = vunpack.c.l.b16 %v2592
      %v2657 = vunpack.c.l.b16 %v2593
      %v2658 = vunpack.c.l.b16 %v2594
      %v2659 = vunpack.c.l.b16 %v2595
      %v2660 = vunpack.c.l.b16 %v2596
      %v2661 = vpack.c.b16 %v2630, %v2629
      %v2662 = vpack.c.b16 %v2632, %v2631
      %v2663 = vpack.c.b16 %v2634, %v2633
      %v2664 = vpack.c.b16 %v2636, %v2635
      %v2665 = vpack.c.b16 %v2638, %v2637
      %v2666 = vpack.c.b16 %v2640, %v2639
      %v2667 = vpack.c.b16 %v2642, %v2641
      %v2668 = vpack.c.b16 %v2644, %v2643
      %v2669 = vpack.c.b16 %v2646, %v2645
      %v2670 = vpack.c.b16 %v2648, %v2647
      %v2671 = vpack.c.b16 %v2650, %v2649
      %v2672 = vpack.c.b16 %v2652, %v2651
      %v2673 = vpack.c.b16 %v2654, %v2653
      %v2674 = vpack.c.b16 %v2656, %v2655
      %v2675 = vpack.c.b16 %v2658, %v2657
      %v2676 = vpack.c.b16 %v2660, %v2659
      %2677 = vrot.lane.b32.xlu0 %v2661, 12
      %v2678 = vpop.permute.xlu0 %2677
      %2679 = vrot.lane.b32.xlu0 %v2662, 12
      %v2680 = vpop.permute.xlu0 %2679
      %2681 = vrot.lane.b32.xlu0 %v2663, 12
      %v2682 = vpop.permute.xlu0 %2681
      %2683 = vrot.lane.b32.xlu0 %v2664, 12
      %v2684 = vpop.permute.xlu0 %2683
      %2685 = vrot.lane.b32.xlu0 %v2665, 12
      %v2686 = vpop.permute.xlu0 %2685
      %2687 = vrot.lane.b32.xlu0 %v2666, 12
      %v2688 = vpop.permute.xlu0 %2687
      %2689 = vrot.lane.b32.xlu0 %v2667, 12
      %v2690 = vpop.permute.xlu0 %2689
      %2691 = vrot.lane.b32.xlu0 %v2668, 12
      %v2692 = vpop.permute.xlu0 %2691
      %2693 = vrot.lane.b32.xlu0 %v2669, 12
      %v2694 = vpop.permute.xlu0 %2693
      %2695 = vrot.lane.b32.xlu0 %v2670, 12
      %v2696 = vpop.permute.xlu0 %2695
      %2697 = vrot.lane.b32.xlu0 %v2671, 12
      %v2698 = vpop.permute.xlu0 %2697
      %2699 = vrot.lane.b32.xlu0 %v2672, 12
      %v2700 = vpop.permute.xlu0 %2699
      %2701 = vrot.lane.b32.xlu0 %v2673, 12
      %v2702 = vpop.permute.xlu0 %2701
      %2703 = vrot.lane.b32.xlu0 %v2674, 12
      %v2704 = vpop.permute.xlu0 %2703
      %2705 = vrot.lane.b32.xlu0 %v2675, 12
      %v2706 = vpop.permute.xlu0 %2705
      %2707 = vrot.lane.b32.xlu0 %v2676, 12
      %v2708 = vpop.permute.xlu0 %2707
      %vm2725 = vcmask 130144
      %2726 = vst.msk [vmem:[#allocation3] sm:$0xff] %vm2725, %v2678
      %2727 = vst.msk [vmem:[#allocation3 + $0x8] sm:$0xff] %vm2725, %v2680
      %2728 = vst.msk [vmem:[#allocation3 + $0x10] sm:$0xff] %vm2725, %v2682
      %2729 = vst.msk [vmem:[#allocation3 + $0x18] sm:$0xff] %vm2725, %v2684
      %2730 = vst.msk [vmem:[#allocation3 + $0x20] sm:$0xff] %vm2725, %v2686
      %2731 = vst.msk [vmem:[#allocation3 + $0x28] sm:$0xff] %vm2725, %v2688
      %2732 = vst.msk [vmem:[#allocation3 + $0x30] sm:$0xff] %vm2725, %v2690
      %2733 = vst.msk [vmem:[#allocation3 + $0x38] sm:$0xff] %vm2725, %v2692
      %2734 = vst.msk [vmem:[#allocation3 + $0x40] sm:$0xff] %vm2725, %v2694
      %2735 = vst.msk [vmem:[#allocation3 + $0x48] sm:$0xff] %vm2725, %v2696
      %2736 = vst.msk [vmem:[#allocation3 + $0x50] sm:$0xff] %vm2725, %v2698
      %2737 = vst.msk [vmem:[#allocation3 + $0x58] sm:$0xff] %vm2725, %v2700
      %2738 = vst.msk [vmem:[#allocation3 + $0x60] sm:$0xff] %vm2725, %v2702
      %2739 = vst.msk [vmem:[#allocation3 + $0x68] sm:$0xff] %vm2725, %v2704
      %2740 = vst.msk [vmem:[#allocation3 + $0x70] sm:$0xff] %vm2725, %v2706
      %2741 = vst.msk [vmem:[#allocation3 + $0x78] sm:$0xff] %vm2725, %v2708
      %v2742 = vld [vmem:[%s1430] sm:$0xf]
      %v2743 = vld [vmem:[%s1430 + $0x4] sm:$0xf]
      %v2744 = vld [vmem:[%s1430 + $0x8] sm:$0x1]
      %v2745 = vld [vmem:[%s1430 + $0xc] sm:$0xf]
      %v2746 = vld [vmem:[%s1430 + $0x10] sm:$0xf]
      %v2747 = vld [vmem:[%s1430 + $0x14] sm:$0x1]
      %v2748 = vld [vmem:[%s1430 + $0x18] sm:$0xf]
      %v2749 = vld [vmem:[%s1430 + $0x1c] sm:$0xf]
      %v2750 = vld [vmem:[%s1430 + $0x20] sm:$0x1]
      %v2751 = vld [vmem:[%s1430 + $0x24] sm:$0xf]
      %v2752 = vld [vmem:[%s1430 + $0x28] sm:$0xf]
      %v2753 = vld [vmem:[%s1430 + $0x2c] sm:$0x1]
      %v2754 = vld [vmem:[%s1430 + $0x30] sm:$0xf]
      %v2755 = vld [vmem:[%s1430 + $0x34] sm:$0xf]
      %v2756 = vld [vmem:[%s1430 + $0x38] sm:$0x1]
      %v2757 = vld [vmem:[%s1430 + $0x3c] sm:$0xf]
      %v2758 = vld [vmem:[%s1430 + $0x40] sm:$0xf]
      %v2759 = vld [vmem:[%s1430 + $0x44] sm:$0x1]
      %v2760 = vld [vmem:[%s1430 + $0x48] sm:$0xf]
      %v2761 = vld [vmem:[%s1430 + $0x4c] sm:$0xf]
      %v2762 = vld [vmem:[%s1430 + $0x50] sm:$0x1]
      %v2763 = vld [vmem:[%s1430 + $0x54] sm:$0xf]
      %v2764 = vld [vmem:[%s1430 + $0x58] sm:$0xf]
      %v2765 = vld [vmem:[%s1430 + $0x5c] sm:$0x1]
      %v2766 = vld [vmem:[%s1430 + $0x60] sm:$0xf]
      %v2767 = vld [vmem:[%s1430 + $0x64] sm:$0xf]
      %v2768 = vld [vmem:[%s1430 + $0x68] sm:$0x1]
      %v2769 = vld [vmem:[%s1430 + $0x6c] sm:$0xf]
      %v2770 = vld [vmem:[%s1430 + $0x70] sm:$0xf]
      %v2771 = vld [vmem:[%s1430 + $0x74] sm:$0x1]
      %v2772 = vld [vmem:[%s1430 + $0x78] sm:$0xf]
      %v2773 = vld [vmem:[%s1430 + $0x7c] sm:$0xf]
      %v2774 = vld [vmem:[%s1430 + $0x80] sm:$0x1]
      %v2775 = vld [vmem:[%s1430 + $0x84] sm:$0xf]
      %v2776 = vld [vmem:[%s1430 + $0x88] sm:$0xf]
      %v2777 = vld [vmem:[%s1430 + $0x8c] sm:$0x1]
      %v2778 = vld [vmem:[%s1430 + $0x90] sm:$0xf]
      %v2779 = vld [vmem:[%s1430 + $0x94] sm:$0xf]
      %v2780 = vld [vmem:[%s1430 + $0x98] sm:$0x1]
      %v2781 = vld [vmem:[%s1430 + $0x9c] sm:$0xf]
      %v2782 = vld [vmem:[%s1430 + $0xa0] sm:$0xf]
      %v2783 = vld [vmem:[%s1430 + $0xa4] sm:$0x1]
      %v2784 = vld [vmem:[%s1430 + $0xa8] sm:$0xf]
      %v2785 = vld [vmem:[%s1430 + $0xac] sm:$0xf]
      %v2786 = vld [vmem:[%s1430 + $0xb0] sm:$0x1]
      %v2787 = vld [vmem:[%s1430 + $0xb4] sm:$0xf]
      %v2788 = vld [vmem:[%s1430 + $0xb8] sm:$0xf]
      %v2789 = vld [vmem:[%s1430 + $0xbc] sm:$0x1]
      %v2791 = vshrl.u32 %v2742, 16
      %v2793 = vrot.slane %v2791, 4
      %v2794 = vshll.u32 %v2742, 16
      %v2796 = vrot.slane %v2794, 5
      %v2797 = vor.u32 %v2793, %v2796
      %v2798 = vrot.slane %v2797, 4
      %v2800 = vshll.u32 %v2743, 16
      %v2802 = vrot.slane %v2800, 5
      %v2803 = vsel %vm1743, %v2798, %v2802
      %v2804 = vshrl.u32 %v2743, 16
      %v2806 = vrot.slane %v2804, 4
      %v2807 = vor.u32 %v2806, %v2802
      %v2808 = vrot.slane %v2807, 4
      %v2810 = vshll.u32 %v2744, 16
      %v2812 = vrot.slane %v2810, 5
      %v2813 = vsel %vm1743, %v2808, %v2812
      %v2815 = vshrl.u32 %v2745, 16
      %v2817 = vrot.slane %v2815, 4
      %v2818 = vshll.u32 %v2745, 16
      %v2820 = vrot.slane %v2818, 5
      %v2821 = vor.u32 %v2817, %v2820
      %v2822 = vrot.slane %v2821, 4
      %v2824 = vshll.u32 %v2746, 16
      %v2826 = vrot.slane %v2824, 5
      %v2827 = vsel %vm1743, %v2822, %v2826
      %v2828 = vshrl.u32 %v2746, 16
      %v2830 = vrot.slane %v2828, 4
      %v2831 = vor.u32 %v2830, %v2826
      %v2832 = vrot.slane %v2831, 4
      %v2834 = vshll.u32 %v2747, 16
      %v2836 = vrot.slane %v2834, 5
      %v2837 = vsel %vm1743, %v2832, %v2836
      %v2839 = vshrl.u32 %v2748, 16
      %v2841 = vrot.slane %v2839, 4
      %v2842 = vshll.u32 %v2748, 16
      %v2844 = vrot.slane %v2842, 5
      %v2845 = vor.u32 %v2841, %v2844
      %v2846 = vrot.slane %v2845, 4
      %v2848 = vshll.u32 %v2749, 16
      %v2850 = vrot.slane %v2848, 5
      %v2851 = vsel %vm1743, %v2846, %v2850
      %v2852 = vshrl.u32 %v2749, 16
      %v2854 = vrot.slane %v2852, 4
      %v2855 = vor.u32 %v2854, %v2850
      %v2856 = vrot.slane %v2855, 4
      %v2858 = vshll.u32 %v2750, 16
      %v2860 = vrot.slane %v2858, 5
      %v2861 = vsel %vm1743, %v2856, %v2860
      %v2863 = vshrl.u32 %v2751, 16
      %v2865 = vrot.slane %v2863, 4
      %v2866 = vshll.u32 %v2751, 16
      %v2868 = vrot.slane %v2866, 5
      %v2869 = vor.u32 %v2865, %v2868
      %v2870 = vrot.slane %v2869, 4
      %v2872 = vshll.u32 %v2752, 16
      %v2874 = vrot.slane %v2872, 5
      %v2875 = vsel %vm1743, %v2870, %v2874
      %v2876 = vshrl.u32 %v2752, 16
      %v2878 = vrot.slane %v2876, 4
      %v2879 = vor.u32 %v2878, %v2874
      %v2880 = vrot.slane %v2879, 4
      %v2882 = vshll.u32 %v2753, 16
      %v2884 = vrot.slane %v2882, 5
      %v2885 = vsel %vm1743, %v2880, %v2884
      %v2887 = vshrl.u32 %v2754, 16
      %v2889 = vrot.slane %v2887, 4
      %v2890 = vshll.u32 %v2754, 16
      %v2892 = vrot.slane %v2890, 5
      %v2893 = vor.u32 %v2889, %v2892
      %v2894 = vrot.slane %v2893, 4
      %v2896 = vshll.u32 %v2755, 16
      %v2898 = vrot.slane %v2896, 5
      %v2899 = vsel %vm1743, %v2894, %v2898
      %v2900 = vshrl.u32 %v2755, 16
      %v2902 = vrot.slane %v2900, 4
      %v2903 = vor.u32 %v2902, %v2898
      %v2904 = vrot.slane %v2903, 4
      %v2906 = vshll.u32 %v2756, 16
      %v2908 = vrot.slane %v2906, 5
      %v2909 = vsel %vm1743, %v2904, %v2908
      %v2911 = vshrl.u32 %v2757, 16
      %v2913 = vrot.slane %v2911, 4
      %v2914 = vshll.u32 %v2757, 16
      %v2916 = vrot.slane %v2914, 5
      %v2917 = vor.u32 %v2913, %v2916
      %v2918 = vrot.slane %v2917, 4
      %v2920 = vshll.u32 %v2758, 16
      %v2922 = vrot.slane %v2920, 5
      %v2923 = vsel %vm1743, %v2918, %v2922
      %v2924 = vshrl.u32 %v2758, 16
      %v2926 = vrot.slane %v2924, 4
      %v2927 = vor.u32 %v2926, %v2922
      %v2928 = vrot.slane %v2927, 4
      %v2930 = vshll.u32 %v2759, 16
      %v2932 = vrot.slane %v2930, 5
      %v2933 = vsel %vm1743, %v2928, %v2932
      %v2935 = vshrl.u32 %v2760, 16
      %v2937 = vrot.slane %v2935, 4
      %v2938 = vshll.u32 %v2760, 16
      %v2940 = vrot.slane %v2938, 5
      %v2941 = vor.u32 %v2937, %v2940
      %v2942 = vrot.slane %v2941, 4
      %v2944 = vshll.u32 %v2761, 16
      %v2946 = vrot.slane %v2944, 5
      %v2947 = vsel %vm1743, %v2942, %v2946
      %v2948 = vshrl.u32 %v2761, 16
      %v2950 = vrot.slane %v2948, 4
      %v2951 = vor.u32 %v2950, %v2946
      %v2952 = vrot.slane %v2951, 4
      %v2954 = vshll.u32 %v2762, 16
      %v2956 = vrot.slane %v2954, 5
      %v2957 = vsel %vm1743, %v2952, %v2956
      %v2959 = vshrl.u32 %v2763, 16
      %v2961 = vrot.slane %v2959, 4
      %v2962 = vshll.u32 %v2763, 16
      %v2964 = vrot.slane %v2962, 5
      %v2965 = vor.u32 %v2961, %v2964
      %v2966 = vrot.slane %v2965, 4
      %v2968 = vshll.u32 %v2764, 16
      %v2970 = vrot.slane %v2968, 5
      %v2971 = vsel %vm1743, %v2966, %v2970
      %v2972 = vshrl.u32 %v2764, 16
      %v2974 = vrot.slane %v2972, 4
      %v2975 = vor.u32 %v2974, %v2970
      %v2976 = vrot.slane %v2975, 4
      %v2978 = vshll.u32 %v2765, 16
      %v2980 = vrot.slane %v2978, 5
      %v2981 = vsel %vm1743, %v2976, %v2980
      %v2983 = vshrl.u32 %v2766, 16
      %v2985 = vrot.slane %v2983, 4
      %v2986 = vshll.u32 %v2766, 16
      %v2988 = vrot.slane %v2986, 5
      %v2989 = vor.u32 %v2985, %v2988
      %v2990 = vrot.slane %v2989, 4
      %v2992 = vshll.u32 %v2767, 16
      %v2994 = vrot.slane %v2992, 5
      %v2995 = vsel %vm1743, %v2990, %v2994
      %v2996 = vshrl.u32 %v2767, 16
      %v2998 = vrot.slane %v2996, 4
      %v2999 = vor.u32 %v2998, %v2994
      %v3000 = vrot.slane %v2999, 4
      %v3002 = vshll.u32 %v2768, 16
      %v3004 = vrot.slane %v3002, 5
      %v3005 = vsel %vm1743, %v3000, %v3004
      %v3007 = vshrl.u32 %v2769, 16
      %v3009 = vrot.slane %v3007, 4
      %v3010 = vshll.u32 %v2769, 16
      %v3012 = vrot.slane %v3010, 5
      %v3013 = vor.u32 %v3009, %v3012
      %v3014 = vrot.slane %v3013, 4
      %v3016 = vshll.u32 %v2770, 16
      %v3018 = vrot.slane %v3016, 5
      %v3019 = vsel %vm1743, %v3014, %v3018
      %v3020 = vshrl.u32 %v2770, 16
      %v3022 = vrot.slane %v3020, 4
      %v3023 = vor.u32 %v3022, %v3018
      %v3024 = vrot.slane %v3023, 4
      %v3026 = vshll.u32 %v2771, 16
      %v3028 = vrot.slane %v3026, 5
      %v3029 = vsel %vm1743, %v3024, %v3028
      %v3031 = vshrl.u32 %v2772, 16
      %v3033 = vrot.slane %v3031, 4
      %v3034 = vshll.u32 %v2772, 16
      %v3036 = vrot.slane %v3034, 5
      %v3037 = vor.u32 %v3033, %v3036
      %v3038 = vrot.slane %v3037, 4
      %v3040 = vshll.u32 %v2773, 16
      %v3042 = vrot.slane %v3040, 5
      %v3043 = vsel %vm1743, %v3038, %v3042
      %v3044 = vshrl.u32 %v2773, 16
      %v3046 = vrot.slane %v3044, 4
      %v3047 = vor.u32 %v3046, %v3042
      %v3048 = vrot.slane %v3047, 4
      %v3050 = vshll.u32 %v2774, 16
      %v3052 = vrot.slane %v3050, 5
      %v3053 = vsel %vm1743, %v3048, %v3052
      %v3055 = vshrl.u32 %v2775, 16
      %v3057 = vrot.slane %v3055, 4
      %v3058 = vshll.u32 %v2775, 16
      %v3060 = vrot.slane %v3058, 5
      %v3061 = vor.u32 %v3057, %v3060
      %v3062 = vrot.slane %v3061, 4
      %v3064 = vshll.u32 %v2776, 16
      %v3066 = vrot.slane %v3064, 5
      %v3067 = vsel %vm1743, %v3062, %v3066
      %v3068 = vshrl.u32 %v2776, 16
      %v3070 = vrot.slane %v3068, 4
      %v3071 = vor.u32 %v3070, %v3066
      %v3072 = vrot.slane %v3071, 4
      %v3074 = vshll.u32 %v2777, 16
      %v3076 = vrot.slane %v3074, 5
      %v3077 = vsel %vm1743, %v3072, %v3076
      %v3079 = vshrl.u32 %v2778, 16
      %v3081 = vrot.slane %v3079, 4
      %v3082 = vshll.u32 %v2778, 16
      %v3084 = vrot.slane %v3082, 5
      %v3085 = vor.u32 %v3081, %v3084
      %v3086 = vrot.slane %v3085, 4
      %v3088 = vshll.u32 %v2779, 16
      %v3090 = vrot.slane %v3088, 5
      %v3091 = vsel %vm1743, %v3086, %v3090
      %v3092 = vshrl.u32 %v2779, 16
      %v3094 = vrot.slane %v3092, 4
      %v3095 = vor.u32 %v3094, %v3090
      %v3096 = vrot.slane %v3095, 4
      %v3098 = vshll.u32 %v2780, 16
      %v3100 = vrot.slane %v3098, 5
      %v3101 = vsel %vm1743, %v3096, %v3100
      %v3103 = vshrl.u32 %v2781, 16
      %v3105 = vrot.slane %v3103, 4
      %v3106 = vshll.u32 %v2781, 16
      %v3108 = vrot.slane %v3106, 5
      %v3109 = vor.u32 %v3105, %v3108
      %v3110 = vrot.slane %v3109, 4
      %v3112 = vshll.u32 %v2782, 16
      %v3114 = vrot.slane %v3112, 5
      %v3115 = vsel %vm1743, %v3110, %v3114
      %v3116 = vshrl.u32 %v2782, 16
      %v3118 = vrot.slane %v3116, 4
      %v3119 = vor.u32 %v3118, %v3114
      %v3120 = vrot.slane %v3119, 4
      %v3122 = vshll.u32 %v2783, 16
      %v3124 = vrot.slane %v3122, 5
      %v3125 = vsel %vm1743, %v3120, %v3124
      %v3127 = vshrl.u32 %v2784, 16
      %v3129 = vrot.slane %v3127, 4
      %v3130 = vshll.u32 %v2784, 16
      %v3132 = vrot.slane %v3130, 5
      %v3133 = vor.u32 %v3129, %v3132
      %v3134 = vrot.slane %v3133, 4
      %v3136 = vshll.u32 %v2785, 16
      %v3138 = vrot.slane %v3136, 5
      %v3139 = vsel %vm1743, %v3134, %v3138
      %v3140 = vshrl.u32 %v2785, 16
      %v3142 = vrot.slane %v3140, 4
      %v3143 = vor.u32 %v3142, %v3138
      %v3144 = vrot.slane %v3143, 4
      %v3146 = vshll.u32 %v2786, 16
      %v3148 = vrot.slane %v3146, 5
      %v3149 = vsel %vm1743, %v3144, %v3148
      %v3151 = vshrl.u32 %v2787, 16
      %v3153 = vrot.slane %v3151, 4
      %v3154 = vshll.u32 %v2787, 16
      %v3156 = vrot.slane %v3154, 5
      %v3157 = vor.u32 %v3153, %v3156
      %v3158 = vrot.slane %v3157, 4
      %v3160 = vshll.u32 %v2788, 16
      %v3162 = vrot.slane %v3160, 5
      %v3163 = vsel %vm1743, %v3158, %v3162
      %v3164 = vshrl.u32 %v2788, 16
      %v3166 = vrot.slane %v3164, 4
      %v3167 = vor.u32 %v3166, %v3162
      %v3168 = vrot.slane %v3167, 4
      %v3170 = vshll.u32 %v2789, 16
      %v3172 = vrot.slane %v3170, 5
      %v3173 = vsel %vm1743, %v3168, %v3172
      %v3174 = vunpack.c.l.b16 %v2803
      %v3175 = vunpack.c.l.b16 %v2813
      %v3176 = vunpack.c.l.b16 %v2827
      %v3177 = vunpack.c.l.b16 %v2837
      %v3178 = vunpack.c.l.b16 %v2851
      %v3179 = vunpack.c.l.b16 %v2861
      %v3180 = vunpack.c.l.b16 %v2875
      %v3181 = vunpack.c.l.b16 %v2885
      %v3182 = vunpack.c.l.b16 %v2899
      %v3183 = vunpack.c.l.b16 %v2909
      %v3184 = vunpack.c.l.b16 %v2923
      %v3185 = vunpack.c.l.b16 %v2933
      %v3186 = vunpack.c.l.b16 %v2947
      %v3187 = vunpack.c.l.b16 %v2957
      %v3188 = vunpack.c.l.b16 %v2971
      %v3189 = vunpack.c.l.b16 %v2981
      %v3190 = vunpack.c.l.b16 %v2995
      %v3191 = vunpack.c.l.b16 %v3005
      %v3192 = vunpack.c.l.b16 %v3019
      %v3193 = vunpack.c.l.b16 %v3029
      %v3194 = vunpack.c.l.b16 %v3043
      %v3195 = vunpack.c.l.b16 %v3053
      %v3196 = vunpack.c.l.b16 %v3067
      %v3197 = vunpack.c.l.b16 %v3077
      %v3198 = vunpack.c.l.b16 %v3091
      %v3199 = vunpack.c.l.b16 %v3101
      %v3200 = vunpack.c.l.b16 %v3115
      %v3201 = vunpack.c.l.b16 %v3125
      %v3202 = vunpack.c.l.b16 %v3139
      %v3203 = vunpack.c.l.b16 %v3149
      %v3204 = vunpack.c.l.b16 %v3163
      %v3205 = vunpack.c.l.b16 %v3173
      %v3206 = vpack.c.b16 %v3175, %v3174
      %v3207 = vpack.c.b16 %v3177, %v3176
      %v3208 = vpack.c.b16 %v3179, %v3178
      %v3209 = vpack.c.b16 %v3181, %v3180
      %v3210 = vpack.c.b16 %v3183, %v3182
      %v3211 = vpack.c.b16 %v3185, %v3184
      %v3212 = vpack.c.b16 %v3187, %v3186
      %v3213 = vpack.c.b16 %v3189, %v3188
      %v3214 = vpack.c.b16 %v3191, %v3190
      %v3215 = vpack.c.b16 %v3193, %v3192
      %v3216 = vpack.c.b16 %v3195, %v3194
      %v3217 = vpack.c.b16 %v3197, %v3196
      %v3218 = vpack.c.b16 %v3199, %v3198
      %v3219 = vpack.c.b16 %v3201, %v3200
      %v3220 = vpack.c.b16 %v3203, %v3202
      %v3221 = vpack.c.b16 %v3205, %v3204
      %3222 = vrot.lane.b32.xlu0 %v3206, 16
      %v3223 = vpop.permute.xlu0 %3222
      %3224 = vrot.lane.b32.xlu0 %v3207, 16
      %v3225 = vpop.permute.xlu0 %3224
      %3226 = vrot.lane.b32.xlu0 %v3208, 16
      %v3227 = vpop.permute.xlu0 %3226
      %3228 = vrot.lane.b32.xlu0 %v3209, 16
      %v3229 = vpop.permute.xlu0 %3228
      %3230 = vrot.lane.b32.xlu0 %v3210, 16
      %v3231 = vpop.permute.xlu0 %3230
      %3232 = vrot.lane.b32.xlu0 %v3211, 16
      %v3233 = vpop.permute.xlu0 %3232
      %3234 = vrot.lane.b32.xlu0 %v3212, 16
      %v3235 = vpop.permute.xlu0 %3234
      %3236 = vrot.lane.b32.xlu0 %v3213, 16
      %v3237 = vpop.permute.xlu0 %3236
      %3238 = vrot.lane.b32.xlu0 %v3214, 16
      %v3239 = vpop.permute.xlu0 %3238
      %3240 = vrot.lane.b32.xlu0 %v3215, 16
      %v3241 = vpop.permute.xlu0 %3240
      %3242 = vrot.lane.b32.xlu0 %v3216, 16
      %v3243 = vpop.permute.xlu0 %3242
      %3244 = vrot.lane.b32.xlu0 %v3217, 16
      %v3245 = vpop.permute.xlu0 %3244
      %3246 = vrot.lane.b32.xlu0 %v3218, 16
      %v3247 = vpop.permute.xlu0 %3246
      %3248 = vrot.lane.b32.xlu0 %v3219, 16
      %v3249 = vpop.permute.xlu0 %3248
      %3250 = vrot.lane.b32.xlu0 %v3220, 16
      %v3251 = vpop.permute.xlu0 %3250
      %3252 = vrot.lane.b32.xlu0 %v3221, 16
      %v3253 = vpop.permute.xlu0 %3252
      %vm3270 = vcmask 162944
      %3271 = vst.msk [vmem:[#allocation3] sm:$0xff] %vm3270, %v3223
      %3272 = vst.msk [vmem:[#allocation3 + $0x8] sm:$0xff] %vm3270, %v3225
      %3273 = vst.msk [vmem:[#allocation3 + $0x10] sm:$0xff] %vm3270, %v3227
      %3274 = vst.msk [vmem:[#allocation3 + $0x18] sm:$0xff] %vm3270, %v3229
      %3275 = vst.msk [vmem:[#allocation3 + $0x20] sm:$0xff] %vm3270, %v3231
      %3276 = vst.msk [vmem:[#allocation3 + $0x28] sm:$0xff] %vm3270, %v3233
      %3277 = vst.msk [vmem:[#allocation3 + $0x30] sm:$0xff] %vm3270, %v3235
      %3278 = vst.msk [vmem:[#allocation3 + $0x38] sm:$0xff] %vm3270, %v3237
      %3279 = vst.msk [vmem:[#allocation3 + $0x40] sm:$0xff] %vm3270, %v3239
      %3280 = vst.msk [vmem:[#allocation3 + $0x48] sm:$0xff] %vm3270, %v3241
      %3281 = vst.msk [vmem:[#allocation3 + $0x50] sm:$0xff] %vm3270, %v3243
      %3282 = vst.msk [vmem:[#allocation3 + $0x58] sm:$0xff] %vm3270, %v3245
      %3283 = vst.msk [vmem:[#allocation3 + $0x60] sm:$0xff] %vm3270, %v3247
      %3284 = vst.msk [vmem:[#allocation3 + $0x68] sm:$0xff] %vm3270, %v3249
      %3285 = vst.msk [vmem:[#allocation3 + $0x70] sm:$0xff] %vm3270, %v3251
      %3286 = vst.msk [vmem:[#allocation3 + $0x78] sm:$0xff] %vm3270, %v3253
      %v3287 = vld [vmem:[%s1430] sm:$0xe]
      %v3288 = vld [vmem:[%s1430 + $0x4] sm:$0xf]
      %v3289 = vld [vmem:[%s1430 + $0x8] sm:$0x1]
      %v3290 = vld [vmem:[%s1430 + $0xc] sm:$0xe]
      %v3291 = vld [vmem:[%s1430 + $0x10] sm:$0xf]
      %v3292 = vld [vmem:[%s1430 + $0x14] sm:$0x1]
      %v3293 = vld [vmem:[%s1430 + $0x18] sm:$0xe]
      %v3294 = vld [vmem:[%s1430 + $0x1c] sm:$0xf]
      %v3295 = vld [vmem:[%s1430 + $0x20] sm:$0x1]
      %v3296 = vld [vmem:[%s1430 + $0x24] sm:$0xe]
      %v3297 = vld [vmem:[%s1430 + $0x28] sm:$0xf]
      %v3298 = vld [vmem:[%s1430 + $0x2c] sm:$0x1]
      %v3299 = vld [vmem:[%s1430 + $0x30] sm:$0xe]
      %v3300 = vld [vmem:[%s1430 + $0x34] sm:$0xf]
      %v3301 = vld [vmem:[%s1430 + $0x38] sm:$0x1]
      %v3302 = vld [vmem:[%s1430 + $0x3c] sm:$0xe]
      %v3303 = vld [vmem:[%s1430 + $0x40] sm:$0xf]
      %v3304 = vld [vmem:[%s1430 + $0x44] sm:$0x1]
      %v3305 = vld [vmem:[%s1430 + $0x48] sm:$0xe]
      %v3306 = vld [vmem:[%s1430 + $0x4c] sm:$0xf]
      %v3307 = vld [vmem:[%s1430 + $0x50] sm:$0x1]
      %v3308 = vld [vmem:[%s1430 + $0x54] sm:$0xe]
      %v3309 = vld [vmem:[%s1430 + $0x58] sm:$0xf]
      %v3310 = vld [vmem:[%s1430 + $0x5c] sm:$0x1]
      %v3311 = vld [vmem:[%s1430 + $0x60] sm:$0xe]
      %v3312 = vld [vmem:[%s1430 + $0x64] sm:$0xf]
      %v3313 = vld [vmem:[%s1430 + $0x68] sm:$0x1]
      %v3314 = vld [vmem:[%s1430 + $0x6c] sm:$0xe]
      %v3315 = vld [vmem:[%s1430 + $0x70] sm:$0xf]
      %v3316 = vld [vmem:[%s1430 + $0x74] sm:$0x1]
      %v3317 = vld [vmem:[%s1430 + $0x78] sm:$0xe]
      %v3318 = vld [vmem:[%s1430 + $0x7c] sm:$0xf]
      %v3319 = vld [vmem:[%s1430 + $0x80] sm:$0x1]
      %v3320 = vld [vmem:[%s1430 + $0x84] sm:$0xe]
      %v3321 = vld [vmem:[%s1430 + $0x88] sm:$0xf]
      %v3322 = vld [vmem:[%s1430 + $0x8c] sm:$0x1]
      %v3323 = vld [vmem:[%s1430 + $0x90] sm:$0xe]
      %v3324 = vld [vmem:[%s1430 + $0x94] sm:$0xf]
      %v3325 = vld [vmem:[%s1430 + $0x98] sm:$0x1]
      %v3326 = vld [vmem:[%s1430 + $0x9c] sm:$0xe]
      %v3327 = vld [vmem:[%s1430 + $0xa0] sm:$0xf]
      %v3328 = vld [vmem:[%s1430 + $0xa4] sm:$0x1]
      %v3329 = vld [vmem:[%s1430 + $0xa8] sm:$0xe]
      %v3330 = vld [vmem:[%s1430 + $0xac] sm:$0xf]
      %v3331 = vld [vmem:[%s1430 + $0xb0] sm:$0x1]
      %v3332 = vld [vmem:[%s1430 + $0xb4] sm:$0xe]
      %v3333 = vld [vmem:[%s1430 + $0xb8] sm:$0xf]
      %v3334 = vld [vmem:[%s1430 + $0xbc] sm:$0x1]
      %v3383 = vrot.slane %v3287, 5
      %v3384 = vrot.slane %v3383, 4
      %v3385 = vrot.slane %v3288, 5
      %v3386 = vsel %vm2339, %v3384, %v3385
      %v3387 = vrot.slane %v3385, 4
      %v3388 = vrot.slane %v3289, 5
      %v3389 = vsel %vm2339, %v3387, %v3388
      %v3390 = vrot.slane %v3290, 5
      %v3391 = vrot.slane %v3390, 4
      %v3392 = vrot.slane %v3291, 5
      %v3393 = vsel %vm2339, %v3391, %v3392
      %v3394 = vrot.slane %v3392, 4
      %v3395 = vrot.slane %v3292, 5
      %v3396 = vsel %vm2339, %v3394, %v3395
      %v3397 = vrot.slane %v3293, 5
      %v3398 = vrot.slane %v3397, 4
      %v3399 = vrot.slane %v3294, 5
      %v3400 = vsel %vm2339, %v3398, %v3399
      %v3401 = vrot.slane %v3399, 4
      %v3402 = vrot.slane %v3295, 5
      %v3403 = vsel %vm2339, %v3401, %v3402
      %v3404 = vrot.slane %v3296, 5
      %v3405 = vrot.slane %v3404, 4
      %v3406 = vrot.slane %v3297, 5
      %v3407 = vsel %vm2339, %v3405, %v3406
      %v3408 = vrot.slane %v3406, 4
      %v3409 = vrot.slane %v3298, 5
      %v3410 = vsel %vm2339, %v3408, %v3409
      %v3411 = vrot.slane %v3299, 5
      %v3412 = vrot.slane %v3411, 4
      %v3413 = vrot.slane %v3300, 5
      %v3414 = vsel %vm2339, %v3412, %v3413
      %v3415 = vrot.slane %v3413, 4
      %v3416 = vrot.slane %v3301, 5
      %v3417 = vsel %vm2339, %v3415, %v3416
      %v3418 = vrot.slane %v3302, 5
      %v3419 = vrot.slane %v3418, 4
      %v3420 = vrot.slane %v3303, 5
      %v3421 = vsel %vm2339, %v3419, %v3420
      %v3422 = vrot.slane %v3420, 4
      %v3423 = vrot.slane %v3304, 5
      %v3424 = vsel %vm2339, %v3422, %v3423
      %v3425 = vrot.slane %v3305, 5
      %v3426 = vrot.slane %v3425, 4
      %v3427 = vrot.slane %v3306, 5
      %v3428 = vsel %vm2339, %v3426, %v3427
      %v3429 = vrot.slane %v3427, 4
      %v3430 = vrot.slane %v3307, 5
      %v3431 = vsel %vm2339, %v3429, %v3430
      %v3432 = vrot.slane %v3308, 5
      %v3433 = vrot.slane %v3432, 4
      %v3434 = vrot.slane %v3309, 5
      %v3435 = vsel %vm2339, %v3433, %v3434
      %v3436 = vrot.slane %v3434, 4
      %v3437 = vrot.slane %v3310, 5
      %v3438 = vsel %vm2339, %v3436, %v3437
      %v3439 = vrot.slane %v3311, 5
      %v3440 = vrot.slane %v3439, 4
      %v3441 = vrot.slane %v3312, 5
      %v3442 = vsel %vm2339, %v3440, %v3441
      %v3443 = vrot.slane %v3441, 4
      %v3444 = vrot.slane %v3313, 5
      %v3445 = vsel %vm2339, %v3443, %v3444
      %v3446 = vrot.slane %v3314, 5
      %v3447 = vrot.slane %v3446, 4
      %v3448 = vrot.slane %v3315, 5
      %v3449 = vsel %vm2339, %v3447, %v3448
      %v3450 = vrot.slane %v3448, 4
      %v3451 = vrot.slane %v3316, 5
      %v3452 = vsel %vm2339, %v3450, %v3451
      %v3453 = vrot.slane %v3317, 5
      %v3454 = vrot.slane %v3453, 4
      %v3455 = vrot.slane %v3318, 5
      %v3456 = vsel %vm2339, %v3454, %v3455
      %v3457 = vrot.slane %v3455, 4
      %v3458 = vrot.slane %v3319, 5
      %v3459 = vsel %vm2339, %v3457, %v3458
      %v3460 = vrot.slane %v3320, 5
      %v3461 = vrot.slane %v3460, 4
      %v3462 = vrot.slane %v3321, 5
      %v3463 = vsel %vm2339, %v3461, %v3462
      %v3464 = vrot.slane %v3462, 4
      %v3465 = vrot.slane %v3322, 5
      %v3466 = vsel %vm2339, %v3464, %v3465
      %v3467 = vrot.slane %v3323, 5
      %v3468 = vrot.slane %v3467, 4
      %v3469 = vrot.slane %v3324, 5
      %v3470 = vsel %vm2339, %v3468, %v3469
      %v3471 = vrot.slane %v3469, 4
      %v3472 = vrot.slane %v3325, 5
      %v3473 = vsel %vm2339, %v3471, %v3472
      %v3474 = vrot.slane %v3326, 5
      %v3475 = vrot.slane %v3474, 4
      %v3476 = vrot.slane %v3327, 5
      %v3477 = vsel %vm2339, %v3475, %v3476
      %v3478 = vrot.slane %v3476, 4
      %v3479 = vrot.slane %v3328, 5
      %v3480 = vsel %vm2339, %v3478, %v3479
      %v3481 = vrot.slane %v3329, 5
      %v3482 = vrot.slane %v3481, 4
      %v3483 = vrot.slane %v3330, 5
      %v3484 = vsel %vm2339, %v3482, %v3483
      %v3485 = vrot.slane %v3483, 4
      %v3486 = vrot.slane %v3331, 5
      %v3487 = vsel %vm2339, %v3485, %v3486
      %v3488 = vrot.slane %v3332, 5
      %v3489 = vrot.slane %v3488, 4
      %v3490 = vrot.slane %v3333, 5
      %v3491 = vsel %vm2339, %v3489, %v3490
      %v3492 = vrot.slane %v3490, 4
      %v3493 = vrot.slane %v3334, 5
      %v3494 = vsel %vm2339, %v3492, %v3493
      %v3495 = vunpack.c.l.b16 %v3386
      %v3496 = vunpack.c.l.b16 %v3389
      %v3497 = vunpack.c.l.b16 %v3393
      %v3498 = vunpack.c.l.b16 %v3396
      %v3499 = vunpack.c.l.b16 %v3400
      %v3500 = vunpack.c.l.b16 %v3403
      %v3501 = vunpack.c.l.b16 %v3407
      %v3502 = vunpack.c.l.b16 %v3410
      %v3503 = vunpack.c.l.b16 %v3414
      %v3504 = vunpack.c.l.b16 %v3417
      %v3505 = vunpack.c.l.b16 %v3421
      %v3506 = vunpack.c.l.b16 %v3424
      %v3507 = vunpack.c.l.b16 %v3428
      %v3508 = vunpack.c.l.b16 %v3431
      %v3509 = vunpack.c.l.b16 %v3435
      %v3510 = vunpack.c.l.b16 %v3438
      %v3511 = vunpack.c.l.b16 %v3442
      %v3512 = vunpack.c.l.b16 %v3445
      %v3513 = vunpack.c.l.b16 %v3449
      %v3514 = vunpack.c.l.b16 %v3452
      %v3515 = vunpack.c.l.b16 %v3456
      %v3516 = vunpack.c.l.b16 %v3459
      %v3517 = vunpack.c.l.b16 %v3463
      %v3518 = vunpack.c.l.b16 %v3466
      %v3519 = vunpack.c.l.b16 %v3470
      %v3520 = vunpack.c.l.b16 %v3473
      %v3521 = vunpack.c.l.b16 %v3477
      %v3522 = vunpack.c.l.b16 %v3480
      %v3523 = vunpack.c.l.b16 %v3484
      %v3524 = vunpack.c.l.b16 %v3487
      %v3525 = vunpack.c.l.b16 %v3491
      %v3526 = vunpack.c.l.b16 %v3494
      %v3527 = vpack.c.b16 %v3496, %v3495
      %v3528 = vpack.c.b16 %v3498, %v3497
      %v3529 = vpack.c.b16 %v3500, %v3499
      %v3530 = vpack.c.b16 %v3502, %v3501
      %v3531 = vpack.c.b16 %v3504, %v3503
      %v3532 = vpack.c.b16 %v3506, %v3505
      %v3533 = vpack.c.b16 %v3508, %v3507
      %v3534 = vpack.c.b16 %v3510, %v3509
      %v3535 = vpack.c.b16 %v3512, %v3511
      %v3536 = vpack.c.b16 %v3514, %v3513
      %v3537 = vpack.c.b16 %v3516, %v3515
      %v3538 = vpack.c.b16 %v3518, %v3517
      %v3539 = vpack.c.b16 %v3520, %v3519
      %v3540 = vpack.c.b16 %v3522, %v3521
      %v3541 = vpack.c.b16 %v3524, %v3523
      %v3542 = vpack.c.b16 %v3526, %v3525
      %3543 = vrot.lane.b32.xlu0 %v3527, 20
      %v3544 = vpop.permute.xlu0 %3543
      %3545 = vrot.lane.b32.xlu0 %v3528, 20
      %v3546 = vpop.permute.xlu0 %3545
      %3547 = vrot.lane.b32.xlu0 %v3529, 20
      %v3548 = vpop.permute.xlu0 %3547
      %3549 = vrot.lane.b32.xlu0 %v3530, 20
      %v3550 = vpop.permute.xlu0 %3549
      %3551 = vrot.lane.b32.xlu0 %v3531, 20
      %v3552 = vpop.permute.xlu0 %3551
      %3553 = vrot.lane.b32.xlu0 %v3532, 20
      %v3554 = vpop.permute.xlu0 %3553
      %3555 = vrot.lane.b32.xlu0 %v3533, 20
      %v3556 = vpop.permute.xlu0 %3555
      %3557 = vrot.lane.b32.xlu0 %v3534, 20
      %v3558 = vpop.permute.xlu0 %3557
      %3559 = vrot.lane.b32.xlu0 %v3535, 20
      %v3560 = vpop.permute.xlu0 %3559
      %3561 = vrot.lane.b32.xlu0 %v3536, 20
      %v3562 = vpop.permute.xlu0 %3561
      %3563 = vrot.lane.b32.xlu0 %v3537, 20
      %v3564 = vpop.permute.xlu0 %3563
      %3565 = vrot.lane.b32.xlu0 %v3538, 20
      %v3566 = vpop.permute.xlu0 %3565
      %3567 = vrot.lane.b32.xlu0 %v3539, 20
      %v3568 = vpop.permute.xlu0 %3567
      %3569 = vrot.lane.b32.xlu0 %v3540, 20
      %v3570 = vpop.permute.xlu0 %3569
      %3571 = vrot.lane.b32.xlu0 %v3541, 20
      %v3572 = vpop.permute.xlu0 %3571
      %3573 = vrot.lane.b32.xlu0 %v3542, 20
      %v3574 = vpop.permute.xlu0 %3573
      %vm3591 = vcmask 195744
      %3592 = vst.msk [vmem:[#allocation3] sm:$0xff] %vm3591, %v3544
      %3593 = vst.msk [vmem:[#allocation3 + $0x8] sm:$0xff] %vm3591, %v3546
      %3594 = vst.msk [vmem:[#allocation3 + $0x10] sm:$0xff] %vm3591, %v3548
      %3595 = vst.msk [vmem:[#allocation3 + $0x18] sm:$0xff] %vm3591, %v3550
      %3596 = vst.msk [vmem:[#allocation3 + $0x20] sm:$0xff] %vm3591, %v3552
      %3597 = vst.msk [vmem:[#allocation3 + $0x28] sm:$0xff] %vm3591, %v3554
      %3598 = vst.msk [vmem:[#allocation3 + $0x30] sm:$0xff] %vm3591, %v3556
      %3599 = vst.msk [vmem:[#allocation3 + $0x38] sm:$0xff] %vm3591, %v3558
      %3600 = vst.msk [vmem:[#allocation3 + $0x40] sm:$0xff] %vm3591, %v3560
      %3601 = vst.msk [vmem:[#allocation3 + $0x48] sm:$0xff] %vm3591, %v3562
      %3602 = vst.msk [vmem:[#allocation3 + $0x50] sm:$0xff] %vm3591, %v3564
      %3603 = vst.msk [vmem:[#allocation3 + $0x58] sm:$0xff] %vm3591, %v3566
      %3604 = vst.msk [vmem:[#allocation3 + $0x60] sm:$0xff] %vm3591, %v3568
      %3605 = vst.msk [vmem:[#allocation3 + $0x68] sm:$0xff] %vm3591, %v3570
      %3606 = vst.msk [vmem:[#allocation3 + $0x70] sm:$0xff] %vm3591, %v3572
      %3607 = vst.msk [vmem:[#allocation3 + $0x78] sm:$0xff] %vm3591, %v3574
      %s3608 = scalar_lea.vmem [#allocation2], 24
      %v3609 = vld [vmem:[%s3608] sm:$0xf]
      %v3610 = vld [vmem:[%s3608 + $0x4] sm:$0xf]
      %v3611 = vld [vmem:[%s3608 + $0xc] sm:$0xf]
      %v3612 = vld [vmem:[%s3608 + $0x10] sm:$0xf]
      %v3613 = vld [vmem:[%s3608 + $0x18] sm:$0xf]
      %v3614 = vld [vmem:[%s3608 + $0x1c] sm:$0xf]
      %v3615 = vld [vmem:[%s3608 + $0x24] sm:$0xf]
      %v3616 = vld [vmem:[%s3608 + $0x28] sm:$0xf]
      %v3617 = vld [vmem:[%s3608 + $0x30] sm:$0xf]
      %v3618 = vld [vmem:[%s3608 + $0x34] sm:$0xf]
      %v3619 = vld [vmem:[%s3608 + $0x3c] sm:$0xf]
      %v3620 = vld [vmem:[%s3608 + $0x40] sm:$0xf]
      %v3621 = vld [vmem:[%s3608 + $0x48] sm:$0xf]
      %v3622 = vld [vmem:[%s3608 + $0x4c] sm:$0xf]
      %v3623 = vld [vmem:[%s3608 + $0x54] sm:$0xf]
      %v3624 = vld [vmem:[%s3608 + $0x58] sm:$0xf]
      %v3625 = vld [vmem:[%s3608 + $0x60] sm:$0xf]
      %v3626 = vld [vmem:[%s3608 + $0x64] sm:$0xf]
      %v3627 = vld [vmem:[%s3608 + $0x6c] sm:$0xf]
      %v3628 = vld [vmem:[%s3608 + $0x70] sm:$0xf]
      %v3629 = vld [vmem:[%s3608 + $0x78] sm:$0xf]
      %v3630 = vld [vmem:[%s3608 + $0x7c] sm:$0xf]
      %v3631 = vld [vmem:[%s3608 + $0x84] sm:$0xf]
      %v3632 = vld [vmem:[%s3608 + $0x88] sm:$0xf]
      %v3633 = vld [vmem:[%s3608 + $0x90] sm:$0xf]
      %v3634 = vld [vmem:[%s3608 + $0x94] sm:$0xf]
      %v3635 = vld [vmem:[%s3608 + $0x9c] sm:$0xf]
      %v3636 = vld [vmem:[%s3608 + $0xa0] sm:$0xf]
      %v3637 = vld [vmem:[%s3608 + $0xa8] sm:$0xf]
      %v3638 = vld [vmem:[%s3608 + $0xac] sm:$0xf]
      %v3639 = vld [vmem:[%s3608 + $0xb4] sm:$0xf]
      %v3640 = vld [vmem:[%s3608 + $0xb8] sm:$0xf]
      %v3673 = vunpack.c.l.b16 %v3609
      %v3674 = vunpack.c.l.b16 %v3610
      %v3675 = vunpack.c.l.b16 %v3611
      %v3676 = vunpack.c.l.b16 %v3612
      %v3677 = vunpack.c.l.b16 %v3613
      %v3678 = vunpack.c.l.b16 %v3614
      %v3679 = vunpack.c.l.b16 %v3615
      %v3680 = vunpack.c.l.b16 %v3616
      %v3681 = vunpack.c.l.b16 %v3617
      %v3682 = vunpack.c.l.b16 %v3618
      %v3683 = vunpack.c.l.b16 %v3619
      %v3684 = vunpack.c.l.b16 %v3620
      %v3685 = vunpack.c.l.b16 %v3621
      %v3686 = vunpack.c.l.b16 %v3622
      %v3687 = vunpack.c.l.b16 %v3623
      %v3688 = vunpack.c.l.b16 %v3624
      %v3689 = vunpack.c.l.b16 %v3625
      %v3690 = vunpack.c.l.b16 %v3626
      %v3691 = vunpack.c.l.b16 %v3627
      %v3692 = vunpack.c.l.b16 %v3628
      %v3693 = vunpack.c.l.b16 %v3629
      %v3694 = vunpack.c.l.b16 %v3630
      %v3695 = vunpack.c.l.b16 %v3631
      %v3696 = vunpack.c.l.b16 %v3632
      %v3697 = vunpack.c.l.b16 %v3633
      %v3698 = vunpack.c.l.b16 %v3634
      %v3699 = vunpack.c.l.b16 %v3635
      %v3700 = vunpack.c.l.b16 %v3636
      %v3701 = vunpack.c.l.b16 %v3637
      %v3702 = vunpack.c.l.b16 %v3638
      %v3703 = vunpack.c.l.b16 %v3639
      %v3704 = vunpack.c.l.b16 %v3640
      %v3705 = vpack.c.b16 %v3674, %v3673
      %v3706 = vpack.c.b16 %v3676, %v3675
      %v3707 = vpack.c.b16 %v3678, %v3677
      %v3708 = vpack.c.b16 %v3680, %v3679
      %v3709 = vpack.c.b16 %v3682, %v3681
      %v3710 = vpack.c.b16 %v3684, %v3683
      %v3711 = vpack.c.b16 %v3686, %v3685
      %v3712 = vpack.c.b16 %v3688, %v3687
      %v3713 = vpack.c.b16 %v3690, %v3689
      %v3714 = vpack.c.b16 %v3692, %v3691
      %v3715 = vpack.c.b16 %v3694, %v3693
      %v3716 = vpack.c.b16 %v3696, %v3695
      %v3717 = vpack.c.b16 %v3698, %v3697
      %v3718 = vpack.c.b16 %v3700, %v3699
      %v3719 = vpack.c.b16 %v3702, %v3701
      %v3720 = vpack.c.b16 %v3704, %v3703
      %3721 = vrot.lane.b32.xlu0 %v3705, 24
      %v3722 = vpop.permute.xlu0 %3721
      %3723 = vrot.lane.b32.xlu0 %v3706, 24
      %v3724 = vpop.permute.xlu0 %3723
      %3725 = vrot.lane.b32.xlu0 %v3707, 24
      %v3726 = vpop.permute.xlu0 %3725
      %3727 = vrot.lane.b32.xlu0 %v3708, 24
      %v3728 = vpop.permute.xlu0 %3727
      %3729 = vrot.lane.b32.xlu0 %v3709, 24
      %v3730 = vpop.permute.xlu0 %3729
      %3731 = vrot.lane.b32.xlu0 %v3710, 24
      %v3732 = vpop.permute.xlu0 %3731
      %3733 = vrot.lane.b32.xlu0 %v3711, 24
      %v3734 = vpop.permute.xlu0 %3733
      %3735 = vrot.lane.b32.xlu0 %v3712, 24
      %v3736 = vpop.permute.xlu0 %3735
      %3737 = vrot.lane.b32.xlu0 %v3713, 24
      %v3738 = vpop.permute.xlu0 %3737
      %3739 = vrot.lane.b32.xlu0 %v3714, 24
      %v3740 = vpop.permute.xlu0 %3739
      %3741 = vrot.lane.b32.xlu0 %v3715, 24
      %v3742 = vpop.permute.xlu0 %3741
      %3743 = vrot.lane.b32.xlu0 %v3716, 24
      %v3744 = vpop.permute.xlu0 %3743
      %3745 = vrot.lane.b32.xlu0 %v3717, 24
      %v3746 = vpop.permute.xlu0 %3745
      %3747 = vrot.lane.b32.xlu0 %v3718, 24
      %v3748 = vpop.permute.xlu0 %3747
      %3749 = vrot.lane.b32.xlu0 %v3719, 24
      %v3750 = vpop.permute.xlu0 %3749
      %3751 = vrot.lane.b32.xlu0 %v3720, 24
      %v3752 = vpop.permute.xlu0 %3751
      %vm3769 = vcmask 228544
      %3770 = vst.msk [vmem:[#allocation3] sm:$0xff] %vm3769, %v3722
      %3771 = vst.msk [vmem:[#allocation3 + $0x8] sm:$0xff] %vm3769, %v3724
      %3772 = vst.msk [vmem:[#allocation3 + $0x10] sm:$0xff] %vm3769, %v3726
      %3773 = vst.msk [vmem:[#allocation3 + $0x18] sm:$0xff] %vm3769, %v3728
      %3774 = vst.msk [vmem:[#allocation3 + $0x20] sm:$0xff] %vm3769, %v3730
      %3775 = vst.msk [vmem:[#allocation3 + $0x28] sm:$0xff] %vm3769, %v3732
      %3776 = vst.msk [vmem:[#allocation3 + $0x30] sm:$0xff] %vm3769, %v3734
      %3777 = vst.msk [vmem:[#allocation3 + $0x38] sm:$0xff] %vm3769, %v3736
      %3778 = vst.msk [vmem:[#allocation3 + $0x40] sm:$0xff] %vm3769, %v3738
      %3779 = vst.msk [vmem:[#allocation3 + $0x48] sm:$0xff] %vm3769, %v3740
      %3780 = vst.msk [vmem:[#allocation3 + $0x50] sm:$0xff] %vm3769, %v3742
      %3781 = vst.msk [vmem:[#allocation3 + $0x58] sm:$0xff] %vm3769, %v3744
      %3782 = vst.msk [vmem:[#allocation3 + $0x60] sm:$0xff] %vm3769, %v3746
      %3783 = vst.msk [vmem:[#allocation3 + $0x68] sm:$0xff] %vm3769, %v3748
      %3784 = vst.msk [vmem:[#allocation3 + $0x70] sm:$0xff] %vm3769, %v3750
      %3785 = vst.msk [vmem:[#allocation3 + $0x78] sm:$0xff] %vm3769, %v3752
      %v3786 = vld [vmem:[%s3608] sm:$0xf]
      %v3787 = vld [vmem:[%s3608 + $0x4] sm:$0xf]
      %v3788 = vld [vmem:[%s3608 + $0x8] sm:$0x1]
      %v3789 = vld [vmem:[%s3608 + $0xc] sm:$0xf]
      %v3790 = vld [vmem:[%s3608 + $0x10] sm:$0xf]
      %v3791 = vld [vmem:[%s3608 + $0x14] sm:$0x1]
      %v3792 = vld [vmem:[%s3608 + $0x18] sm:$0xf]
      %v3793 = vld [vmem:[%s3608 + $0x1c] sm:$0xf]
      %v3794 = vld [vmem:[%s3608 + $0x20] sm:$0x1]
      %v3795 = vld [vmem:[%s3608 + $0x24] sm:$0xf]
      %v3796 = vld [vmem:[%s3608 + $0x28] sm:$0xf]
      %v3797 = vld [vmem:[%s3608 + $0x2c] sm:$0x1]
      %v3798 = vld [vmem:[%s3608 + $0x30] sm:$0xf]
      %v3799 = vld [vmem:[%s3608 + $0x34] sm:$0xf]
      %v3800 = vld [vmem:[%s3608 + $0x38] sm:$0x1]
      %v3801 = vld [vmem:[%s3608 + $0x3c] sm:$0xf]
      %v3802 = vld [vmem:[%s3608 + $0x40] sm:$0xf]
      %v3803 = vld [vmem:[%s3608 + $0x44] sm:$0x1]
      %v3804 = vld [vmem:[%s3608 + $0x48] sm:$0xf]
      %v3805 = vld [vmem:[%s3608 + $0x4c] sm:$0xf]
      %v3806 = vld [vmem:[%s3608 + $0x50] sm:$0x1]
      %v3807 = vld [vmem:[%s3608 + $0x54] sm:$0xf]
      %v3808 = vld [vmem:[%s3608 + $0x58] sm:$0xf]
      %v3809 = vld [vmem:[%s3608 + $0x5c] sm:$0x1]
      %v3810 = vld [vmem:[%s3608 + $0x60] sm:$0xf]
      %v3811 = vld [vmem:[%s3608 + $0x64] sm:$0xf]
      %v3812 = vld [vmem:[%s3608 + $0x68] sm:$0x1]
      %v3813 = vld [vmem:[%s3608 + $0x6c] sm:$0xf]
      %v3814 = vld [vmem:[%s3608 + $0x70] sm:$0xf]
      %v3815 = vld [vmem:[%s3608 + $0x74] sm:$0x1]
      %v3816 = vld [vmem:[%s3608 + $0x78] sm:$0xf]
      %v3817 = vld [vmem:[%s3608 + $0x7c] sm:$0xf]
      %v3818 = vld [vmem:[%s3608 + $0x80] sm:$0x1]
      %v3819 = vld [vmem:[%s3608 + $0x84] sm:$0xf]
      %v3820 = vld [vmem:[%s3608 + $0x88] sm:$0xf]
      %v3821 = vld [vmem:[%s3608 + $0x8c] sm:$0x1]
      %v3822 = vld [vmem:[%s3608 + $0x90] sm:$0xf]
      %v3823 = vld [vmem:[%s3608 + $0x94] sm:$0xf]
      %v3824 = vld [vmem:[%s3608 + $0x98] sm:$0x1]
      %v3825 = vld [vmem:[%s3608 + $0x9c] sm:$0xf]
      %v3826 = vld [vmem:[%s3608 + $0xa0] sm:$0xf]
      %v3827 = vld [vmem:[%s3608 + $0xa4] sm:$0x1]
      %v3828 = vld [vmem:[%s3608 + $0xa8] sm:$0xf]
      %v3829 = vld [vmem:[%s3608 + $0xac] sm:$0xf]
      %v3830 = vld [vmem:[%s3608 + $0xb0] sm:$0x1]
      %v3831 = vld [vmem:[%s3608 + $0xb4] sm:$0xf]
      %v3832 = vld [vmem:[%s3608 + $0xb8] sm:$0xf]
      %v3833 = vld [vmem:[%s3608 + $0xbc] sm:$0x1]
      %v3835 = vshrl.u32 %v3786, 16
      %v3837 = vrot.slane %v3835, 4
      %v3838 = vshll.u32 %v3786, 16
      %v3840 = vrot.slane %v3838, 5
      %v3841 = vor.u32 %v3837, %v3840
      %v3842 = vrot.slane %v3841, 4
      %v3844 = vshll.u32 %v3787, 16
      %v3846 = vrot.slane %v3844, 5
      %v3847 = vsel %vm1743, %v3842, %v3846
      %v3848 = vshrl.u32 %v3787, 16
      %v3850 = vrot.slane %v3848, 4
      %v3851 = vor.u32 %v3850, %v3846
      %v3852 = vrot.slane %v3851, 4
      %v3854 = vshll.u32 %v3788, 16
      %v3856 = vrot.slane %v3854, 5
      %v3857 = vsel %vm1743, %v3852, %v3856
      %v3859 = vshrl.u32 %v3789, 16
      %v3861 = vrot.slane %v3859, 4
      %v3862 = vshll.u32 %v3789, 16
      %v3864 = vrot.slane %v3862, 5
      %v3865 = vor.u32 %v3861, %v3864
      %v3866 = vrot.slane %v3865, 4
      %v3868 = vshll.u32 %v3790, 16
      %v3870 = vrot.slane %v3868, 5
      %v3871 = vsel %vm1743, %v3866, %v3870
      %v3872 = vshrl.u32 %v3790, 16
      %v3874 = vrot.slane %v3872, 4
      %v3875 = vor.u32 %v3874, %v3870
      %v3876 = vrot.slane %v3875, 4
      %v3878 = vshll.u32 %v3791, 16
      %v3880 = vrot.slane %v3878, 5
      %v3881 = vsel %vm1743, %v3876, %v3880
      %v3883 = vshrl.u32 %v3792, 16
      %v3885 = vrot.slane %v3883, 4
      %v3886 = vshll.u32 %v3792, 16
      %v3888 = vrot.slane %v3886, 5
      %v3889 = vor.u32 %v3885, %v3888
      %v3890 = vrot.slane %v3889, 4
      %v3892 = vshll.u32 %v3793, 16
      %v3894 = vrot.slane %v3892, 5
      %v3895 = vsel %vm1743, %v3890, %v3894
      %v3896 = vshrl.u32 %v3793, 16
      %v3898 = vrot.slane %v3896, 4
      %v3899 = vor.u32 %v3898, %v3894
      %v3900 = vrot.slane %v3899, 4
      %v3902 = vshll.u32 %v3794, 16
      %v3904 = vrot.slane %v3902, 5
      %v3905 = vsel %vm1743, %v3900, %v3904
      %v3907 = vshrl.u32 %v3795, 16
      %v3909 = vrot.slane %v3907, 4
      %v3910 = vshll.u32 %v3795, 16
      %v3912 = vrot.slane %v3910, 5
      %v3913 = vor.u32 %v3909, %v3912
      %v3914 = vrot.slane %v3913, 4
      %v3916 = vshll.u32 %v3796, 16
      %v3918 = vrot.slane %v3916, 5
      %v3919 = vsel %vm1743, %v3914, %v3918
      %v3920 = vshrl.u32 %v3796, 16
      %v3922 = vrot.slane %v3920, 4
      %v3923 = vor.u32 %v3922, %v3918
      %v3924 = vrot.slane %v3923, 4
      %v3926 = vshll.u32 %v3797, 16
      %v3928 = vrot.slane %v3926, 5
      %v3929 = vsel %vm1743, %v3924, %v3928
      %v3931 = vshrl.u32 %v3798, 16
      %v3933 = vrot.slane %v3931, 4
      %v3934 = vshll.u32 %v3798, 16
      %v3936 = vrot.slane %v3934, 5
      %v3937 = vor.u32 %v3933, %v3936
      %v3938 = vrot.slane %v3937, 4
      %v3940 = vshll.u32 %v3799, 16
      %v3942 = vrot.slane %v3940, 5
      %v3943 = vsel %vm1743, %v3938, %v3942
      %v3944 = vshrl.u32 %v3799, 16
      %v3946 = vrot.slane %v3944, 4
      %v3947 = vor.u32 %v3946, %v3942
      %v3948 = vrot.slane %v3947, 4
      %v3950 = vshll.u32 %v3800, 16
      %v3952 = vrot.slane %v3950, 5
      %v3953 = vsel %vm1743, %v3948, %v3952
      %v3955 = vshrl.u32 %v3801, 16
      %v3957 = vrot.slane %v3955, 4
      %v3958 = vshll.u32 %v3801, 16
      %v3960 = vrot.slane %v3958, 5
      %v3961 = vor.u32 %v3957, %v3960
      %v3962 = vrot.slane %v3961, 4
      %v3964 = vshll.u32 %v3802, 16
      %v3966 = vrot.slane %v3964, 5
      %v3967 = vsel %vm1743, %v3962, %v3966
      %v3968 = vshrl.u32 %v3802, 16
      %v3970 = vrot.slane %v3968, 4
      %v3971 = vor.u32 %v3970, %v3966
      %v3972 = vrot.slane %v3971, 4
      %v3974 = vshll.u32 %v3803, 16
      %v3976 = vrot.slane %v3974, 5
      %v3977 = vsel %vm1743, %v3972, %v3976
      %v3979 = vshrl.u32 %v3804, 16
      %v3981 = vrot.slane %v3979, 4
      %v3982 = vshll.u32 %v3804, 16
      %v3984 = vrot.slane %v3982, 5
      %v3985 = vor.u32 %v3981, %v3984
      %v3986 = vrot.slane %v3985, 4
      %v3988 = vshll.u32 %v3805, 16
      %v3990 = vrot.slane %v3988, 5
      %v3991 = vsel %vm1743, %v3986, %v3990
      %v3992 = vshrl.u32 %v3805, 16
      %v3994 = vrot.slane %v3992, 4
      %v3995 = vor.u32 %v3994, %v3990
      %v3996 = vrot.slane %v3995, 4
      %v3998 = vshll.u32 %v3806, 16
      %v4000 = vrot.slane %v3998, 5
      %v4001 = vsel %vm1743, %v3996, %v4000
      %v4003 = vshrl.u32 %v3807, 16
      %v4005 = vrot.slane %v4003, 4
      %v4006 = vshll.u32 %v3807, 16
      %v4008 = vrot.slane %v4006, 5
      %v4009 = vor.u32 %v4005, %v4008
      %v4010 = vrot.slane %v4009, 4
      %v4012 = vshll.u32 %v3808, 16
      %v4014 = vrot.slane %v4012, 5
      %v4015 = vsel %vm1743, %v4010, %v4014
      %v4016 = vshrl.u32 %v3808, 16
      %v4018 = vrot.slane %v4016, 4
      %v4019 = vor.u32 %v4018, %v4014
      %v4020 = vrot.slane %v4019, 4
      %v4022 = vshll.u32 %v3809, 16
      %v4024 = vrot.slane %v4022, 5
      %v4025 = vsel %vm1743, %v4020, %v4024
      %v4027 = vshrl.u32 %v3810, 16
      %v4029 = vrot.slane %v4027, 4
      %v4030 = vshll.u32 %v3810, 16
      %v4032 = vrot.slane %v4030, 5
      %v4033 = vor.u32 %v4029, %v4032
      %v4034 = vrot.slane %v4033, 4
      %v4036 = vshll.u32 %v3811, 16
      %v4038 = vrot.slane %v4036, 5
      %v4039 = vsel %vm1743, %v4034, %v4038
      %v4040 = vshrl.u32 %v3811, 16
      %v4042 = vrot.slane %v4040, 4
      %v4043 = vor.u32 %v4042, %v4038
      %v4044 = vrot.slane %v4043, 4
      %v4046 = vshll.u32 %v3812, 16
      %v4048 = vrot.slane %v4046, 5
      %v4049 = vsel %vm1743, %v4044, %v4048
      %v4051 = vshrl.u32 %v3813, 16
      %v4053 = vrot.slane %v4051, 4
      %v4054 = vshll.u32 %v3813, 16
      %v4056 = vrot.slane %v4054, 5
      %v4057 = vor.u32 %v4053, %v4056
      %v4058 = vrot.slane %v4057, 4
      %v4060 = vshll.u32 %v3814, 16
      %v4062 = vrot.slane %v4060, 5
      %v4063 = vsel %vm1743, %v4058, %v4062
      %v4064 = vshrl.u32 %v3814, 16
      %v4066 = vrot.slane %v4064, 4
      %v4067 = vor.u32 %v4066, %v4062
      %v4068 = vrot.slane %v4067, 4
      %v4070 = vshll.u32 %v3815, 16
      %v4072 = vrot.slane %v4070, 5
      %v4073 = vsel %vm1743, %v4068, %v4072
      %v4075 = vshrl.u32 %v3816, 16
      %v4077 = vrot.slane %v4075, 4
      %v4078 = vshll.u32 %v3816, 16
      %v4080 = vrot.slane %v4078, 5
      %v4081 = vor.u32 %v4077, %v4080
      %v4082 = vrot.slane %v4081, 4
      %v4084 = vshll.u32 %v3817, 16
      %v4086 = vrot.slane %v4084, 5
      %v4087 = vsel %vm1743, %v4082, %v4086
      %v4088 = vshrl.u32 %v3817, 16
      %v4090 = vrot.slane %v4088, 4
      %v4091 = vor.u32 %v4090, %v4086
      %v4092 = vrot.slane %v4091, 4
      %v4094 = vshll.u32 %v3818, 16
      %v4096 = vrot.slane %v4094, 5
      %v4097 = vsel %vm1743, %v4092, %v4096
      %v4099 = vshrl.u32 %v3819, 16
      %v4101 = vrot.slane %v4099, 4
      %v4102 = vshll.u32 %v3819, 16
      %v4104 = vrot.slane %v4102, 5
      %v4105 = vor.u32 %v4101, %v4104
      %v4106 = vrot.slane %v4105, 4
      %v4108 = vshll.u32 %v3820, 16
      %v4110 = vrot.slane %v4108, 5
      %v4111 = vsel %vm1743, %v4106, %v4110
      %v4112 = vshrl.u32 %v3820, 16
      %v4114 = vrot.slane %v4112, 4
      %v4115 = vor.u32 %v4114, %v4110
      %v4116 = vrot.slane %v4115, 4
      %v4118 = vshll.u32 %v3821, 16
      %v4120 = vrot.slane %v4118, 5
      %v4121 = vsel %vm1743, %v4116, %v4120
      %v4123 = vshrl.u32 %v3822, 16
      %v4125 = vrot.slane %v4123, 4
      %v4126 = vshll.u32 %v3822, 16
      %v4128 = vrot.slane %v4126, 5
      %v4129 = vor.u32 %v4125, %v4128
      %v4130 = vrot.slane %v4129, 4
      %v4132 = vshll.u32 %v3823, 16
      %v4134 = vrot.slane %v4132, 5
      %v4135 = vsel %vm1743, %v4130, %v4134
      %v4136 = vshrl.u32 %v3823, 16
      %v4138 = vrot.slane %v4136, 4
      %v4139 = vor.u32 %v4138, %v4134
      %v4140 = vrot.slane %v4139, 4
      %v4142 = vshll.u32 %v3824, 16
      %v4144 = vrot.slane %v4142, 5
      %v4145 = vsel %vm1743, %v4140, %v4144
      %v4147 = vshrl.u32 %v3825, 16
      %v4149 = vrot.slane %v4147, 4
      %v4150 = vshll.u32 %v3825, 16
      %v4152 = vrot.slane %v4150, 5
      %v4153 = vor.u32 %v4149, %v4152
      %v4154 = vrot.slane %v4153, 4
      %v4156 = vshll.u32 %v3826, 16
      %v4158 = vrot.slane %v4156, 5
      %v4159 = vsel %vm1743, %v4154, %v4158
      %v4160 = vshrl.u32 %v3826, 16
      %v4162 = vrot.slane %v4160, 4
      %v4163 = vor.u32 %v4162, %v4158
      %v4164 = vrot.slane %v4163, 4
      %v4166 = vshll.u32 %v3827, 16
      %v4168 = vrot.slane %v4166, 5
      %v4169 = vsel %vm1743, %v4164, %v4168
      %v4171 = vshrl.u32 %v3828, 16
      %v4173 = vrot.slane %v4171, 4
      %v4174 = vshll.u32 %v3828, 16
      %v4176 = vrot.slane %v4174, 5
      %v4177 = vor.u32 %v4173, %v4176
      %v4178 = vrot.slane %v4177, 4
      %v4180 = vshll.u32 %v3829, 16
      %v4182 = vrot.slane %v4180, 5
      %v4183 = vsel %vm1743, %v4178, %v4182
      %v4184 = vshrl.u32 %v3829, 16
      %v4186 = vrot.slane %v4184, 4
      %v4187 = vor.u32 %v4186, %v4182
      %v4188 = vrot.slane %v4187, 4
      %v4190 = vshll.u32 %v3830, 16
      %v4192 = vrot.slane %v4190, 5
      %v4193 = vsel %vm1743, %v4188, %v4192
      %v4195 = vshrl.u32 %v3831, 16
      %v4197 = vrot.slane %v4195, 4
      %v4198 = vshll.u32 %v3831, 16
      %v4200 = vrot.slane %v4198, 5
      %v4201 = vor.u32 %v4197, %v4200
      %v4202 = vrot.slane %v4201, 4
      %v4204 = vshll.u32 %v3832, 16
      %v4206 = vrot.slane %v4204, 5
      %v4207 = vsel %vm1743, %v4202, %v4206
      %v4208 = vshrl.u32 %v3832, 16
      %v4210 = vrot.slane %v4208, 4
      %v4211 = vor.u32 %v4210, %v4206
      %v4212 = vrot.slane %v4211, 4
      %v4214 = vshll.u32 %v3833, 16
      %v4216 = vrot.slane %v4214, 5
      %v4217 = vsel %vm1743, %v4212, %v4216
      %v4218 = vunpack.c.l.b16 %v3847
      %v4219 = vunpack.c.l.b16 %v3857
      %v4220 = vunpack.c.l.b16 %v3871
      %v4221 = vunpack.c.l.b16 %v3881
      %v4222 = vunpack.c.l.b16 %v3895
      %v4223 = vunpack.c.l.b16 %v3905
      %v4224 = vunpack.c.l.b16 %v3919
      %v4225 = vunpack.c.l.b16 %v3929
      %v4226 = vunpack.c.l.b16 %v3943
      %v4227 = vunpack.c.l.b16 %v3953
      %v4228 = vunpack.c.l.b16 %v3967
      %v4229 = vunpack.c.l.b16 %v3977
      %v4230 = vunpack.c.l.b16 %v3991
      %v4231 = vunpack.c.l.b16 %v4001
      %v4232 = vunpack.c.l.b16 %v4015
      %v4233 = vunpack.c.l.b16 %v4025
      %v4234 = vunpack.c.l.b16 %v4039
      %v4235 = vunpack.c.l.b16 %v4049
      %v4236 = vunpack.c.l.b16 %v4063
      %v4237 = vunpack.c.l.b16 %v4073
      %v4238 = vunpack.c.l.b16 %v4087
      %v4239 = vunpack.c.l.b16 %v4097
      %v4240 = vunpack.c.l.b16 %v4111
      %v4241 = vunpack.c.l.b16 %v4121
      %v4242 = vunpack.c.l.b16 %v4135
      %v4243 = vunpack.c.l.b16 %v4145
      %v4244 = vunpack.c.l.b16 %v4159
      %v4245 = vunpack.c.l.b16 %v4169
      %v4246 = vunpack.c.l.b16 %v4183
      %v4247 = vunpack.c.l.b16 %v4193
      %v4248 = vunpack.c.l.b16 %v4207
      %v4249 = vunpack.c.l.b16 %v4217
      %v4250 = vpack.c.b16 %v4219, %v4218
      %v4251 = vpack.c.b16 %v4221, %v4220
      %v4252 = vpack.c.b16 %v4223, %v4222
      %v4253 = vpack.c.b16 %v4225, %v4224
      %v4254 = vpack.c.b16 %v4227, %v4226
      %v4255 = vpack.c.b16 %v4229, %v4228
      %v4256 = vpack.c.b16 %v4231, %v4230
      %v4257 = vpack.c.b16 %v4233, %v4232
      %v4258 = vpack.c.b16 %v4235, %v4234
      %v4259 = vpack.c.b16 %v4237, %v4236
      %v4260 = vpack.c.b16 %v4239, %v4238
      %v4261 = vpack.c.b16 %v4241, %v4240
      %v4262 = vpack.c.b16 %v4243, %v4242
      %v4263 = vpack.c.b16 %v4245, %v4244
      %v4264 = vpack.c.b16 %v4247, %v4246
      %v4265 = vpack.c.b16 %v4249, %v4248
      %4266 = vrot.lane.b32.xlu0 %v4250, 28
      %v4267 = vpop.permute.xlu0 %4266
      %4268 = vrot.lane.b32.xlu0 %v4251, 28
      %v4269 = vpop.permute.xlu0 %4268
      %4270 = vrot.lane.b32.xlu0 %v4252, 28
      %v4271 = vpop.permute.xlu0 %4270
      %4272 = vrot.lane.b32.xlu0 %v4253, 28
      %v4273 = vpop.permute.xlu0 %4272
      %4274 = vrot.lane.b32.xlu0 %v4254, 28
      %v4275 = vpop.permute.xlu0 %4274
      %4276 = vrot.lane.b32.xlu0 %v4255, 28
      %v4277 = vpop.permute.xlu0 %4276
      %4278 = vrot.lane.b32.xlu0 %v4256, 28
      %v4279 = vpop.permute.xlu0 %4278
      %4280 = vrot.lane.b32.xlu0 %v4257, 28
      %v4281 = vpop.permute.xlu0 %4280
      %4282 = vrot.lane.b32.xlu0 %v4258, 28
      %v4283 = vpop.permute.xlu0 %4282
      %4284 = vrot.lane.b32.xlu0 %v4259, 28
      %v4285 = vpop.permute.xlu0 %4284
      %4286 = vrot.lane.b32.xlu0 %v4260, 28
      %v4287 = vpop.permute.xlu0 %4286
      %4288 = vrot.lane.b32.xlu0 %v4261, 28
      %v4289 = vpop.permute.xlu0 %4288
      %4290 = vrot.lane.b32.xlu0 %v4262, 28
      %v4291 = vpop.permute.xlu0 %4290
      %4292 = vrot.lane.b32.xlu0 %v4263, 28
      %v4293 = vpop.permute.xlu0 %4292
      %4294 = vrot.lane.b32.xlu0 %v4264, 28
      %v4295 = vpop.permute.xlu0 %4294
      %4296 = vrot.lane.b32.xlu0 %v4265, 28
      %v4297 = vpop.permute.xlu0 %4296
      %vm4314 = vcmask 261344
      %4315 = vst.msk [vmem:[#allocation3] sm:$0xff] %vm4314, %v4267
      %4316 = vst.msk [vmem:[#allocation3 + $0x8] sm:$0xff] %vm4314, %v4269
      %4317 = vst.msk [vmem:[#allocation3 + $0x10] sm:$0xff] %vm4314, %v4271
      %4318 = vst.msk [vmem:[#allocation3 + $0x18] sm:$0xff] %vm4314, %v4273
      %4319 = vst.msk [vmem:[#allocation3 + $0x20] sm:$0xff] %vm4314, %v4275
      %4320 = vst.msk [vmem:[#allocation3 + $0x28] sm:$0xff] %vm4314, %v4277
      %4321 = vst.msk [vmem:[#allocation3 + $0x30] sm:$0xff] %vm4314, %v4279
      %4322 = vst.msk [vmem:[#allocation3 + $0x38] sm:$0xff] %vm4314, %v4281
      %4323 = vst.msk [vmem:[#allocation3 + $0x40] sm:$0xff] %vm4314, %v4283
      %4324 = vst.msk [vmem:[#allocation3 + $0x48] sm:$0xff] %vm4314, %v4285
      %4325 = vst.msk [vmem:[#allocation3 + $0x50] sm:$0xff] %vm4314, %v4287
      %4326 = vst.msk [vmem:[#allocation3 + $0x58] sm:$0xff] %vm4314, %v4289
      %4327 = vst.msk [vmem:[#allocation3 + $0x60] sm:$0xff] %vm4314, %v4291
      %4328 = vst.msk [vmem:[#allocation3 + $0x68] sm:$0xff] %vm4314, %v4293
      %4329 = vst.msk [vmem:[#allocation3 + $0x70] sm:$0xff] %vm4314, %v4295
      %4330 = vst.msk [vmem:[#allocation3 + $0x78] sm:$0xff] %vm4314, %v4297
      %v4331 = vld [vmem:[%s3608] sm:$0xe]
      %v4332 = vld [vmem:[%s3608 + $0x4] sm:$0xf]
      %v4333 = vld [vmem:[%s3608 + $0x8] sm:$0x1]
      %v4334 = vld [vmem:[%s3608 + $0xc] sm:$0xe]
      %v4335 = vld [vmem:[%s3608 + $0x10] sm:$0xf]
      %v4336 = vld [vmem:[%s3608 + $0x14] sm:$0x1]
      %v4337 = vld [vmem:[%s3608 + $0x18] sm:$0xe]
      %v4338 = vld [vmem:[%s3608 + $0x1c] sm:$0xf]
      %v4339 = vld [vmem:[%s3608 + $0x20] sm:$0x1]
      %v4340 = vld [vmem:[%s3608 + $0x24] sm:$0xe]
      %v4341 = vld [vmem:[%s3608 + $0x28] sm:$0xf]
      %v4342 = vld [vmem:[%s3608 + $0x2c] sm:$0x1]
      %v4343 = vld [vmem:[%s3608 + $0x30] sm:$0xe]
      %v4344 = vld [vmem:[%s3608 + $0x34] sm:$0xf]
      %v4345 = vld [vmem:[%s3608 + $0x38] sm:$0x1]
      %v4346 = vld [vmem:[%s3608 + $0x3c] sm:$0xe]
      %v4347 = vld [vmem:[%s3608 + $0x40] sm:$0xf]
      %v4348 = vld [vmem:[%s3608 + $0x44] sm:$0x1]
      %v4349 = vld [vmem:[%s3608 + $0x48] sm:$0xe]
      %v4350 = vld [vmem:[%s3608 + $0x4c] sm:$0xf]
      %v4351 = vld [vmem:[%s3608 + $0x50] sm:$0x1]
      %v4352 = vld [vmem:[%s3608 + $0x54] sm:$0xe]
      %v4353 = vld [vmem:[%s3608 + $0x58] sm:$0xf]
      %v4354 = vld [vmem:[%s3608 + $0x5c] sm:$0x1]
      %v4355 = vld [vmem:[%s3608 + $0x60] sm:$0xe]
      %v4356 = vld [vmem:[%s3608 + $0x64] sm:$0xf]
      %v4357 = vld [vmem:[%s3608 + $0x68] sm:$0x1]
      %v4358 = vld [vmem:[%s3608 + $0x6c] sm:$0xe]
      %v4359 = vld [vmem:[%s3608 + $0x70] sm:$0xf]
      %v4360 = vld [vmem:[%s3608 + $0x74] sm:$0x1]
      %v4361 = vld [vmem:[%s3608 + $0x78] sm:$0xe]
      %v4362 = vld [vmem:[%s3608 + $0x7c] sm:$0xf]
      %v4363 = vld [vmem:[%s3608 + $0x80] sm:$0x1]
      %v4364 = vld [vmem:[%s3608 + $0x84] sm:$0xe]
      %v4365 = vld [vmem:[%s3608 + $0x88] sm:$0xf]
      %v4366 = vld [vmem:[%s3608 + $0x8c] sm:$0x1]
      %v4367 = vld [vmem:[%s3608 + $0x90] sm:$0xe]
      %v4368 = vld [vmem:[%s3608 + $0x94] sm:$0xf]
      %v4369 = vld [vmem:[%s3608 + $0x98] sm:$0x1]
      %v4370 = vld [vmem:[%s3608 + $0x9c] sm:$0xe]
      %v4371 = vld [vmem:[%s3608 + $0xa0] sm:$0xf]
      %v4372 = vld [vmem:[%s3608 + $0xa4] sm:$0x1]
      %v4373 = vld [vmem:[%s3608 + $0xa8] sm:$0xe]
      %v4374 = vld [vmem:[%s3608 + $0xac] sm:$0xf]
      %v4375 = vld [vmem:[%s3608 + $0xb0] sm:$0x1]
      %v4376 = vld [vmem:[%s3608 + $0xb4] sm:$0xe]
      %v4377 = vld [vmem:[%s3608 + $0xb8] sm:$0xf]
      %v4378 = vld [vmem:[%s3608 + $0xbc] sm:$0x1]
      %v4427 = vrot.slane %v4331, 5
      %v4428 = vrot.slane %v4427, 4
      %v4429 = vrot.slane %v4332, 5
      %v4430 = vsel %vm2339, %v4428, %v4429
      %v4431 = vrot.slane %v4429, 4
      %v4432 = vrot.slane %v4333, 5
      %v4433 = vsel %vm2339, %v4431, %v4432
      %v4434 = vrot.slane %v4334, 5
      %v4435 = vrot.slane %v4434, 4
      %v4436 = vrot.slane %v4335, 5
      %v4437 = vsel %vm2339, %v4435, %v4436
      %v4438 = vrot.slane %v4436, 4
      %v4439 = vrot.slane %v4336, 5
      %v4440 = vsel %vm2339, %v4438, %v4439
      %v4441 = vrot.slane %v4337, 5
      %v4442 = vrot.slane %v4441, 4
      %v4443 = vrot.slane %v4338, 5
      %v4444 = vsel %vm2339, %v4442, %v4443
      %v4445 = vrot.slane %v4443, 4
      %v4446 = vrot.slane %v4339, 5
      %v4447 = vsel %vm2339, %v4445, %v4446
      %v4448 = vrot.slane %v4340, 5
      %v4449 = vrot.slane %v4448, 4
      %v4450 = vrot.slane %v4341, 5
      %v4451 = vsel %vm2339, %v4449, %v4450
      %v4452 = vrot.slane %v4450, 4
      %v4453 = vrot.slane %v4342, 5
      %v4454 = vsel %vm2339, %v4452, %v4453
      %v4455 = vrot.slane %v4343, 5
      %v4456 = vrot.slane %v4455, 4
      %v4457 = vrot.slane %v4344, 5
      %v4458 = vsel %vm2339, %v4456, %v4457
      %v4459 = vrot.slane %v4457, 4
      %v4460 = vrot.slane %v4345, 5
      %v4461 = vsel %vm2339, %v4459, %v4460
      %v4462 = vrot.slane %v4346, 5
      %v4463 = vrot.slane %v4462, 4
      %v4464 = vrot.slane %v4347, 5
      %v4465 = vsel %vm2339, %v4463, %v4464
      %v4466 = vrot.slane %v4464, 4
      %v4467 = vrot.slane %v4348, 5
      %v4468 = vsel %vm2339, %v4466, %v4467
      %v4469 = vrot.slane %v4349, 5
      %v4470 = vrot.slane %v4469, 4
      %v4471 = vrot.slane %v4350, 5
      %v4472 = vsel %vm2339, %v4470, %v4471
      %v4473 = vrot.slane %v4471, 4
      %v4474 = vrot.slane %v4351, 5
      %v4475 = vsel %vm2339, %v4473, %v4474
      %v4476 = vrot.slane %v4352, 5
      %v4477 = vrot.slane %v4476, 4
      %v4478 = vrot.slane %v4353, 5
      %v4479 = vsel %vm2339, %v4477, %v4478
      %v4480 = vrot.slane %v4478, 4
      %v4481 = vrot.slane %v4354, 5
      %v4482 = vsel %vm2339, %v4480, %v4481
      %v4483 = vrot.slane %v4355, 5
      %v4484 = vrot.slane %v4483, 4
      %v4485 = vrot.slane %v4356, 5
      %v4486 = vsel %vm2339, %v4484, %v4485
      %v4487 = vrot.slane %v4485, 4
      %v4488 = vrot.slane %v4357, 5
      %v4489 = vsel %vm2339, %v4487, %v4488
      %v4490 = vrot.slane %v4358, 5
      %v4491 = vrot.slane %v4490, 4
      %v4492 = vrot.slane %v4359, 5
      %v4493 = vsel %vm2339, %v4491, %v4492
      %v4494 = vrot.slane %v4492, 4
      %v4495 = vrot.slane %v4360, 5
      %v4496 = vsel %vm2339, %v4494, %v4495
      %v4497 = vrot.slane %v4361, 5
      %v4498 = vrot.slane %v4497, 4
      %v4499 = vrot.slane %v4362, 5
      %v4500 = vsel %vm2339, %v4498, %v4499
      %v4501 = vrot.slane %v4499, 4
      %v4502 = vrot.slane %v4363, 5
      %v4503 = vsel %vm2339, %v4501, %v4502
      %v4504 = vrot.slane %v4364, 5
      %v4505 = vrot.slane %v4504, 4
      %v4506 = vrot.slane %v4365, 5
      %v4507 = vsel %vm2339, %v4505, %v4506
      %v4508 = vrot.slane %v4506, 4
      %v4509 = vrot.slane %v4366, 5
      %v4510 = vsel %vm2339, %v4508, %v4509
      %v4511 = vrot.slane %v4367, 5
      %v4512 = vrot.slane %v4511, 4
      %v4513 = vrot.slane %v4368, 5
      %v4514 = vsel %vm2339, %v4512, %v4513
      %v4515 = vrot.slane %v4513, 4
      %v4516 = vrot.slane %v4369, 5
      %v4517 = vsel %vm2339, %v4515, %v4516
      %v4518 = vrot.slane %v4370, 5
      %v4519 = vrot.slane %v4518, 4
      %v4520 = vrot.slane %v4371, 5
      %v4521 = vsel %vm2339, %v4519, %v4520
      %v4522 = vrot.slane %v4520, 4
      %v4523 = vrot.slane %v4372, 5
      %v4524 = vsel %vm2339, %v4522, %v4523
      %v4525 = vrot.slane %v4373, 5
      %v4526 = vrot.slane %v4525, 4
      %v4527 = vrot.slane %v4374, 5
      %v4528 = vsel %vm2339, %v4526, %v4527
      %v4529 = vrot.slane %v4527, 4
      %v4530 = vrot.slane %v4375, 5
      %v4531 = vsel %vm2339, %v4529, %v4530
      %v4532 = vrot.slane %v4376, 5
      %v4533 = vrot.slane %v4532, 4
      %v4534 = vrot.slane %v4377, 5
      %v4535 = vsel %vm2339, %v4533, %v4534
      %v4536 = vrot.slane %v4534, 4
      %v4537 = vrot.slane %v4378, 5
      %v4538 = vsel %vm2339, %v4536, %v4537
      %v4539 = vunpack.c.l.b16 %v4430
      %v4540 = vunpack.c.l.b16 %v4433
      %v4541 = vunpack.c.l.b16 %v4437
      %v4542 = vunpack.c.l.b16 %v4440
      %v4543 = vunpack.c.l.b16 %v4444
      %v4544 = vunpack.c.l.b16 %v4447
      %v4545 = vunpack.c.l.b16 %v4451
      %v4546 = vunpack.c.l.b16 %v4454
      %v4547 = vunpack.c.l.b16 %v4458
      %v4548 = vunpack.c.l.b16 %v4461
      %v4549 = vunpack.c.l.b16 %v4465
      %v4550 = vunpack.c.l.b16 %v4468
      %v4551 = vunpack.c.l.b16 %v4472
      %v4552 = vunpack.c.l.b16 %v4475
      %v4553 = vunpack.c.l.b16 %v4479
      %v4554 = vunpack.c.l.b16 %v4482
      %v4555 = vunpack.c.l.b16 %v4486
      %v4556 = vunpack.c.l.b16 %v4489
      %v4557 = vunpack.c.l.b16 %v4493
      %v4558 = vunpack.c.l.b16 %v4496
      %v4559 = vunpack.c.l.b16 %v4500
      %v4560 = vunpack.c.l.b16 %v4503
      %v4561 = vunpack.c.l.b16 %v4507
      %v4562 = vunpack.c.l.b16 %v4510
      %v4563 = vunpack.c.l.b16 %v4514
      %v4564 = vunpack.c.l.b16 %v4517
      %v4565 = vunpack.c.l.b16 %v4521
      %v4566 = vunpack.c.l.b16 %v4524
      %v4567 = vunpack.c.l.b16 %v4528
      %v4568 = vunpack.c.l.b16 %v4531
      %v4569 = vunpack.c.l.b16 %v4535
      %v4570 = vunpack.c.l.b16 %v4538
      %v4571 = vpack.c.b16 %v4540, %v4539
      %v4572 = vpack.c.b16 %v4542, %v4541
      %v4573 = vpack.c.b16 %v4544, %v4543
      %v4574 = vpack.c.b16 %v4546, %v4545
      %v4575 = vpack.c.b16 %v4548, %v4547
      %v4576 = vpack.c.b16 %v4550, %v4549
      %v4577 = vpack.c.b16 %v4552, %v4551
      %v4578 = vpack.c.b16 %v4554, %v4553
      %v4579 = vpack.c.b16 %v4556, %v4555
      %v4580 = vpack.c.b16 %v4558, %v4557
      %v4581 = vpack.c.b16 %v4560, %v4559
      %v4582 = vpack.c.b16 %v4562, %v4561
      %v4583 = vpack.c.b16 %v4564, %v4563
      %v4584 = vpack.c.b16 %v4566, %v4565
      %v4585 = vpack.c.b16 %v4568, %v4567
      %v4586 = vpack.c.b16 %v4570, %v4569
      %4587 = vrot.lane.b32.xlu0 %v4571, 32
      %v4588 = vpop.permute.xlu0 %4587
      %4589 = vrot.lane.b32.xlu0 %v4572, 32
      %v4590 = vpop.permute.xlu0 %4589
      %4591 = vrot.lane.b32.xlu0 %v4573, 32
      %v4592 = vpop.permute.xlu0 %4591
      %4593 = vrot.lane.b32.xlu0 %v4574, 32
      %v4594 = vpop.permute.xlu0 %4593
      %4595 = vrot.lane.b32.xlu0 %v4575, 32
      %v4596 = vpop.permute.xlu0 %4595
      %4597 = vrot.lane.b32.xlu0 %v4576, 32
      %v4598 = vpop.permute.xlu0 %4597
      %4599 = vrot.lane.b32.xlu0 %v4577, 32
      %v4600 = vpop.permute.xlu0 %4599
      %4601 = vrot.lane.b32.xlu0 %v4578, 32
      %v4602 = vpop.permute.xlu0 %4601
      %4603 = vrot.lane.b32.xlu0 %v4579, 32
      %v4604 = vpop.permute.xlu0 %4603
      %4605 = vrot.lane.b32.xlu0 %v4580, 32
      %v4606 = vpop.permute.xlu0 %4605
      %4607 = vrot.lane.b32.xlu0 %v4581, 32
      %v4608 = vpop.permute.xlu0 %4607
      %4609 = vrot.lane.b32.xlu0 %v4582, 32
      %v4610 = vpop.permute.xlu0 %4609
      %4611 = vrot.lane.b32.xlu0 %v4583, 32
      %v4612 = vpop.permute.xlu0 %4611
      %4613 = vrot.lane.b32.xlu0 %v4584, 32
      %v4614 = vpop.permute.xlu0 %4613
      %4615 = vrot.lane.b32.xlu0 %v4585, 32
      %v4616 = vpop.permute.xlu0 %4615
      %4617 = vrot.lane.b32.xlu0 %v4586, 32
      %v4618 = vpop.permute.xlu0 %4617
      %vm4635 = vcmask 294144
      %4636 = vst.msk [vmem:[#allocation3] sm:$0xff] %vm4635, %v4588
      %4637 = vst.msk [vmem:[#allocation3 + $0x8] sm:$0xff] %vm4635, %v4590
      %4638 = vst.msk [vmem:[#allocation3 + $0x10] sm:$0xff] %vm4635, %v4592
      %4639 = vst.msk [vmem:[#allocation3 + $0x18] sm:$0xff] %vm4635, %v4594
      %4640 = vst.msk [vmem:[#allocation3 + $0x20] sm:$0xff] %vm4635, %v4596
      %4641 = vst.msk [vmem:[#allocation3 + $0x28] sm:$0xff] %vm4635, %v4598
      %4642 = vst.msk [vmem:[#allocation3 + $0x30] sm:$0xff] %vm4635, %v4600
      %4643 = vst.msk [vmem:[#allocation3 + $0x38] sm:$0xff] %vm4635, %v4602
      %4644 = vst.msk [vmem:[#allocation3 + $0x40] sm:$0xff] %vm4635, %v4604
      %4645 = vst.msk [vmem:[#allocation3 + $0x48] sm:$0xff] %vm4635, %v4606
      %4646 = vst.msk [vmem:[#allocation3 + $0x50] sm:$0xff] %vm4635, %v4608
      %4647 = vst.msk [vmem:[#allocation3 + $0x58] sm:$0xff] %vm4635, %v4610
      %4648 = vst.msk [vmem:[#allocation3 + $0x60] sm:$0xff] %vm4635, %v4612
      %4649 = vst.msk [vmem:[#allocation3 + $0x68] sm:$0xff] %vm4635, %v4614
      %4650 = vst.msk [vmem:[#allocation3 + $0x70] sm:$0xff] %vm4635, %v4616
      %4651 = vst.msk [vmem:[#allocation3 + $0x78] sm:$0xff] %vm4635, %v4618
      %v4652 = vld [vmem:[#allocation3] sm:$0xff]
      %v4653 = vld [vmem:[#allocation3 + $0x8] sm:$0xff]
      %v4654 = vld [vmem:[#allocation3 + $0x10] sm:$0xff]
      %v4655 = vld [vmem:[#allocation3 + $0x18] sm:$0xff]
      %v4656 = vld [vmem:[#allocation3 + $0x20] sm:$0xff]
      %v4657 = vld [vmem:[#allocation3 + $0x28] sm:$0xff]
      %v4658 = vld [vmem:[#allocation3 + $0x30] sm:$0xff]
      %v4659 = vld [vmem:[#allocation3 + $0x38] sm:$0xff]
      %v4660 = vld [vmem:[#allocation3 + $0x40] sm:$0xff]
      %v4661 = vld [vmem:[#allocation3 + $0x48] sm:$0xff]
      %v4662 = vld [vmem:[#allocation3 + $0x50] sm:$0xff]
      %v4663 = vld [vmem:[#allocation3 + $0x58] sm:$0xff]
      %v4664 = vld [vmem:[#allocation3 + $0x60] sm:$0xff]
      %v4665 = vld [vmem:[#allocation3 + $0x68] sm:$0xff]
      %v4666 = vld [vmem:[#allocation3 + $0x70] sm:$0xff]
      %v4667 = vld [vmem:[#allocation3 + $0x78] sm:$0xff]
      %v4668 = vld [vmem:[%s4] sm:$0xf]
      %v4669 = vld [vmem:[%s4 + $0x4] sm:$0xf]
      %v4670 = vld [vmem:[%s4 + $0x8] sm:$0xf]
      %v4671 = vld [vmem:[%s4 + $0xc] sm:$0xf]
      %v4672 = vld [vmem:[%s4 + $0x10] sm:$0x3]
      %v4678 = vunpack.c.l.b16 %v4668
      %v4679 = vunpack.c.l.b16 %v4669
      %v4680 = vunpack.c.l.b16 %v4670
      %v4681 = vunpack.c.l.b16 %v4671
      %v4682 = vunpack.c.l.b16 %v4672
      %v4683 = vpack.c.b16 %v4679, %v4678
      %v4684 = vpack.c.b16 %v4681, %v4680
      %v4685 = vpack.c.b16 %v4682, %v4682
      %vm4688 = vcmask 293888
      %v4690 = vsel %vm4688, %v4652, 0
      %v4693 = vsel %vm4688, %v4653, 0
      %v4696 = vsel %vm4688, %v4654, 0
      %v4699 = vsel %vm4688, %v4655, 0
      %v4702 = vsel %vm4688, %v4656, 0
      %v4705 = vsel %vm4688, %v4657, 0
      %v4708 = vsel %vm4688, %v4658, 0
      %v4711 = vsel %vm4688, %v4659, 0
      %v4714 = vsel %vm4688, %v4660, 0
      %v4717 = vsel %vm4688, %v4661, 0
      %v4720 = vsel %vm4688, %v4662, 0
      %v4723 = vsel %vm4688, %v4663, 0
      %v4726 = vsel %vm4688, %v4664, 0
      %v4729 = vsel %vm4688, %v4665, 0
      %v4732 = vsel %vm4688, %v4666, 0
      %v4735 = vsel %vm4688, %v4667, 0
      %vm4737 = vcmask 1041408
      %v4739 = vsel %vm4737, %v4685, 0
      %4741 = vmatprep.subr.bf16.mxu0 0
      %4742 = vmatpush1.bf16.msra.mxu0 %v4683
      %4743 = vmatprep.subr.bf16.mxu0 0
      %4744 = vmatpush1.bf16.msra.mxu0 %v4684
      %4745 = vmatprep.subr.bf16.mxu0 0
      %4746 = vmatpush1.bf16.msra.mxu0 %v4739
      %4747 = vmatprep.subr.bf16.mxu0 0
      %4748 = vmatpush1.bf16.msra.mxu0 0
      %4749 = vmatprep.subr.bf16.mxu0 0
      %4750 = vmatpush1.bf16.msra.mxu0 0
      %4751 = vmatprep.subr.bf16.mxu0 0
      %4752 = vmatpush1.bf16.msra.mxu0 0
      %4753 = vmatprep.subr.bf16.mxu0 0
      %4754 = vmatpush1.bf16.msra.mxu0 0
      %4755 = vmatprep.subr.bf16.mxu0 0
      %4756 = vmatpush1.bf16.msra.mxu0 0
      %4757 = vmatprep.subr.bf16.mxu0 0
      %4758 = vmatpush1.bf16.msra.mxu0 0
      %4759 = vmatprep.subr.bf16.mxu0 0
      %4760 = vmatpush1.bf16.msra.mxu0 0
      %4761 = vmatprep.subr.bf16.mxu0 0
      %4762 = vmatpush1.bf16.msra.mxu0 0
      %4763 = vmatprep.subr.bf16.mxu0 0
      %4764 = vmatpush1.bf16.msra.mxu0 0
      %4765 = vmatprep.subr.bf16.mxu0 0
      %4766 = vmatpush1.bf16.msra.mxu0 0
      %4767 = vmatprep.subr.bf16.mxu0 0
      %4768 = vmatpush1.bf16.msra.mxu0 0
      %4769 = vmatprep.subr.bf16.mxu0 0
      %4770 = vmatpush1.bf16.msra.mxu0 0
      %4771 = vmatprep.subr.bf16.mxu0 0
      %4772 = vmatpush1.bf16.msra.mxu0 0
      %4773 = vmatprep.mubr.bf16.mxu0 0
      %4774 = vmatmul.mubr.bf16.gmra.mrb[0].mxu0 %v4690
      %v4775 = vpop.f32.mrb[0].mxu0
      %v4776 = vadd.f32 0.0, %v4775
      %v4777 = vpop.f32.mrb[0].mxu0
      %v4778 = vpop.f32.mrb[0].mxu0
      %v4779 = vadd.f32 0.0, %v4778
      %v4780 = vpop.f32.mrb[0].mxu0
      %4781 = vmatprep.mubr.bf16.mxu0 0
      %4782 = vmatmul.mubr.bf16.gmra.mrb[0].mxu0 %v4693
      %v4783 = vpop.f32.mrb[0].mxu0
      %v4784 = vadd.f32 0.0, %v4783
      %v4785 = vpop.f32.mrb[0].mxu0
      %v4786 = vpop.f32.mrb[0].mxu0
      %v4787 = vadd.f32 0.0, %v4786
      %v4788 = vpop.f32.mrb[0].mxu0
      %4789 = vmatprep.mubr.bf16.mxu0 0
      %4790 = vmatmul.mubr.bf16.gmra.mrb[0].mxu0 %v4696
      %v4791 = vpop.f32.mrb[0].mxu0
      %v4792 = vadd.f32 0.0, %v4791
      %v4793 = vpop.f32.mrb[0].mxu0
      %v4794 = vpop.f32.mrb[0].mxu0
      %v4795 = vadd.f32 0.0, %v4794
      %v4796 = vpop.f32.mrb[0].mxu0
      %4797 = vmatprep.mubr.bf16.mxu0 0
      %4798 = vmatmul.mubr.bf16.gmra.mrb[0].mxu0 %v4699
      %v4799 = vpop.f32.mrb[0].mxu0
      %v4800 = vadd.f32 0.0, %v4799
      %v4801 = vpop.f32.mrb[0].mxu0
      %v4802 = vpop.f32.mrb[0].mxu0
      %v4803 = vadd.f32 0.0, %v4802
      %v4804 = vpop.f32.mrb[0].mxu0
      %4805 = vmatprep.mubr.bf16.mxu0 0
      %4806 = vmatmul.mubr.bf16.gmra.mrb[0].mxu0 %v4702
      %v4807 = vpop.f32.mrb[0].mxu0
      %v4808 = vadd.f32 0.0, %v4807
      %v4809 = vpop.f32.mrb[0].mxu0
      %v4810 = vpop.f32.mrb[0].mxu0
      %v4811 = vadd.f32 0.0, %v4810
      %v4812 = vpop.f32.mrb[0].mxu0
      %4813 = vmatprep.mubr.bf16.mxu0 0
      %4814 = vmatmul.mubr.bf16.gmra.mrb[0].mxu0 %v4705
      %v4815 = vpop.f32.mrb[0].mxu0
      %v4816 = vadd.f32 0.0, %v4815
      %v4817 = vpop.f32.mrb[0].mxu0
      %v4818 = vpop.f32.mrb[0].mxu0
      %v4819 = vadd.f32 0.0, %v4818
      %v4820 = vpop.f32.mrb[0].mxu0
      %4821 = vmatprep.mubr.bf16.mxu0 0
      %4822 = vmatmul.mubr.bf16.gmra.mrb[0].mxu0 %v4708
      %v4823 = vpop.f32.mrb[0].mxu0
      %v4824 = vadd.f32 0.0, %v4823
      %v4825 = vpop.f32.mrb[0].mxu0
      %v4826 = vpop.f32.mrb[0].mxu0
      %v4827 = vadd.f32 0.0, %v4826
      %v4828 = vpop.f32.mrb[0].mxu0
      %4829 = vmatprep.mubr.bf16.mxu0 0
      %4830 = vmatmul.mubr.bf16.gmra.mrb[0].mxu0 %v4711
      %v4831 = vpop.f32.mrb[0].mxu0
      %v4832 = vadd.f32 0.0, %v4831
      %v4833 = vpop.f32.mrb[0].mxu0
      %v4834 = vpop.f32.mrb[0].mxu0
      %v4835 = vadd.f32 0.0, %v4834
      %v4836 = vpop.f32.mrb[0].mxu0
      %4837 = vmatprep.mubr.bf16.mxu0 0
      %4838 = vmatmul.mubr.bf16.gmra.mrb[0].mxu0 %v4714
      %v4839 = vpop.f32.mrb[0].mxu0
      %v4840 = vadd.f32 0.0, %v4839
      %v4841 = vpop.f32.mrb[0].mxu0
      %v4842 = vpop.f32.mrb[0].mxu0
      %v4843 = vadd.f32 0.0, %v4842
      %v4844 = vpop.f32.mrb[0].mxu0
      %4845 = vmatprep.mubr.bf16.mxu0 0
      %4846 = vmatmul.mubr.bf16.gmra.mrb[0].mxu0 %v4717
      %v4847 = vpop.f32.mrb[0].mxu0
      %v4848 = vadd.f32 0.0, %v4847
      %v4849 = vpop.f32.mrb[0].mxu0
      %v4850 = vpop.f32.mrb[0].mxu0
      %v4851 = vadd.f32 0.0, %v4850
      %v4852 = vpop.f32.mrb[0].mxu0
      %4853 = vmatprep.mubr.bf16.mxu0 0
      %4854 = vmatmul.mubr.bf16.gmra.mrb[0].mxu0 %v4720
      %v4855 = vpop.f32.mrb[0].mxu0
      %v4856 = vadd.f32 0.0, %v4855
      %v4857 = vpop.f32.mrb[0].mxu0
      %v4858 = vpop.f32.mrb[0].mxu0
      %v4859 = vadd.f32 0.0, %v4858
      %v4860 = vpop.f32.mrb[0].mxu0
      %4861 = vmatprep.mubr.bf16.mxu0 0
      %4862 = vmatmul.mubr.bf16.gmra.mrb[0].mxu0 %v4723
      %v4863 = vpop.f32.mrb[0].mxu0
      %v4864 = vadd.f32 0.0, %v4863
      %v4865 = vpop.f32.mrb[0].mxu0
      %v4866 = vpop.f32.mrb[0].mxu0
      %v4867 = vadd.f32 0.0, %v4866
      %v4868 = vpop.f32.mrb[0].mxu0
      %4869 = vmatprep.mubr.bf16.mxu0 0
      %4870 = vmatmul.mubr.bf16.gmra.mrb[0].mxu0 %v4726
      %v4871 = vpop.f32.mrb[0].mxu0
      %v4872 = vadd.f32 0.0, %v4871
      %v4873 = vpop.f32.mrb[0].mxu0
      %v4874 = vpop.f32.mrb[0].mxu0
      %v4875 = vadd.f32 0.0, %v4874
      %v4876 = vpop.f32.mrb[0].mxu0
      %4877 = vmatprep.mubr.bf16.mxu0 0
      %4878 = vmatmul.mubr.bf16.gmra.mrb[0].mxu0 %v4729
      %v4879 = vpop.f32.mrb[0].mxu0
      %v4880 = vadd.f32 0.0, %v4879
      %v4881 = vpop.f32.mrb[0].mxu0
      %v4882 = vpop.f32.mrb[0].mxu0
      %v4883 = vadd.f32 0.0, %v4882
      %v4884 = vpop.f32.mrb[0].mxu0
      %4885 = vmatprep.mubr.bf16.mxu0 0
      %4886 = vmatmul.mubr.bf16.gmra.mrb[0].mxu0 %v4732
      %v4887 = vpop.f32.mrb[0].mxu0
      %v4888 = vadd.f32 0.0, %v4887
      %v4889 = vpop.f32.mrb[0].mxu0
      %v4890 = vpop.f32.mrb[0].mxu0
      %v4891 = vadd.f32 0.0, %v4890
      %v4892 = vpop.f32.mrb[0].mxu0
      %4893 = vmatprep.mubr.bf16.mxu0 0
      %4894 = vmatmul.mubr.bf16.gmra.mrb[0].mxu0 %v4735
      %v4895 = vpop.f32.mrb[0].mxu0
      %v4896 = vadd.f32 0.0, %v4895
      %v4897 = vpop.f32.mrb[0].mxu0
      %v4898 = vpop.f32.mrb[0].mxu0
      %v4899 = vadd.f32 0.0, %v4898
      %v4900 = vpop.f32.mrb[0].mxu0
      %4901 = vdwg.mxu0
      %v4902 = vld [vmem:[%s5] sm:$0x1]
      %v4904 = vlaneseq
      %v4905 = vshrl.u32 %v4904, 7
      %v4906 = vsub.s32 0, %v4905
      %v4907 = vrot.slane %v4902, %v4906
      %v4909 = vmul.f32 %v4776, %v4907
      %v4910 = vmul.f32 %v4779, %v4907
      %v4911 = vmul.f32 %v4784, %v4907
      %v4912 = vmul.f32 %v4787, %v4907
      %v4913 = vmul.f32 %v4792, %v4907
      %v4914 = vmul.f32 %v4795, %v4907
      %v4915 = vmul.f32 %v4800, %v4907
      %v4916 = vmul.f32 %v4803, %v4907
      %v4917 = vmul.f32 %v4808, %v4907
      %v4918 = vmul.f32 %v4811, %v4907
      %v4919 = vmul.f32 %v4816, %v4907
      %v4920 = vmul.f32 %v4819, %v4907
      %v4921 = vmul.f32 %v4824, %v4907
      %v4922 = vmul.f32 %v4827, %v4907
      %v4923 = vmul.f32 %v4832, %v4907
      %v4924 = vmul.f32 %v4835, %v4907
      %v4925 = vmul.f32 %v4840, %v4907
      %v4926 = vmul.f32 %v4843, %v4907
      %v4927 = vmul.f32 %v4848, %v4907
      %v4928 = vmul.f32 %v4851, %v4907
      %v4929 = vmul.f32 %v4856, %v4907
      %v4930 = vmul.f32 %v4859, %v4907
      %v4931 = vmul.f32 %v4864, %v4907
      %v4932 = vmul.f32 %v4867, %v4907
      %v4933 = vmul.f32 %v4872, %v4907
      %v4934 = vmul.f32 %v4875, %v4907
      %v4935 = vmul.f32 %v4880, %v4907
      %v4936 = vmul.f32 %v4883, %v4907
      %v4937 = vmul.f32 %v4888, %v4907
      %v4938 = vmul.f32 %v4891, %v4907
      %v4939 = vmul.f32 %v4896, %v4907
      %v4940 = vmul.f32 %v4899, %v4907
      %v4941 = vld [vmem:[%s6] sm:$0x1]
      %v4943 = vlaneseq
      %v4944 = vshrl.u32 %v4943, 7
      %v4945 = vsub.s32 0, %v4944
      %v4946 = vrot.slane %v4941, %v4945
      %v4948 = vadd.f32 %v4909, %v4946
      %v4949 = vadd.f32 %v4910, %v4946
      %v4950 = vadd.f32 %v4911, %v4946
      %v4951 = vadd.f32 %v4912, %v4946
      %v4952 = vadd.f32 %v4913, %v4946
      %v4953 = vadd.f32 %v4914, %v4946
      %v4954 = vadd.f32 %v4915, %v4946
      %v4955 = vadd.f32 %v4916, %v4946
      %v4956 = vadd.f32 %v4917, %v4946
      %v4957 = vadd.f32 %v4918, %v4946
      %v4958 = vadd.f32 %v4919, %v4946
      %v4959 = vadd.f32 %v4920, %v4946
      %v4960 = vadd.f32 %v4921, %v4946
      %v4961 = vadd.f32 %v4922, %v4946
      %v4962 = vadd.f32 %v4923, %v4946
      %v4963 = vadd.f32 %v4924, %v4946
      %v4964 = vadd.f32 %v4925, %v4946
      %v4965 = vadd.f32 %v4926, %v4946
      %v4966 = vadd.f32 %v4927, %v4946
      %v4967 = vadd.f32 %v4928, %v4946
      %v4968 = vadd.f32 %v4929, %v4946
      %v4969 = vadd.f32 %v4930, %v4946
      %v4970 = vadd.f32 %v4931, %v4946
      %v4971 = vadd.f32 %v4932, %v4946
      %v4972 = vadd.f32 %v4933, %v4946
      %v4973 = vadd.f32 %v4934, %v4946
      %v4974 = vadd.f32 %v4935, %v4946
      %v4975 = vadd.f32 %v4936, %v4946
      %v4976 = vadd.f32 %v4937, %v4946
      %v4977 = vadd.f32 %v4938, %v4946
      %v4978 = vadd.f32 %v4939, %v4946
      %v4979 = vadd.f32 %v4940, %v4946
      %v4980 = vmax.f32 %v4948, 0.0
      %v4981 = vmax.f32 %v4949, 0.0
      %v4982 = vmax.f32 %v4950, 0.0
      %v4983 = vmax.f32 %v4951, 0.0
      %v4984 = vmax.f32 %v4952, 0.0
      %v4985 = vmax.f32 %v4953, 0.0
      %v4986 = vmax.f32 %v4954, 0.0
      %v4987 = vmax.f32 %v4955, 0.0
      %v4988 = vmax.f32 %v4956, 0.0
      %v4989 = vmax.f32 %v4957, 0.0
      %v4990 = vmax.f32 %v4958, 0.0
      %v4991 = vmax.f32 %v4959, 0.0
      %v4992 = vmax.f32 %v4960, 0.0
      %v4993 = vmax.f32 %v4961, 0.0
      %v4994 = vmax.f32 %v4962, 0.0
      %v4995 = vmax.f32 %v4963, 0.0
      %v4996 = vmax.f32 %v4964, 0.0
      %v4997 = vmax.f32 %v4965, 0.0
      %v4998 = vmax.f32 %v4966, 0.0
      %v4999 = vmax.f32 %v4967, 0.0
      %v5000 = vmax.f32 %v4968, 0.0
      %v5001 = vmax.f32 %v4969, 0.0
      %v5002 = vmax.f32 %v4970, 0.0
      %v5003 = vmax.f32 %v4971, 0.0
      %v5004 = vmax.f32 %v4972, 0.0
      %v5005 = vmax.f32 %v4973, 0.0
      %v5006 = vmax.f32 %v4974, 0.0
      %v5007 = vmax.f32 %v4975, 0.0
      %v5008 = vmax.f32 %v4976, 0.0
      %v5009 = vmax.f32 %v4977, 0.0
      %v5010 = vmax.f32 %v4978, 0.0
      %v5011 = vmax.f32 %v4979, 0.0
      %v5012 = vpack.c.bf16 %v4981, %v4980
      %v5013 = vpack.c.bf16 %v4983, %v4982
      %v5014 = vpack.c.bf16 %v4985, %v4984
      %v5015 = vpack.c.bf16 %v4987, %v4986
      %v5016 = vpack.c.bf16 %v4989, %v4988
      %v5017 = vpack.c.bf16 %v4991, %v4990
      %v5018 = vpack.c.bf16 %v4993, %v4992
      %v5019 = vpack.c.bf16 %v4995, %v4994
      %v5020 = vpack.c.bf16 %v4997, %v4996
      %v5021 = vpack.c.bf16 %v4999, %v4998
      %v5022 = vpack.c.bf16 %v5001, %v5000
      %v5023 = vpack.c.bf16 %v5003, %v5002
      %v5024 = vpack.c.bf16 %v5005, %v5004
      %v5025 = vpack.c.bf16 %v5007, %v5006
      %v5026 = vpack.c.bf16 %v5009, %v5008
      %v5027 = vpack.c.bf16 %v5011, %v5010
      %v5044 = vunpack.c.l.b16 %v5012
      %v5045 = vunpack.c.h.b16 %v5012
      %v5046 = vunpack.c.l.b16 %v5013
      %v5047 = vunpack.c.h.b16 %v5013
      %v5048 = vunpack.c.l.b16 %v5014
      %v5049 = vunpack.c.h.b16 %v5014
      %v5050 = vunpack.c.l.b16 %v5015
      %v5051 = vunpack.c.h.b16 %v5015
      %v5052 = vunpack.c.l.b16 %v5016
      %v5053 = vunpack.c.h.b16 %v5016
      %v5054 = vunpack.c.l.b16 %v5017
      %v5055 = vunpack.c.h.b16 %v5017
      %v5056 = vunpack.c.l.b16 %v5018
      %v5057 = vunpack.c.h.b16 %v5018
      %v5058 = vunpack.c.l.b16 %v5019
      %v5059 = vunpack.c.h.b16 %v5019
      %v5060 = vunpack.c.l.b16 %v5020
      %v5061 = vunpack.c.h.b16 %v5020
      %v5062 = vunpack.c.l.b16 %v5021
      %v5063 = vunpack.c.h.b16 %v5021
      %v5064 = vunpack.c.l.b16 %v5022
      %v5065 = vunpack.c.h.b16 %v5022
      %v5066 = vunpack.c.l.b16 %v5023
      %v5067 = vunpack.c.h.b16 %v5023
      %v5068 = vunpack.c.l.b16 %v5024
      %v5069 = vunpack.c.h.b16 %v5024
      %v5070 = vunpack.c.l.b16 %v5025
      %v5071 = vunpack.c.h.b16 %v5025
      %v5072 = vunpack.c.l.b16 %v5026
      %v5073 = vunpack.c.h.b16 %v5026
      %v5074 = vunpack.c.l.b16 %v5027
      %v5075 = vunpack.c.h.b16 %v5027
      %v5076 = vpack.c.b16 %v5044, %v5044
      %v5077 = vpack.c.b16 %v5045, %v5045
      %v5078 = vpack.c.b16 %v5046, %v5046
      %v5079 = vpack.c.b16 %v5047, %v5047
      %v5080 = vpack.c.b16 %v5048, %v5048
      %v5081 = vpack.c.b16 %v5049, %v5049
      %v5082 = vpack.c.b16 %v5050, %v5050
      %v5083 = vpack.c.b16 %v5051, %v5051
      %v5084 = vpack.c.b16 %v5052, %v5052
      %v5085 = vpack.c.b16 %v5053, %v5053
      %v5086 = vpack.c.b16 %v5054, %v5054
      %v5087 = vpack.c.b16 %v5055, %v5055
      %v5088 = vpack.c.b16 %v5056, %v5056
      %v5089 = vpack.c.b16 %v5057, %v5057
      %v5090 = vpack.c.b16 %v5058, %v5058
      %v5091 = vpack.c.b16 %v5059, %v5059
      %v5092 = vpack.c.b16 %v5060, %v5060
      %v5093 = vpack.c.b16 %v5061, %v5061
      %v5094 = vpack.c.b16 %v5062, %v5062
      %v5095 = vpack.c.b16 %v5063, %v5063
      %v5096 = vpack.c.b16 %v5064, %v5064
      %v5097 = vpack.c.b16 %v5065, %v5065
      %v5098 = vpack.c.b16 %v5066, %v5066
      %v5099 = vpack.c.b16 %v5067, %v5067
      %v5100 = vpack.c.b16 %v5068, %v5068
      %v5101 = vpack.c.b16 %v5069, %v5069
      %v5102 = vpack.c.b16 %v5070, %v5070
      %v5103 = vpack.c.b16 %v5071, %v5071
      %v5104 = vpack.c.b16 %v5072, %v5072
      %v5105 = vpack.c.b16 %v5073, %v5073
      %v5106 = vpack.c.b16 %v5074, %v5074
      %v5107 = vpack.c.b16 %v5075, %v5075
      %5140 = vst.msk [vmem:[%s446] sm:$0xf] %vm971, %v5076
      %5141 = vst.msk [vmem:[%s446 + $0x4] sm:$0xf] %vm971, %v5077
      %5142 = vst.msk [vmem:[%s446 + $0x8] sm:$0xf] %vm971, %v5078
      %5143 = vst.msk [vmem:[%s446 + $0xc] sm:$0xf] %vm971, %v5079
      %5144 = vst.msk [vmem:[%s446 + $0x10] sm:$0xf] %vm971, %v5080
      %5145 = vst.msk [vmem:[%s446 + $0x14] sm:$0xf] %vm971, %v5081
      %5146 = vst.msk [vmem:[%s446 + $0x18] sm:$0xf] %vm971, %v5082
      %5147 = vst.msk [vmem:[%s446 + $0x1c] sm:$0xf] %vm971, %v5083
      %5148 = vst.msk [vmem:[%s446 + $0x20] sm:$0xf] %vm971, %v5084
      %5149 = vst.msk [vmem:[%s446 + $0x24] sm:$0xf] %vm971, %v5085
      %5150 = vst.msk [vmem:[%s446 + $0x28] sm:$0xf] %vm971, %v5086
      %5151 = vst.msk [vmem:[%s446 + $0x2c] sm:$0xf] %vm971, %v5087
      %5152 = vst.msk [vmem:[%s446 + $0x30] sm:$0xf] %vm971, %v5088
      %5153 = vst.msk [vmem:[%s446 + $0x34] sm:$0xf] %vm971, %v5089
      %5154 = vst.msk [vmem:[%s446 + $0x38] sm:$0xf] %vm971, %v5090
      %5155 = vst.msk [vmem:[%s446 + $0x3c] sm:$0xf] %vm971, %v5091
      %5156 = vst.msk [vmem:[%s446 + $0x40] sm:$0xf] %vm971, %v5092
      %5157 = vst.msk [vmem:[%s446 + $0x44] sm:$0xf] %vm971, %v5093
      %5158 = vst.msk [vmem:[%s446 + $0x48] sm:$0xf] %vm971, %v5094
      %5159 = vst.msk [vmem:[%s446 + $0x4c] sm:$0xf] %vm971, %v5095
      %5160 = vst.msk [vmem:[%s446 + $0x50] sm:$0xf] %vm971, %v5096
      %5161 = vst.msk [vmem:[%s446 + $0x54] sm:$0xf] %vm971, %v5097
      %5162 = vst.msk [vmem:[%s446 + $0x58] sm:$0xf] %vm971, %v5098
      %5163 = vst.msk [vmem:[%s446 + $0x5c] sm:$0xf] %vm971, %v5099
      %5164 = vst.msk [vmem:[%s446 + $0x60] sm:$0xf] %vm971, %v5100
      %5165 = vst.msk [vmem:[%s446 + $0x64] sm:$0xf] %vm971, %v5101
      %5166 = vst.msk [vmem:[%s446 + $0x68] sm:$0xf] %vm971, %v5102
      %5167 = vst.msk [vmem:[%s446 + $0x6c] sm:$0xf] %vm971, %v5103
      %5168 = vst.msk [vmem:[%s446 + $0x70] sm:$0xf] %vm971, %v5104
      %5169 = vst.msk [vmem:[%s446 + $0x74] sm:$0xf] %vm971, %v5105
      %5170 = vst.msk [vmem:[%s446 + $0x78] sm:$0xf] %vm971, %v5106
      %5171 = vst.msk [vmem:[%s446 + $0x7c] sm:$0xf] %vm971, %v5107
      %v5172 = vsel %vm1676, %v4980, 0.0
      %v5173 = vsel %vm1676, %v4981, 0.0
      %v5174 = vadd.f32 %v5172, %v5173
      %v5175 = vsel %vm1676, %v4982, 0.0
      %v5176 = vadd.f32 %v5174, %v5175
      %v5177 = vsel %vm1676, %v4983, 0.0
      %v5178 = vadd.f32 %v5176, %v5177
      %v5179 = vsel %vm1676, %v4984, 0.0
      %v5180 = vadd.f32 %v5178, %v5179
      %v5181 = vsel %vm1676, %v4985, 0.0
      %v5182 = vadd.f32 %v5180, %v5181
      %v5183 = vsel %vm1676, %v4986, 0.0
      %v5184 = vadd.f32 %v5182, %v5183
      %v5185 = vsel %vm1676, %v4987, 0.0
      %v5186 = vadd.f32 %v5184, %v5185
      %v5187 = vsel %vm1676, %v4988, 0.0
      %v5188 = vadd.f32 %v5186, %v5187
      %v5189 = vsel %vm1676, %v4989, 0.0
      %v5190 = vadd.f32 %v5188, %v5189
      %v5191 = vsel %vm1676, %v4990, 0.0
      %v5192 = vadd.f32 %v5190, %v5191
      %v5193 = vsel %vm1676, %v4991, 0.0
      %v5194 = vadd.f32 %v5192, %v5193
      %v5195 = vsel %vm1676, %v4992, 0.0
      %v5196 = vadd.f32 %v5194, %v5195
      %v5197 = vsel %vm1676, %v4993, 0.0
      %v5198 = vadd.f32 %v5196, %v5197
      %v5199 = vsel %vm1676, %v4994, 0.0
      %v5200 = vadd.f32 %v5198, %v5199
      %v5201 = vsel %vm1676, %v4995, 0.0
      %v5202 = vadd.f32 %v5200, %v5201
      %v5203 = vsel %vm1676, %v4996, 0.0
      %v5204 = vadd.f32 %v5202, %v5203
      %v5205 = vsel %vm1676, %v4997, 0.0
      %v5206 = vadd.f32 %v5204, %v5205
      %v5207 = vsel %vm1676, %v4998, 0.0
      %v5208 = vadd.f32 %v5206, %v5207
      %v5209 = vsel %vm1676, %v4999, 0.0
      %v5210 = vadd.f32 %v5208, %v5209
      %v5211 = vsel %vm1676, %v5000, 0.0
      %v5212 = vadd.f32 %v5210, %v5211
      %v5213 = vsel %vm1676, %v5001, 0.0
      %v5214 = vadd.f32 %v5212, %v5213
      %v5215 = vsel %vm1676, %v5002, 0.0
      %v5216 = vadd.f32 %v5214, %v5215
      %v5217 = vsel %vm1676, %v5003, 0.0
      %v5218 = vadd.f32 %v5216, %v5217
      %v5219 = vsel %vm1676, %v5004, 0.0
      %v5220 = vadd.f32 %v5218, %v5219
      %v5221 = vsel %vm1676, %v5005, 0.0
      %v5222 = vadd.f32 %v5220, %v5221
      %v5223 = vsel %vm1676, %v5006, 0.0
      %v5224 = vadd.f32 %v5222, %v5223
      %v5225 = vsel %vm1676, %v5007, 0.0
      %v5226 = vadd.f32 %v5224, %v5225
      %v5227 = vsel %vm1676, %v5008, 0.0
      %v5228 = vadd.f32 %v5226, %v5227
      %v5229 = vsel %vm1676, %v5009, 0.0
      %v5230 = vadd.f32 %v5228, %v5229
      %v5231 = vsel %vm1676, %v5010, 0.0
      %v5232 = vadd.f32 %v5230, %v5231
      %v5233 = vsel %vm1676, %v5011, 0.0
      %v5234 = vadd.f32 %v5232, %v5233
      %v5235 = vrot.slane %v5234, 4
      %v5236 = vadd.f32 %v5234, %v5235
      %v5237 = vrot.slane %v5236, 2
      %v5238 = vadd.f32 %v5236, %v5237
      %v5239 = vrot.slane %v5238, 1
      %v5240 = vadd.f32 %v5238, %v5239
      %v5241 = vmul.f32 %v5240, 0.00390625
      %v5242 = vld [vmem:[%s7] sm:$0xf]
      %v5244 = vsel %vm1676, %v5241, 0
      %vm5246 = vcmask 1043456
      %v5248 = vsel %vm5246, %v5242, 0
      %5250 = vmatprep.subr.mxu0 0.0
      %5251 = vmatpush1.msra.mxu0 %v5248
      %5252 = vmatprep.subr.mxu0 0.0
      %5253 = vmatpush1.msra.mxu0 0.0
      %5254 = vmatprep.subr.mxu0 0.0
      %5255 = vmatpush1.msra.mxu0 0.0
      %5256 = vmatprep.subr.mxu0 0.0
      %5257 = vmatpush1.msra.mxu0 0.0
      %5258 = vmatprep.subr.mxu0 0.0
      %5259 = vmatpush1.msra.mxu0 0.0
      %5260 = vmatprep.subr.mxu0 0.0
      %5261 = vmatpush1.msra.mxu0 0.0
      %5262 = vmatprep.subr.mxu0 0.0
      %5263 = vmatpush1.msra.mxu0 0.0
      %5264 = vmatprep.subr.mxu0 0.0
      %5265 = vmatpush1.msra.mxu0 0.0
      %5266 = vmatprep.subr.mxu0 0.0
      %5267 = vmatpush1.msra.mxu0 0.0
      %5268 = vmatprep.subr.mxu0 0.0
      %5269 = vmatpush1.msra.mxu0 0.0
      %5270 = vmatprep.subr.mxu0 0.0
      %5271 = vmatpush1.msra.mxu0 0.0
      %5272 = vmatprep.subr.mxu0 0.0
      %5273 = vmatpush1.msra.mxu0 0.0
      %5274 = vmatprep.subr.mxu0 0.0
      %5275 = vmatpush1.msra.mxu0 0.0
      %5276 = vmatprep.subr.mxu0 0.0
      %5277 = vmatpush1.msra.mxu0 0.0
      %5278 = vmatprep.subr.mxu0 0.0
      %5279 = vmatpush1.msra.mxu0 0.0
      %5280 = vmatprep.subr.mxu0 0.0
      %5281 = vmatpush1.msra.mxu0 0.0
      %5282 = vmatprep.subr.mxu0 0.0
      %5283 = vmatpush1.msra.mxu0 0.0
      %5284 = vmatprep.subr.mxu0 0.0
      %5285 = vmatpush1.msra.mxu0 0.0
      %5286 = vmatprep.subr.mxu0 0.0
      %5287 = vmatpush1.msra.mxu0 0.0
      %5288 = vmatprep.subr.mxu0 0.0
      %5289 = vmatpush1.msra.mxu0 0.0
      %5290 = vmatprep.subr.mxu0 0.0
      %5291 = vmatpush1.msra.mxu0 0.0
      %5292 = vmatprep.subr.mxu0 0.0
      %5293 = vmatpush1.msra.mxu0 0.0
      %5294 = vmatprep.subr.mxu0 0.0
      %5295 = vmatpush1.msra.mxu0 0.0
      %5296 = vmatprep.subr.mxu0 0.0
      %5297 = vmatpush1.msra.mxu0 0.0
      %5298 = vmatprep.subr.mxu0 0.0
      %5299 = vmatpush1.msra.mxu0 0.0
      %5300 = vmatprep.subr.mxu0 0.0
      %5301 = vmatpush1.msra.mxu0 0.0
      %5302 = vmatprep.subr.mxu0 0.0
      %5303 = vmatpush1.msra.mxu0 0.0
      %5304 = vmatprep.subr.mxu0 0.0
      %5305 = vmatpush1.msra.mxu0 0.0
      %5306 = vmatprep.subr.mxu0 0.0
      %5307 = vmatpush1.msra.mxu0 0.0
      %5308 = vmatprep.subr.mxu0 0.0
      %5309 = vmatpush1.msra.mxu0 0.0
      %5310 = vmatprep.subr.mxu0 0.0
      %5311 = vmatpush1.msra.mxu0 0.0
      %5312 = vmatprep.subr.mxu0 0.0
      %5313 = vmatpush1.msra.mxu0 0.0
      %5314 = vmatprep.mubr.f32.mxu0 0.0
      %5315 = vmatmul.mubr.f32.gmra.mrb[0].mxu0 %v5244
      %v5316 = vpop.f32.mrb[0].mxu0
      %v5317 = vadd.f32 0.0, %v5316
      %v5318 = vpop.f32.mrb[0].mxu0
      %5319 = vdwg.mxu0
      %v5320 = vld [vmem:[%s8] sm:$0x1]
      %v5321 = vmul.f32 %v5317, %v5320
      %v5322 = vld [vmem:[%s9] sm:$0x1]
      %v5323 = vadd.f32 %v5321, %v5322
      %v5324 = vmax.f32 %v5323, 0.0
      %v5325 = vld [vmem:[%s10] sm:$0xff]
      %v5326 = vld [vmem:[%s10 + $0x8] sm:$0xff]
      %v5327 = vld [vmem:[%s10 + $0x10] sm:$0xff]
      %v5328 = vld [vmem:[%s10 + $0x18] sm:$0xff]
      %v5329 = vld [vmem:[%s11] sm:$0x1]
      %vm5330 = vcmask 261120
      %v5332 = vsel %vm5330, %v5324, 0
      %5334 = vmatprep.subr.mxu0 0.0
      %5335 = vmatpush1.msra.mxu0 %v5325
      %5336 = vmatprep.subr.mxu0 0.0
      %5337 = vmatpush1.msra.mxu0 %v5326
      %5338 = vmatprep.subr.mxu0 0.0
      %5339 = vmatpush1.msra.mxu0 %v5327
      %5340 = vmatprep.subr.mxu0 0.0
      %5341 = vmatpush1.msra.mxu0 %v5328
      %5342 = vmatprep.subr.mxu0 0.0
      %5343 = vmatpush1.msra.mxu0 0.0
      %5344 = vmatprep.subr.mxu0 0.0
      %5345 = vmatpush1.msra.mxu0 0.0
      %5346 = vmatprep.subr.mxu0 0.0
      %5347 = vmatpush1.msra.mxu0 0.0
      %5348 = vmatprep.subr.mxu0 0.0
      %5349 = vmatpush1.msra.mxu0 0.0
      %5350 = vmatprep.subr.mxu0 0.0
      %5351 = vmatpush1.msra.mxu0 0.0
      %5352 = vmatprep.subr.mxu0 0.0
      %5353 = vmatpush1.msra.mxu0 0.0
      %5354 = vmatprep.subr.mxu0 0.0
      %5355 = vmatpush1.msra.mxu0 0.0
      %5356 = vmatprep.subr.mxu0 0.0
      %5357 = vmatpush1.msra.mxu0 0.0
      %5358 = vmatprep.subr.mxu0 0.0
      %5359 = vmatpush1.msra.mxu0 0.0
      %5360 = vmatprep.subr.mxu0 0.0
      %5361 = vmatpush1.msra.mxu0 0.0
      %5362 = vmatprep.subr.mxu0 0.0
      %5363 = vmatpush1.msra.mxu0 0.0
      %5364 = vmatprep.subr.mxu0 0.0
      %5365 = vmatpush1.msra.mxu0 0.0
      %5366 = vmatprep.subr.mxu0 0.0
      %5367 = vmatpush1.msra.mxu0 0.0
      %5368 = vmatprep.subr.mxu0 0.0
      %5369 = vmatpush1.msra.mxu0 0.0
      %5370 = vmatprep.subr.mxu0 0.0
      %5371 = vmatpush1.msra.mxu0 0.0
      %5372 = vmatprep.subr.mxu0 0.0
      %5373 = vmatpush1.msra.mxu0 0.0
      %5374 = vmatprep.subr.mxu0 0.0
      %5375 = vmatpush1.msra.mxu0 0.0
      %5376 = vmatprep.subr.mxu0 0.0
      %5377 = vmatpush1.msra.mxu0 0.0
      %5378 = vmatprep.subr.mxu0 0.0
      %5379 = vmatpush1.msra.mxu0 0.0
      %5380 = vmatprep.subr.mxu0 0.0
      %5381 = vmatpush1.msra.mxu0 0.0
      %5382 = vmatprep.subr.mxu0 0.0
      %5383 = vmatpush1.msra.mxu0 0.0
      %5384 = vmatprep.subr.mxu0 0.0
      %5385 = vmatpush1.msra.mxu0 0.0
      %5386 = vmatprep.subr.mxu0 0.0
      %5387 = vmatpush1.msra.mxu0 0.0
      %5388 = vmatprep.subr.mxu0 0.0
      %5389 = vmatpush1.msra.mxu0 0.0
      %5390 = vmatprep.subr.mxu0 0.0
      %5391 = vmatpush1.msra.mxu0 0.0
      %5392 = vmatprep.subr.mxu0 0.0
      %5393 = vmatpush1.msra.mxu0 0.0
      %5394 = vmatprep.subr.mxu0 0.0
      %5395 = vmatpush1.msra.mxu0 0.0
      %5396 = vmatprep.subr.mxu0 0.0
      %5397 = vmatpush1.msra.mxu0 0.0
      %5398 = vmatprep.mubr.f32.mxu0 0.0
      %5399 = vmatmul.mubr.f32.gmra.mrb[0].mxu0 %v5332
      %v5400 = vpop.f32.mrb[0].mxu0
      %v5401 = vadd.f32 %v5329, %v5400
      %v5402 = vpop.f32.mrb[0].mxu0
      %5403 = vdwg.mxu0
      %v5404 = vxor.u32 %v5401, 2147483648
      %v5405 = vmul.f32 %v5404, 1.442695
      %v5406 = vpow.pop %v5405
      %v5407 = vadd.f32 %v5406, 1.0
      %v5408 = vrcp.pop %v5407
      %v5409 = vmul.f32 1.0, %v5408
      %5410 = vst.msk [vmem:[%s449] sm:$0x1] %vm974, %v5409
      %p5411 = scmp.lt.s32.totalorder %s25, 1
      %s5412 = scalar_select %p5411, %s25, 1
      %s5413 = smul.addr %s5412, 32
      %s5414 = smul.addr %s5413, 4
      %s5415 = scalar_lea.vmem %s12, %s5414
      %p5416 = scmp.lt.s32.totalorder %s25, 1
      %s5417 = scalar_select %p5416, %s25, 1
      %s5418 = scalar_lea.vmem %s13, %s5417
      // Predicated region
      $region69: #{bottleneck_forward.2} parent=67 // pred_check
        %p5419 = pneg %p300
      $region70: #{bottleneck_forward.2} parent=67 // pred_check_branch
        %5421 = sbr.rel (%p5419) target = $region72
      $region71: #{bottleneck_forward.2} parent=67 // pred_region
        _
      $region72: #{bottleneck_forward.2} parent=67 // pred_fallthru
        _
      // Predicated region
      $region73: #{bottleneck_forward.2} parent=67 // pred_check
        %p5422 = pneg %p326
      $region74: #{bottleneck_forward.2} parent=67 // pred_check_branch
        %5424 = sbr.rel (%p5422) target = $region76
      $region75: #{bottleneck_forward.2} parent=67 // pred_region
        _
      $region76: #{bottleneck_forward.2} parent=67 // pred_fallthru
        _
    $region68: #{bottleneck_forward.2} parent=5 // pred_fallthru
      _
    %p5425 = scmp.le.s32.totalorder 2, %s20
    // Predicated region
    $region77: #{bottleneck_forward.2} parent=5 // pred_check
      %p5426 = pneg %p5425
    $region78: #{bottleneck_forward.2} parent=5 // pred_check_branch
      %5428 = sbr.rel (%p5426) target = $region80
    $region79: #{bottleneck_forward.2} parent=5 // pred_region
      %s5429 = ssub.s32 %s20, 2
      // Predicated region
      $region81: #{bottleneck_forward.2} parent=79 // pred_check
        %p5430 = pneg %p306
      $region82: #{bottleneck_forward.2} parent=79 // pred_check_branch
        %5432 = sbr.rel (%p5430) target = $region84
      $region83: #{bottleneck_forward.2} parent=79 // pred_region
        %p5433 = scmp.lt.s32.totalorder %s26, 1
        %s5434 = scalar_select %p5433, %s26, 1
        %s5435 = smul.addr %s5434, 32
        %s5436 = smul.addr %s5435, 4
        %s5437 = scalar_lea.vmem %s12, %s5436
      $region84: #{bottleneck_forward.2} parent=79 // pred_fallthru
        _
      // Predicated region
      $region85: #{bottleneck_forward.2} parent=79 // pred_check
        %p5438 = pneg %p332
      $region86: #{bottleneck_forward.2} parent=79 // pred_check_branch
        %5440 = sbr.rel (%p5438) target = $region88
      $region87: #{bottleneck_forward.2} parent=79 // pred_region
        %p5441 = scmp.lt.s32.totalorder %s26, 1
        %s5442 = scalar_select %p5441, %s26, 1
        %s5443 = scalar_lea.vmem %s13, %s5442
      $region88: #{bottleneck_forward.2} parent=79 // pred_fallthru
        _
    $region80: #{bottleneck_forward.2} parent=5 // pred_fallthru
      _
  $region6: #{bottleneck_forward.2} parent=0 // loop_footer
    %s24 = sadd.s32 1, %s20
  $region7: #{bottleneck_forward.2} parent=0 // loop_footer_branch
    %19 = sbr.rel target = $region3
  $region8: #{bottleneck_forward.2} parent=0 // loop_exit
    _

</llo_original>
